<compile_context>
chip_gen: v6e
topology: v6e:2x2x1
jax: 0.10.0
libtpu: 0.0.40
codegen_flags: <defaults>
</compile_context>

<pallas_src>
import functools

import jax
import jax.numpy as jnp
from jax.experimental import pallas as pl
from jax.experimental.pallas import tpu as pltpu


# -----------------------------------------------------------------------------
# Pallas kernel: fused layernorm (stub-encoder tail) + running max over sequence.
# -----------------------------------------------------------------------------
def _ln_maxpool_kernel(emb_ref, pooled_ref, *, seq_len, seq_tile, half_stride,
                       eps, mask_needed):
    # emb_ref:    [tb, ts, H] bf16 tile of pre-layernorm embeddings
    # pooled_ref: [tb, H] f32 lane-dense running-max accumulator
    #             (output block, resident across the sequence grid axis)
    s = pl.program_id(2)

    @pl.when(s == 0)
    def _init():
        pooled_ref[...] = jnp.full(pooled_ref.shape, -jnp.inf, pooled_ref.dtype)

    def tile_update(apply_mask, start):
        x = emb_ref[...].astype(jnp.float32)                  # [tb, ts, H]
        inv_h = 1.0 / x.shape[-1]
        # One-pass layernorm statistics: var = E[x^2] - mean^2.
        s1 = jnp.sum(x, axis=-1, keepdims=True)
        s2 = jnp.sum(x * x, axis=-1, keepdims=True)
        mean = s1 * inv_h
        var = s2 * inv_h - mean * mean
        h = (x - mean) * jax.lax.rsqrt(var + eps)             # LN over H
        if apply_mask:
            # Ragged-edge rows (garbage past seq_len) -> -inf so they never win
            # the max.  Ordered after the LN, before the max (NaN-safe).
            pos = start + jax.lax.broadcasted_iota(jnp.int32, h.shape, 1)
            h = jnp.where(pos < seq_len, h, -jnp.inf)
        pooled_ref[...] = jnp.maximum(pooled_ref[...], jnp.max(h, axis=1))

    if mask_needed:
        # Absolute block index handled by this grid step (valid by construction;
        # the two sequence halves overlap rather than run past the end).
        blk = pl.program_id(0) * half_stride + s
        start = blk * seq_tile
        is_edge = start + seq_tile > seq_len

        @pl.when(jnp.logical_not(is_edge))
        def _full_tile():
            tile_update(False, start)

        @pl.when(is_edge)
        def _edge_tile():
            tile_update(True, start)
    else:
        tile_update(False, 0)


# -----------------------------------------------------------------------------
# Generation-aware tiling helpers
# -----------------------------------------------------------------------------
def _vmem_capacity_bytes():
    try:
        info = pltpu.get_tpu_info()
        cap = getattr(info, "vmem_capacity_bytes", None)
        if cap:
            return int(cap)
    except Exception:
        pass
    return 64 * 1024 * 1024  # conservative default = v7x physical VMEM


def _pick_batch_tile(B):
    if B <= 16:
        return B
    for d in range(16, 0, -1):          # largest divisor of B capped at 16
        if B % d == 0:
            return d
    return B


def _pick_tiles(B, S, H, in_itemsize):
    tb = _pick_batch_tile(B)
    cap = _vmem_capacity_bytes()
    budget = int(cap * 0.8)             # headroom for Mosaic internal scratch

    def need_bytes(ts):
        in_tile = tb * ts * H * in_itemsize      # streamed input tile (bf16)
        f32_tile = tb * ts * H * 4               # LN temporaries (f32)
        out_blk = tb * H * 4                     # resident pooled block
        return 2 * in_tile + 3 * f32_tile + 2 * out_blk + (1 << 20)

    # Largest sequence tile: multiple of 16 (bf16 sublane packing), capped at
    # 512, never larger than S (tiny S uses the full dim, which is also legal).
    if S < 16:
        ts = S
    else:
        ts = min(512, (S // 16) * 16)
        while ts > 16 and need_bytes(ts) > budget:
            ts -= 16

    vmem_limit = min(cap - (2 << 20), max(need_bytes(ts) + (16 << 20), 32 << 20))
    return tb, ts, vmem_limit


# -----------------------------------------------------------------------------
# Pallas wrapper: [B, S, H] embeddings -> pooled [B, H] (layernorm + seq max)
# -----------------------------------------------------------------------------
def tweet_extractor_pool(emb, *, seq_tile=None, batch_tile=None, eps=1e-12):
    B, S, H = emb.shape
    tb, ts, vmem_limit = _pick_tiles(B, S, H, emb.dtype.itemsize)
    if batch_tile is not None:
        tb = batch_tile
    if seq_tile is not None:
        ts = seq_tile
    assert B % tb == 0, "batch tile must divide batch"
    assert ts == S or ts % 8 == 0, "sequence tile must be a multiple of 8"

    nb = B // tb
    n_seq = pl.cdiv(S, ts)              # ragged last block allowed (no padding)

    # v7x megacore: if the batch axis has a single step, split the sequence
    # range over a leading size-2 "parallel" axis so both TensorCores get an
    # independent reduction stream.  For odd n_seq the halves overlap by one
    # block -- harmless because max is idempotent.  No effect on v5e/v6e.
    split = 2 if (nb == 1 and n_seq >= 2) else 1
    n_half = pl.cdiv(n_seq, split)
    half_stride = n_seq - n_half        # first block of the second half

    mask_needed = (S % ts) != 0

    kernel = functools.partial(
        _ln_maxpool_kernel, seq_len=S, seq_tile=ts, half_stride=half_stride,
        eps=eps, mask_needed=mask_needed)

    partial = pl.pallas_call(
        kernel,
        out_shape=jax.ShapeDtypeStruct((split, B, H), jnp.float32),
        grid=(split, nb, n_half),
        in_specs=[pl.BlockSpec((tb, ts, H),
                               lambda c, b, s: (b, c * half_stride + s, 0))],
        out_specs=pl.BlockSpec((None, tb, H), lambda c, b, s: (c, b, 0)),
        compiler_params=pltpu.CompilerParams(
            dimension_semantics=("parallel", "parallel", "arbitrary"),
            vmem_limit_bytes=vmem_limit,
        ),
    )(emb)
    # Combine the (at most 2) partial maxima; a squeeze when split == 1.
    return jnp.max(partial, axis=0)


# -----------------------------------------------------------------------------
# Deterministic parameters + BERT embedding stub (plain-JAX glue)
# -----------------------------------------------------------------------------
def make_params(key, vocab_size, max_seq, hidden):
    k1, k2, k3, k4, k5 = jax.random.split(key, 5)
    return {
        # embedding-stub tables (stand-in for the frozen pretrained encoder)
        "word_emb": 0.02 * jax.random.normal(k1, (vocab_size, hidden), jnp.float32),
        "pos_emb": 0.02 * jax.random.normal(k2, (max_seq, hidden), jnp.float32),
        "type_emb": 0.02 * jax.random.normal(k3, (2, hidden), jnp.float32),
        # module's own fc: nn.Linear(768, 2); weight ~ N(0, 0.02), bias ~ N(0, 1)
        "fc_weight": 0.02 * jax.random.normal(k4, (2, hidden), jnp.float32),
        "fc_bias": jax.random.normal(k5, (2,), jnp.float32),
    }


def bert_stub_embeddings(params, input_ids, token_type_ids):
    # Deterministic embedding sum producing the pre-layernorm [B, S, H] tensor.
    # (The final layernorm is fused into the Pallas kernel.)
    _, S = input_ids.shape
    return (params["word_emb"][input_ids]
            + params["pos_emb"][None, :S, :]
            + params["type_emb"][token_type_ids])


@jax.jit
def tweet_extractor_forward(params, input_ids, attn_masks, token_type_ids):
    del attn_masks  # the PyTorch head does an unmasked max over dim=1
    emb = bert_stub_embeddings(params, input_ids, token_type_ids)
    # Stream the [B, S, H] tensor through the kernel in bf16 (halves HBM bytes);
    # the layernorm math stays f32 inside the kernel.
    pooled = tweet_extractor_pool(emb.astype(jnp.bfloat16))
    # dropout(p=0.2) is identity at inference; fc: Linear(768 -> 2) in plain XLA.
    logits = pooled @ params["fc_weight"].T + params["fc_bias"]
    return logits[:, 0], logits[:, 1]


def reference_forward(params, input_ids, token_type_ids, eps=1e-12):
    emb = bert_stub_embeddings(params, input_ids, token_type_ids)
    x = emb.astype(jnp.bfloat16).astype(jnp.float32)  # match kernel's streamed dtype
    mean = jnp.mean(x, axis=-1, keepdims=True)
    var = jnp.var(x, axis=-1, keepdims=True)
    hs = (x - mean) * jax.lax.rsqrt(var + eps)
    pooled = jnp.max(hs, axis=1)
    logits = pooled @ params["fc_weight"].T + params["fc_bias"]
    return logits[:, 0], logits[:, 1]


# -----------------------------------------------------------------------------
# Main
# -----------------------------------------------------------------------------
if __name__ == "__main__":
    # Small shapes; H = 768 as implied by the module's Linear(768, 2).
    # S = 60 exercises both the ragged-edge mask path (60 % 48 != 0) and the
    # 2-way sequence split (batch axis has a single block).
    B, S, H, VOCAB = 4, 60, 768, 100

    key = jax.random.PRNGKey(0)
    kp, ki, kt = jax.random.split(key, 3)

    params = make_params(kp, VOCAB, S, H)
    input_ids = jax.random.randint(ki, (B, S), 0, VOCAB, dtype=jnp.int32)
    attn_masks = jnp.ones((B, S), dtype=jnp.int32)
    token_type_ids = jax.random.randint(kt, (B, S), 0, 2, dtype=jnp.int32)

    start_logits, end_logits = tweet_extractor_forward(
        params, input_ids, attn_masks, token_type_ids)
    jax.block_until_ready((start_logits, end_logits))

    # reference check in plain JAX (same bf16-rounded embeddings)
    ref_start, ref_end = reference_forward(params, input_ids, token_type_ids)
    assert jnp.allclose(start_logits, ref_start, atol=1e-3, rtol=1e-3)
    assert jnp.allclose(end_logits, ref_end, atol=1e-3, rtol=1e-3)

    print("KERNEL_OK")
</pallas_src>

<mosaic_0001>
module attributes {stable_mosaic.version = 11 : i64} {
  func.func @_ln_maxpool_kernel(%arg0: i32, %arg1: i32, %arg2: i32, %arg3: memref<4x48x768xbf16, #tpu.memory_space<vmem>>, %arg4: memref<1x4x768xf32, #tpu.memory_space<vmem>>) attributes {dimension_semantics = [#tpu.dimension_semantics<parallel>, #tpu.dimension_semantics<parallel>, #tpu.dimension_semantics<arbitrary>], iteration_bounds = array<i64: 2, 1, 1>, scalar_prefetch = 0 : i64, scratch_operands = 0 : i64, tpu.core_type = #tpu.core_type<tc>, window_params = [{transform_indices = @transform_0, window_bounds = array<i64: 4, 48, 768>}, {transform_indices = @transform_1, window_bounds = array<i64: 1, 4, 768>}]} {
    %c0_i32 = arith.constant 0 : i32
    %0 = arith.cmpi eq, %arg2, %c0_i32 : i32
    %1 = arith.extui %0 : i1 to i32
    %c0_i32_0 = arith.constant 0 : i32
    %2 = arith.cmpi ne, %1, %c0_i32_0 : i32
    scf.if %2 {
      %cst = arith.constant 0xFF800000 : f32
      %13 = vector.broadcast %cst : f32 to vector<4x768xf32>
      %c0 = arith.constant 0 : index
      %c0_4 = arith.constant 0 : index
      %c0_5 = arith.constant 0 : index
      %14 = vector.load %arg4[%c0, %c0_4, %c0_5] : memref<1x4x768xf32, #tpu.memory_space<vmem>>, vector<1x4x768xf32>
      %15 = vector.shape_cast %14 : vector<1x4x768xf32> to vector<4x768xf32>
      %16 = vector.shape_cast %13 : vector<4x768xf32> to vector<1x4x768xf32>
      tpu.vector_store %arg4[%c0, %c0_4, %c0_5], %16 {strides = array<i32>} : memref<1x4x768xf32, #tpu.memory_space<vmem>>, vector<1x4x768xf32>,
    } else {
    }
    %c1_i32 = arith.constant 1 : i32
    %3 = arith.muli %arg0, %c1_i32 : i32
    %4 = arith.addi %3, %arg2 : i32
    %c48_i32 = arith.constant 48 : i32
    %5 = arith.muli %4, %c48_i32 : i32
    %c48_i32_1 = arith.constant 48 : i32
    %6 = arith.addi %5, %c48_i32_1 : i32
    %c60_i32 = arith.constant 60 : i32
    %7 = arith.cmpi sgt, %6, %c60_i32 : i32
    %true = arith.constant true
    %8 = arith.xori %7, %true : i1
    %9 = arith.extui %8 : i1 to i32
    %c0_i32_2 = arith.constant 0 : i32
    %10 = arith.cmpi ne, %9, %c0_i32_2 : i32
    scf.if %10 {
      %c0 = arith.constant 0 : index
      %c0_4 = arith.constant 0 : index
      %c0_5 = arith.constant 0 : index
      %13 = vector.load %arg3[%c0, %c0_4, %c0_5] : memref<4x48x768xbf16, #tpu.memory_space<vmem>>, vector<4x48x768xbf16>
      %14 = arith.extf %13 : vector<4x48x768xbf16> to vector<4x48x768xf32>
      %cst = arith.constant dense<0.000000e+00> : vector<4x48xf32>
      %15 = vector.multi_reduction <add>, %14, %cst [2] : vector<4x48x768xf32> to vector<4x48xf32>
      %16 = vector.shape_cast %15 : vector<4x48xf32> to vector<4x48x1xf32>
      %17 = arith.mulf %14, %14 : vector<4x48x768xf32>
      %cst_6 = arith.constant dense<0.000000e+00> : vector<4x48xf32>
      %18 = vector.multi_reduction <add>, %17, %cst_6 [2] : vector<4x48x768xf32> to vector<4x48xf32>
      %19 = vector.shape_cast %18 : vector<4x48xf32> to vector<4x48x1xf32>
      %cst_7 = arith.constant 0.00130208337 : f32
      %20 = vector.broadcast %cst_7 : f32 to vector<4x48x1xf32>
      %21 = arith.mulf %16, %20 : vector<4x48x1xf32>
      %cst_8 = arith.constant 0.00130208337 : f32
      %22 = vector.broadcast %cst_8 : f32 to vector<4x48x1xf32>
      %23 = arith.mulf %19, %22 : vector<4x48x1xf32>
      %24 = arith.mulf %21, %21 : vector<4x48x1xf32>
      %25 = arith.subf %23, %24 : vector<4x48x1xf32>
      %26 = vector.broadcast %21 : vector<4x48x1xf32> to vector<4x48x768xf32>
      %27 = arith.subf %14, %26 : vector<4x48x768xf32>
      %cst_9 = arith.constant 9.99999996E-13 : f32
      %28 = vector.broadcast %cst_9 : f32 to vector<4x48x1xf32>
      %29 = arith.addf %25, %28 : vector<4x48x1xf32>
      %30 = math.rsqrt %29 : vector<4x48x1xf32>
      %31 = vector.broadcast %30 : vector<4x48x1xf32> to vector<4x48x768xf32>
      %32 = arith.mulf %27, %31 : vector<4x48x768xf32>
      %c0_10 = arith.constant 0 : index
      %c0_11 = arith.constant 0 : index
      %c0_12 = arith.constant 0 : index
      %33 = vector.load %arg4[%c0_10, %c0_11, %c0_12] : memref<1x4x768xf32, #tpu.memory_space<vmem>>, vector<1x4x768xf32>
      %34 = vector.shape_cast %33 : vector<1x4x768xf32> to vector<4x768xf32>
      %cst_13 = arith.constant dense<0xFF800000> : vector<4x768xf32>
      %35 = vector.multi_reduction <maximumf>, %32, %cst_13 [1] : vector<4x48x768xf32> to vector<4x768xf32>
      %36 = arith.maximumf %34, %35 : vector<4x768xf32>
      %c0_14 = arith.constant 0 : index
      %c0_15 = arith.constant 0 : index
      %c0_16 = arith.constant 0 : index
      %37 = vector.load %arg4[%c0_14, %c0_15, %c0_16] : memref<1x4x768xf32, #tpu.memory_space<vmem>>, vector<1x4x768xf32>
      %38 = vector.shape_cast %37 : vector<1x4x768xf32> to vector<4x768xf32>
      %39 = vector.shape_cast %36 : vector<4x768xf32> to vector<1x4x768xf32>
      tpu.vector_store %arg4[%c0_14, %c0_15, %c0_16], %39 {strides = array<i32>} : memref<1x4x768xf32, #tpu.memory_space<vmem>>, vector<1x4x768xf32>,
    } else {
    }
    %11 = arith.extui %7 : i1 to i32
    %c0_i32_3 = arith.constant 0 : i32
    %12 = arith.cmpi ne, %11, %c0_i32_3 : i32
    scf.if %12 {
      %c0 = arith.constant 0 : index
      %c0_4 = arith.constant 0 : index
      %c0_5 = arith.constant 0 : index
      %13 = vector.load %arg3[%c0, %c0_4, %c0_5] : memref<4x48x768xbf16, #tpu.memory_space<vmem>>, vector<4x48x768xbf16>
      %14 = arith.extf %13 : vector<4x48x768xbf16> to vector<4x48x768xf32>
      %cst = arith.constant dense<0.000000e+00> : vector<4x48xf32>
      %15 = vector.multi_reduction <add>, %14, %cst [2] : vector<4x48x768xf32> to vector<4x48xf32>
      %16 = vector.shape_cast %15 : vector<4x48xf32> to vector<4x48x1xf32>
      %17 = arith.mulf %14, %14 : vector<4x48x768xf32>
      %cst_6 = arith.constant dense<0.000000e+00> : vector<4x48xf32>
      %18 = vector.multi_reduction <add>, %17, %cst_6 [2] : vector<4x48x768xf32> to vector<4x48xf32>
      %19 = vector.shape_cast %18 : vector<4x48xf32> to vector<4x48x1xf32>
      %cst_7 = arith.constant 0.00130208337 : f32
      %20 = vector.broadcast %cst_7 : f32 to vector<4x48x1xf32>
      %21 = arith.mulf %16, %20 : vector<4x48x1xf32>
      %cst_8 = arith.constant 0.00130208337 : f32
      %22 = vector.broadcast %cst_8 : f32 to vector<4x48x1xf32>
      %23 = arith.mulf %19, %22 : vector<4x48x1xf32>
      %24 = arith.mulf %21, %21 : vector<4x48x1xf32>
      %25 = arith.subf %23, %24 : vector<4x48x1xf32>
      %26 = vector.broadcast %21 : vector<4x48x1xf32> to vector<4x48x768xf32>
      %27 = arith.subf %14, %26 : vector<4x48x768xf32>
      %cst_9 = arith.constant 9.99999996E-13 : f32
      %28 = vector.broadcast %cst_9 : f32 to vector<4x48x1xf32>
      %29 = arith.addf %25, %28 : vector<4x48x1xf32>
      %30 = math.rsqrt %29 : vector<4x48x1xf32>
      %31 = vector.broadcast %30 : vector<4x48x1xf32> to vector<4x48x768xf32>
      %32 = arith.mulf %27, %31 : vector<4x48x768xf32>
      %33 = tpu.iota {dimensions = array<i32: 1>} : vector<4x48x768xi32>
      %34 = vector.broadcast %5 : i32 to vector<4x48x768xi32>
      %35 = arith.addi %34, %33 : vector<4x48x768xi32>
      %c60_i32_10 = arith.constant 60 : i32
      %36 = vector.broadcast %c60_i32_10 : i32 to vector<4x48x768xi32>
      %37 = arith.cmpi slt, %35, %36 : vector<4x48x768xi32>
      %cst_11 = arith.constant 0xFF800000 : f32
      %38 = vector.broadcast %cst_11 : f32 to vector<4x48x768xf32>
      %39 = arith.select %37, %32, %38 : vector<4x48x768xi1>, vector<4x48x768xf32>
      %c0_12 = arith.constant 0 : index
      %c0_13 = arith.constant 0 : index
      %c0_14 = arith.constant 0 : index
      %40 = vector.load %arg4[%c0_12, %c0_13, %c0_14] : memref<1x4x768xf32, #tpu.memory_space<vmem>>, vector<1x4x768xf32>
      %41 = vector.shape_cast %40 : vector<1x4x768xf32> to vector<4x768xf32>
      %cst_15 = arith.constant dense<0xFF800000> : vector<4x768xf32>
      %42 = vector.multi_reduction <maximumf>, %39, %cst_15 [1] : vector<4x48x768xf32> to vector<4x768xf32>
      %43 = arith.maximumf %41, %42 : vector<4x768xf32>
      %c0_16 = arith.constant 0 : index
      %c0_17 = arith.constant 0 : index
      %c0_18 = arith.constant 0 : index
      %44 = vector.load %arg4[%c0_16, %c0_17, %c0_18] : memref<1x4x768xf32, #tpu.memory_space<vmem>>, vector<1x4x768xf32>
      %45 = vector.shape_cast %44 : vector<1x4x768xf32> to vector<4x768xf32>
      %46 = vector.shape_cast %43 : vector<4x768xf32> to vector<1x4x768xf32>
      tpu.vector_store %arg4[%c0_16, %c0_17, %c0_18], %46 {strides = array<i32>} : memref<1x4x768xf32, #tpu.memory_space<vmem>>, vector<1x4x768xf32>,
    } else {
    }
    return
  }
  func.func @transform_0(%arg0: i32, %arg1: i32, %arg2: i32) -> (i32, i32, i32) {
    %c1_i32 = arith.constant 1 : i32
    %0 = arith.muli %arg0, %c1_i32 : i32
    %1 = arith.addi %0, %arg2 : i32
    %c0_i32 = arith.constant 0 : i32
    %c0_i32_0 = arith.constant 0 : i32
    return %arg1, %1, %c0_i32 : i32, i32, i32
  }
  func.func @transform_1(%arg0: i32, %arg1: i32, %arg2: i32) -> (i32, i32, i32) {
    %c0_i32 = arith.constant 0 : i32
    %c0_i32_0 = arith.constant 0 : i32
    return %arg0, %arg1, %c0_i32 : i32, i32, i32
  }
}

</mosaic_0001>

<llo_original>
// kernel: tweet_extractor_forward.1
$region0: #{tweet_extractor_forward.1}
  #allocation0 [shape = 'u32[]', space=smem, size = 0x4, offset = 0x4, fixed_abs, tag = 'smem constant byte address 0x4 - core index']
  #allocation1 [shape = 'u32[144,128]{1,0:T(1,128)}', space=vmem, size = 0x12000, scoped, tag = 'internal scratch']
  %s0 = inlined_call_operand.vmem [shape: bf16[4,60,768], index: 0, kind: input, shape index: {}]
  %s1 = inlined_call_operand.vmem [shape: f32[2,4,768], index: 1, kind: output, shape index: {}]
  %s2 = sld [smem:[#allocation0]]
  $region79: #{tweet_extractor_forward.1} parent=0
    _
  %s4 = ssub.s32 1, %s2
  %s5 = scalar_select 0, %s4, %s2
  $region1: #{tweet_extractor_forward.1} parent=0
    #allocation2 [shape = 'u8[589824]{0}', space=vmem, size = 0x90000, scoped, tag = 'input window, operand 0']
    loop: start=0, step=1, limit=4
    $region2: #{tweet_extractor_forward.1} parent=1 // loop_pre_header
      _
    $region3: #{tweet_extractor_forward.1} parent=1 // loop_header
      %s7 = sphi 0, %s11
      %p8 = scmp.ge.s32.totalorder %s7, 4
      %s14 = sphi 0, %s33
      %s15 = sphi 0, %s29
      %s16 = sphi 0, %s25
      %s17 = sphi 0, %s14
      %s18 = sphi 0, %s15
      %s19 = sphi 0, %s16
      %s20 = sphi 0, %s17
      %s21 = sphi 0, %s18
      %s22 = sphi 0, %s19
      %s40 = sphi 0, %s42
      %s43 = sphi 0, %s40
      %s44 = sphi 0, %s43
      %s60 = sphi 0, %s44
      %s68 = sphi 0, %s70
      %s71 = sphi 0, %s68
      %s72 = sphi 0, %s71
      %s88 = sphi 0, %s72
    $region4: #{tweet_extractor_forward.1} parent=1 // loop_header_branch
      %10 = sbr.rel (%p8) target = $region8
    $region5: #{tweet_extractor_forward.1} parent=1 // loop_body
      %s12 = ssub.s32 %s7, 1
      %s13 = ssub.s32 %s7, 2
      %s23 = sadd.s32 1, %s16
      %p24 = scmp.ge.s32.totalorder %s23, 1
      %s25 = scalar_select %p24, 0, %s23
      %s26 = sadd.s32 1, %s15
      %s27 = scalar_select %p24, %s26, %s15
      %p28 = scmp.ge.s32.totalorder %s27, 1
      %s29 = scalar_select %p28, 0, %s27
      %s30 = sadd.s32 1, %s14
      %s31 = scalar_select %p28, %s30, %s14
      %p32 = scmp.ge.s32.totalorder %s31, 2
      %s33 = scalar_select %p32, 0, %s31
      %s34 = sadd.s32 %s14, %s16
      %s35 = sadd.s32 %s33, %s25
      %s36 = ssub.s32 %s15, %s29
      %s37 = ssub.s32 %s34, %s35
      %s38 = sor.u32 %s36, %s37
      %p39 = scmp.eq.s32.totalorder %s38, 0
      %s41 = sadd.s32 %s40, 1
      %s42 = scalar_select %p39, %s40, %s41
      %p45 = pneg %p39
      %p46 = scmp.eq.s32.totalorder %s7, 1
      %p47 = por %p45, %p46
      %p48 = scmp.ne.s32.totalorder %s40, %s43
      %p49 = scmp.eq.s32.totalorder %s7, 0
      %p50 = por %p48, %p49
      %p51 = scmp.ne.s32.totalorder %s40, %s43
      %p52 = scmp.eq.s32.totalorder %s12, 1
      %p53 = por %p51, %p52
      %p54 = scmp.ne.s32.totalorder %s43, %s44
      %p55 = scmp.eq.s32.totalorder %s12, 0
      %p56 = por %p54, %p55
      %p57 = scmp.ne.s32.totalorder %s43, %s44
      %p58 = scmp.eq.s32.totalorder %s13, 1
      %p59 = por %p57, %p58
      %p61 = scmp.ne.s32.totalorder %s44, %s60
      %p62 = scmp.eq.s32.totalorder %s13, 0
      %p63 = por %p61, %p62
      %s64 = ssub.s32 %s14, %s33
      %s65 = ssub.s32 %s15, %s29
      %s66 = sor.u32 %s64, %s65
      %p67 = scmp.eq.s32.totalorder %s66, 0
      %s69 = sadd.s32 %s68, 1
      %s70 = scalar_select %p67, %s68, %s69
      %p73 = pneg %p67
      %p74 = scmp.eq.s32.totalorder %s7, 1
      %p75 = por %p73, %p74
      %p76 = scmp.ne.s32.totalorder %s68, %s71
      %p77 = scmp.eq.s32.totalorder %s7, 0
      %p78 = por %p76, %p77
      %p79 = scmp.ne.s32.totalorder %s68, %s71
      %p80 = scmp.eq.s32.totalorder %s12, 1
      %p81 = por %p79, %p80
      %p82 = scmp.ne.s32.totalorder %s71, %s72
      %p83 = scmp.eq.s32.totalorder %s12, 0
      %p84 = por %p82, %p83
      %p85 = scmp.ne.s32.totalorder %s71, %s72
      %p86 = scmp.eq.s32.totalorder %s13, 1
      %p87 = por %p85, %p86
      %p89 = scmp.ne.s32.totalorder %s72, %s88
      %p90 = scmp.eq.s32.totalorder %s13, 0
      %p91 = por %p89, %p90
      %p92 = scmp.le.s32.totalorder 1, %s7
      %p93 = scmp.lt.s32.totalorder %s7, 3
      %p94 = pnand %p92, %p93
      %p95 = pneg %p94
      // Predicated region
      $region9: #{tweet_extractor_forward.1} parent=5 // pred_check
        _
      $region10: #{tweet_extractor_forward.1} parent=5 // pred_check_branch
        %97 = sbr.rel (%p94) target = $region12
      $region11: #{tweet_extractor_forward.1} parent=5 // pred_region
        %s98 = ssub.s32 %s7, 1
      $region12: #{tweet_extractor_forward.1} parent=5 // pred_fallthru
        _
      %p99 = scmp.lt.s32.totalorder %s7, 2
      // Predicated region
      $region13: #{tweet_extractor_forward.1} parent=5 // pred_check
        %p100 = pneg %p99
      $region14: #{tweet_extractor_forward.1} parent=5 // pred_check_branch
        %102 = sbr.rel (%p100) target = $region16
      $region15: #{tweet_extractor_forward.1} parent=5 // pred_region
        // Predicated region
        $region17: #{tweet_extractor_forward.1} parent=15 // pred_check
          %p103 = pneg %p50
        $region18: #{tweet_extractor_forward.1} parent=15 // pred_check_branch
          %105 = sbr.rel (%p103) target = $region20
        $region19: #{tweet_extractor_forward.1} parent=15 // pred_region
          %s106 = sand.u32 %s40, 1
          %s107 = sand.u32 %s40, 1
          %s108 = smul.addr %s107, 576
          %s109 = scalar_lea.vmem [#allocation2], %s108
          %s110 = sadd.s32 %s14, %s16
          %s111 = smul.u32 4, %s15
          %s112 = smul.u32 6, %s110
          %s113 = ssub.s32 8, %s112
          %p114 = scmp.lt.s32.totalorder %s113, 6
          %s115 = scalar_select %p114, %s113, 6
          %s116 = smul.u32 256, %s115
          %s117 = smul.u32 %s116, 6
          %p118 = scmp.ne.s32.totalorder 0, %s117
          %s119 = smul.addr %s112, 6
          %s120 = smul.addr %s111, 48
          %s121 = sadd.s32 %s119, %s120
          %s122 = smul.addr %s121, 4
          %s123 = scalar_lea.vmem %s0, %s122
          // Predicated region
          $region21: #{tweet_extractor_forward.1} parent=19 // pred_check
            %p124 = pneg %p118
          $region22: #{tweet_extractor_forward.1} parent=19 // pred_check_branch
            %126 = sbr.rel (%p124) target = $region24
          $region23: #{tweet_extractor_forward.1} parent=19 // pred_region
            // Predicated region
            $region25: #{tweet_extractor_forward.1} parent=23 // pred_check
              _
            $region26: #{tweet_extractor_forward.1} parent=23 // pred_check_branch
              %128 = sbr.rel (0) target = $region28
            $region27: #{tweet_extractor_forward.1} parent=23 // pred_region
              %s129 = sdiv.u32.pop %s115, 6
              %s130 = srem.u32.pop %s115, 6
              // While loop
              $region29: #{tweet_extractor_forward.1} parent=27 // loop_pre_header
                _
              $region30: #{tweet_extractor_forward.1} parent=27 // loop_header
                %s132 = sphi 0, %s134
                %p133 = scmp.ge.s32.totalorder %s132, %s129
                %s137 = sphi 0, %s286
                %s138 = sphi %s123, %s289
                %s139 = sphi %s109, %s290
              $region31: #{tweet_extractor_forward.1} parent=27 // loop_header_branch
                %136 = sbr.rel (%p133) target = $region35
              $region32: #{tweet_extractor_forward.1} parent=27 // loop_body
                %v140 = vld [vmem:[%s138] sm:$0xff]
                %141 = vst [vmem:[%s139] sm:$0xff] %v140
                %v142 = vld [vmem:[%s138 + $0x18] sm:$0xff]
                %143 = vst [vmem:[%s139 + $0x18] sm:$0xff] %v142
                %v144 = vld [vmem:[%s138 + $0x30] sm:$0xff]
                %145 = vst [vmem:[%s139 + $0x30] sm:$0xff] %v144
                %v146 = vld [vmem:[%s138 + $0x48] sm:$0xff]
                %147 = vst [vmem:[%s139 + $0x48] sm:$0xff] %v146
                %v148 = vld [vmem:[%s138 + $0x60] sm:$0xff]
                %149 = vst [vmem:[%s139 + $0x60] sm:$0xff] %v148
                %v150 = vld [vmem:[%s138 + $0x78] sm:$0xff]
                %151 = vst [vmem:[%s139 + $0x78] sm:$0xff] %v150
                %v152 = vld [vmem:[%s138 + $0x8] sm:$0xff]
                %153 = vst [vmem:[%s139 + $0x8] sm:$0xff] %v152
                %v154 = vld [vmem:[%s138 + $0x20] sm:$0xff]
                %155 = vst [vmem:[%s139 + $0x20] sm:$0xff] %v154
                %v156 = vld [vmem:[%s138 + $0x38] sm:$0xff]
                %157 = vst [vmem:[%s139 + $0x38] sm:$0xff] %v156
                %v158 = vld [vmem:[%s138 + $0x50] sm:$0xff]
                %159 = vst [vmem:[%s139 + $0x50] sm:$0xff] %v158
                %v160 = vld [vmem:[%s138 + $0x68] sm:$0xff]
                %161 = vst [vmem:[%s139 + $0x68] sm:$0xff] %v160
                %v162 = vld [vmem:[%s138 + $0x80] sm:$0xff]
                %163 = vst [vmem:[%s139 + $0x80] sm:$0xff] %v162
                %v164 = vld [vmem:[%s138 + $0x10] sm:$0xff]
                %165 = vst [vmem:[%s139 + $0x10] sm:$0xff] %v164
                %v166 = vld [vmem:[%s138 + $0x28] sm:$0xff]
                %167 = vst [vmem:[%s139 + $0x28] sm:$0xff] %v166
                %v168 = vld [vmem:[%s138 + $0x40] sm:$0xff]
                %169 = vst [vmem:[%s139 + $0x40] sm:$0xff] %v168
                %v170 = vld [vmem:[%s138 + $0x58] sm:$0xff]
                %171 = vst [vmem:[%s139 + $0x58] sm:$0xff] %v170
                %v172 = vld [vmem:[%s138 + $0x70] sm:$0xff]
                %173 = vst [vmem:[%s139 + $0x70] sm:$0xff] %v172
                %v174 = vld [vmem:[%s138 + $0x88] sm:$0xff]
                %175 = vst [vmem:[%s139 + $0x88] sm:$0xff] %v174
                %v176 = vld [vmem:[%s138 + $0xc0] sm:$0xff]
                %177 = vst [vmem:[%s139 + $0x90] sm:$0xff] %v176
                %v178 = vld [vmem:[%s138 + $0xd8] sm:$0xff]
                %179 = vst [vmem:[%s139 + $0xa8] sm:$0xff] %v178
                %v180 = vld [vmem:[%s138 + $0xf0] sm:$0xff]
                %181 = vst [vmem:[%s139 + $0xc0] sm:$0xff] %v180
                %v182 = vld [vmem:[%s138 + $0x108] sm:$0xff]
                %183 = vst [vmem:[%s139 + $0xd8] sm:$0xff] %v182
                %v184 = vld [vmem:[%s138 + $0x120] sm:$0xff]
                %185 = vst [vmem:[%s139 + $0xf0] sm:$0xff] %v184
                %v186 = vld [vmem:[%s138 + $0x138] sm:$0xff]
                %187 = vst [vmem:[%s139 + $0x108] sm:$0xff] %v186
                %v188 = vld [vmem:[%s138 + $0xc8] sm:$0xff]
                %189 = vst [vmem:[%s139 + $0x98] sm:$0xff] %v188
                %v190 = vld [vmem:[%s138 + $0xe0] sm:$0xff]
                %191 = vst [vmem:[%s139 + $0xb0] sm:$0xff] %v190
                %v192 = vld [vmem:[%s138 + $0xf8] sm:$0xff]
                %193 = vst [vmem:[%s139 + $0xc8] sm:$0xff] %v192
                %v194 = vld [vmem:[%s138 + $0x110] sm:$0xff]
                %195 = vst [vmem:[%s139 + $0xe0] sm:$0xff] %v194
                %v196 = vld [vmem:[%s138 + $0x128] sm:$0xff]
                %197 = vst [vmem:[%s139 + $0xf8] sm:$0xff] %v196
                %v198 = vld [vmem:[%s138 + $0x140] sm:$0xff]
                %199 = vst [vmem:[%s139 + $0x110] sm:$0xff] %v198
                %v200 = vld [vmem:[%s138 + $0xd0] sm:$0xff]
                %201 = vst [vmem:[%s139 + $0xa0] sm:$0xff] %v200
                %v202 = vld [vmem:[%s138 + $0xe8] sm:$0xff]
                %203 = vst [vmem:[%s139 + $0xb8] sm:$0xff] %v202
                %v204 = vld [vmem:[%s138 + $0x100] sm:$0xff]
                %205 = vst [vmem:[%s139 + $0xd0] sm:$0xff] %v204
                %v206 = vld [vmem:[%s138 + $0x118] sm:$0xff]
                %207 = vst [vmem:[%s139 + $0xe8] sm:$0xff] %v206
                %v208 = vld [vmem:[%s138 + $0x130] sm:$0xff]
                %209 = vst [vmem:[%s139 + $0x100] sm:$0xff] %v208
                %v210 = vld [vmem:[%s138 + $0x148] sm:$0xff]
                %211 = vst [vmem:[%s139 + $0x118] sm:$0xff] %v210
                %v212 = vld [vmem:[%s138 + $0x180] sm:$0xff]
                %213 = vst [vmem:[%s139 + $0x120] sm:$0xff] %v212
                %v214 = vld [vmem:[%s138 + $0x198] sm:$0xff]
                %215 = vst [vmem:[%s139 + $0x138] sm:$0xff] %v214
                %v216 = vld [vmem:[%s138 + $0x1b0] sm:$0xff]
                %217 = vst [vmem:[%s139 + $0x150] sm:$0xff] %v216
                %v218 = vld [vmem:[%s138 + $0x1c8] sm:$0xff]
                %219 = vst [vmem:[%s139 + $0x168] sm:$0xff] %v218
                %v220 = vld [vmem:[%s138 + $0x1e0] sm:$0xff]
                %221 = vst [vmem:[%s139 + $0x180] sm:$0xff] %v220
                %v222 = vld [vmem:[%s138 + $0x1f8] sm:$0xff]
                %223 = vst [vmem:[%s139 + $0x198] sm:$0xff] %v222
                %v224 = vld [vmem:[%s138 + $0x188] sm:$0xff]
                %225 = vst [vmem:[%s139 + $0x128] sm:$0xff] %v224
                %v226 = vld [vmem:[%s138 + $0x1a0] sm:$0xff]
                %227 = vst [vmem:[%s139 + $0x140] sm:$0xff] %v226
                %v228 = vld [vmem:[%s138 + $0x1b8] sm:$0xff]
                %229 = vst [vmem:[%s139 + $0x158] sm:$0xff] %v228
                %v230 = vld [vmem:[%s138 + $0x1d0] sm:$0xff]
                %231 = vst [vmem:[%s139 + $0x170] sm:$0xff] %v230
                %v232 = vld [vmem:[%s138 + $0x1e8] sm:$0xff]
                %233 = vst [vmem:[%s139 + $0x188] sm:$0xff] %v232
                %v234 = vld [vmem:[%s138 + $0x200] sm:$0xff]
                %235 = vst [vmem:[%s139 + $0x1a0] sm:$0xff] %v234
                %v236 = vld [vmem:[%s138 + $0x190] sm:$0xff]
                %237 = vst [vmem:[%s139 + $0x130] sm:$0xff] %v236
                %v238 = vld [vmem:[%s138 + $0x1a8] sm:$0xff]
                %239 = vst [vmem:[%s139 + $0x148] sm:$0xff] %v238
                %v240 = vld [vmem:[%s138 + $0x1c0] sm:$0xff]
                %241 = vst [vmem:[%s139 + $0x160] sm:$0xff] %v240
                %v242 = vld [vmem:[%s138 + $0x1d8] sm:$0xff]
                %243 = vst [vmem:[%s139 + $0x178] sm:$0xff] %v242
                %v244 = vld [vmem:[%s138 + $0x1f0] sm:$0xff]
                %245 = vst [vmem:[%s139 + $0x190] sm:$0xff] %v244
                %v246 = vld [vmem:[%s138 + $0x208] sm:$0xff]
                %247 = vst [vmem:[%s139 + $0x1a8] sm:$0xff] %v246
                %v248 = vld [vmem:[%s138 + $0x240] sm:$0xff]
                %249 = vst [vmem:[%s139 + $0x1b0] sm:$0xff] %v248
                %v250 = vld [vmem:[%s138 + $0x258] sm:$0xff]
                %251 = vst [vmem:[%s139 + $0x1c8] sm:$0xff] %v250
                %v252 = vld [vmem:[%s138 + $0x270] sm:$0xff]
                %253 = vst [vmem:[%s139 + $0x1e0] sm:$0xff] %v252
                %v254 = vld [vmem:[%s138 + $0x288] sm:$0xff]
                %255 = vst [vmem:[%s139 + $0x1f8] sm:$0xff] %v254
                %v256 = vld [vmem:[%s138 + $0x2a0] sm:$0xff]
                %257 = vst [vmem:[%s139 + $0x210] sm:$0xff] %v256
                %v258 = vld [vmem:[%s138 + $0x2b8] sm:$0xff]
                %259 = vst [vmem:[%s139 + $0x228] sm:$0xff] %v258
                %v260 = vld [vmem:[%s138 + $0x248] sm:$0xff]
                %261 = vst [vmem:[%s139 + $0x1b8] sm:$0xff] %v260
                %v262 = vld [vmem:[%s138 + $0x260] sm:$0xff]
                %263 = vst [vmem:[%s139 + $0x1d0] sm:$0xff] %v262
                %v264 = vld [vmem:[%s138 + $0x278] sm:$0xff]
                %265 = vst [vmem:[%s139 + $0x1e8] sm:$0xff] %v264
                %v266 = vld [vmem:[%s138 + $0x290] sm:$0xff]
                %267 = vst [vmem:[%s139 + $0x200] sm:$0xff] %v266
                %v268 = vld [vmem:[%s138 + $0x2a8] sm:$0xff]
                %269 = vst [vmem:[%s139 + $0x218] sm:$0xff] %v268
                %v270 = vld [vmem:[%s138 + $0x2c0] sm:$0xff]
                %271 = vst [vmem:[%s139 + $0x230] sm:$0xff] %v270
                %v272 = vld [vmem:[%s138 + $0x250] sm:$0xff]
                %273 = vst [vmem:[%s139 + $0x1c0] sm:$0xff] %v272
                %v274 = vld [vmem:[%s138 + $0x268] sm:$0xff]
                %275 = vst [vmem:[%s139 + $0x1d8] sm:$0xff] %v274
                %v276 = vld [vmem:[%s138 + $0x280] sm:$0xff]
                %277 = vst [vmem:[%s139 + $0x1f0] sm:$0xff] %v276
                %v278 = vld [vmem:[%s138 + $0x298] sm:$0xff]
                %279 = vst [vmem:[%s139 + $0x208] sm:$0xff] %v278
                %v280 = vld [vmem:[%s138 + $0x2b0] sm:$0xff]
                %281 = vst [vmem:[%s139 + $0x220] sm:$0xff] %v280
                %v282 = vld [vmem:[%s138 + $0x2c8] sm:$0xff]
                %283 = vst [vmem:[%s139 + $0x238] sm:$0xff] %v282
                %s284 = sadd.s32 1, %s137
                %p285 = scmp.ge.s32.totalorder %s284, %s129
                %s286 = scalar_select %p285, 0, %s284
                %s287 = smul.u32 %s286, 144
                %s288 = smul.u32 %s286, 144
                %s289 = scalar_lea.vmem %s123, %s287
                %s290 = scalar_lea.vmem %s109, %s288 [#allocation2]
              $region33: #{tweet_extractor_forward.1} parent=27 // loop_footer
                %s134 = sadd.s32 %s132, 1
              $region34: #{tweet_extractor_forward.1} parent=27 // loop_footer_branch
                %131 = sbr.rel target = $region30
              $region35: #{tweet_extractor_forward.1} parent=27 // loop_exit
                _
              %s291 = sdiv.u32.pop %s115, 6
              %s292 = srem.u32.pop %s115, 6
              %s293 = smul.u32 %s291, 6
              %s294 = smul.u32 24, %s293
              %s295 = scalar_lea.vmem %s123, %s294
              %s296 = smul.u32 24, %s293
              %s297 = scalar_lea.vmem %s109, %s296 [#allocation2]
              // While loop
              $region36: #{tweet_extractor_forward.1} parent=27 // loop_pre_header
                _
              $region37: #{tweet_extractor_forward.1} parent=27 // loop_header
                %s299 = sphi 0, %s301
                %p300 = scmp.ge.s32.totalorder %s299, %s292
                %s304 = sphi 0, %s333
                %s305 = sphi %s295, %s336
                %s306 = sphi %s297, %s337
              $region38: #{tweet_extractor_forward.1} parent=27 // loop_header_branch
                %303 = sbr.rel (%p300) target = $region42
              $region39: #{tweet_extractor_forward.1} parent=27 // loop_body
                %v307 = vld [vmem:[%s305] sm:$0xff]
                %308 = vst [vmem:[%s306] sm:$0xff] %v307
                %v309 = vld [vmem:[%s305 + $0x8] sm:$0xff]
                %310 = vst [vmem:[%s306 + $0x8] sm:$0xff] %v309
                %v311 = vld [vmem:[%s305 + $0x10] sm:$0xff]
                %312 = vst [vmem:[%s306 + $0x10] sm:$0xff] %v311
                %v313 = vld [vmem:[%s305 + $0xc0] sm:$0xff]
                %314 = vst [vmem:[%s306 + $0x90] sm:$0xff] %v313
                %v315 = vld [vmem:[%s305 + $0xc8] sm:$0xff]
                %316 = vst [vmem:[%s306 + $0x98] sm:$0xff] %v315
                %v317 = vld [vmem:[%s305 + $0xd0] sm:$0xff]
                %318 = vst [vmem:[%s306 + $0xa0] sm:$0xff] %v317
                %v319 = vld [vmem:[%s305 + $0x180] sm:$0xff]
                %320 = vst [vmem:[%s306 + $0x120] sm:$0xff] %v319
                %v321 = vld [vmem:[%s305 + $0x188] sm:$0xff]
                %322 = vst [vmem:[%s306 + $0x128] sm:$0xff] %v321
                %v323 = vld [vmem:[%s305 + $0x190] sm:$0xff]
                %324 = vst [vmem:[%s306 + $0x130] sm:$0xff] %v323
                %v325 = vld [vmem:[%s305 + $0x240] sm:$0xff]
                %326 = vst [vmem:[%s306 + $0x1b0] sm:$0xff] %v325
                %v327 = vld [vmem:[%s305 + $0x248] sm:$0xff]
                %328 = vst [vmem:[%s306 + $0x1b8] sm:$0xff] %v327
                %v329 = vld [vmem:[%s305 + $0x250] sm:$0xff]
                %330 = vst [vmem:[%s306 + $0x1c0] sm:$0xff] %v329
                %s331 = sadd.s32 1, %s304
                %p332 = scmp.ge.s32.totalorder %s331, %s292
                %s333 = scalar_select %p332, 0, %s331
                %s334 = smul.u32 %s333, 24
                %s335 = smul.u32 %s333, 24
                %s336 = scalar_lea.vmem %s295, %s334
                %s337 = scalar_lea.vmem %s297, %s335 [#allocation2]
              $region40: #{tweet_extractor_forward.1} parent=27 // loop_footer
                %s301 = sadd.s32 %s299, 1
              $region41: #{tweet_extractor_forward.1} parent=27 // loop_footer_branch
                %298 = sbr.rel target = $region37
              $region42: #{tweet_extractor_forward.1} parent=27 // loop_exit
                _
            $region28: #{tweet_extractor_forward.1} parent=23 // pred_fallthru
              _
            // Predicated region
            $region43: #{tweet_extractor_forward.1} parent=23 // pred_check
              _
            $region44: #{tweet_extractor_forward.1} parent=23 // pred_check_branch
              %339 = sbr.rel target = $region46
            $region45: #{tweet_extractor_forward.1} parent=23 // pred_region
              _
            $region46: #{tweet_extractor_forward.1} parent=23 // pred_fallthru
              _
          $region24: #{tweet_extractor_forward.1} parent=19 // pred_fallthru
            _
          %340 = vnop
        $region20: #{tweet_extractor_forward.1} parent=15 // pred_fallthru
          _
      $region16: #{tweet_extractor_forward.1} parent=5 // pred_fallthru
        _
      %p341 = scmp.le.s32.totalorder 1, %s7
      %p342 = scmp.lt.s32.totalorder %s7, 3
      %p343 = pnand %p341, %p342
      %p344 = pneg %p343
      // Predicated region
      $region47: #{tweet_extractor_forward.1} parent=5 // pred_check
        _
      $region48: #{tweet_extractor_forward.1} parent=5 // pred_check_branch
        %346 = sbr.rel (%p343) target = $region50
      $region49: #{tweet_extractor_forward.1} parent=5 // pred_region
        %s347 = ssub.s32 %s7, 1
        %s348 = sand.u32 %s43, 1
        %s349 = sand.u32 %s43, 1
        %s350 = smul.addr %s349, 576
        %s351 = scalar_lea.vmem [#allocation2], %s350
        // Predicated region
        $region51: #{tweet_extractor_forward.1} parent=49 // pred_check
          %p352 = pneg %p56
        $region52: #{tweet_extractor_forward.1} parent=49 // pred_check_branch
          %354 = sbr.rel (%p352) target = $region54
        $region53: #{tweet_extractor_forward.1} parent=49 // pred_region
          _
        $region54: #{tweet_extractor_forward.1} parent=49 // pred_fallthru
          _
        %s355 = sand.u32 %s43, 1
        %s356 = sand.u32 %s43, 1
        %s357 = smul.addr %s356, 576
        %s358 = scalar_lea.vmem [#allocation2], %s357
        %p359 = pneg %p56
        %p360 = pneg %p53
        %p361 = pneg %p84
        %p362 = pneg %p81
        %p363 = scmp.lt.s32.totalorder %s17, 1
        %s364 = scalar_select %p363, %s17, 1
        %p365 = scmp.lt.s32.totalorder %s18, 0
        %s366 = scalar_select %p365, %s18, 0
        %s367 = smul.addr %s366, 6
        %s368 = smul.addr %s364, 6
        %s369 = sadd.s32 %s367, %s368
        %s370 = smul.addr %s369, 4
        %s371 = scalar_lea.vmem %s1, %s370
        %s372 = sadd.s32 %s17, %s19
        %s373 = smul.u32 4, %s18
        %s374 = smul.u32 6, %s372
        %s375 = ssub.s32 8, %s374
        %p376 = scmp.lt.s32.totalorder %s375, 6
        %s377 = scalar_select %p376, %s375, 6
        %s378 = smul.u32 256, %s377
        %s379 = smul.u32 %s378, 6
        %p380 = scmp.lt.s32.totalorder %s17, 1
        %s381 = scalar_select %p380, %s17, 1
        %p382 = scmp.lt.s32.totalorder %s18, 0
        %s383 = scalar_select %p382, %s18, 0
        %s384 = smul.addr %s383, 6
        %s385 = smul.addr %s381, 6
        %s386 = sadd.s32 %s384, %s385
        %s387 = smul.addr %s386, 4
        %s388 = scalar_lea.vmem %s1, %s387
        %p389 = scmp.eq.s32.totalorder %s19, 0
        // Predicated region
        $region55: #{tweet_extractor_forward.1} parent=49 // pred_check
          %p390 = pneg %p389
        $region56: #{tweet_extractor_forward.1} parent=49 // pred_check_branch
          %392 = sbr.rel (%p390) target = $region58
        $region57: #{tweet_extractor_forward.1} parent=49 // pred_region
          %393 = vst [vmem:[%s388] sm:$0xff] -inf
          %394 = vst [vmem:[%s388 + $0x8] sm:$0xff] -inf
          %395 = vst [vmem:[%s388 + $0x10] sm:$0xff] -inf
        $region58: #{tweet_extractor_forward.1} parent=49 // pred_fallthru
          _
        %s396 = sadd.s32 %s17, %s19
        %s397 = smul.u32 %s396, 48
        %s398 = sadd.s32 %s397, 48
        %p399 = scmp.gt.s32.totalorder %s398, 60
        %p400 = scmp.le.s32.totalorder %s398, 60
        // Predicated region
        $region59: #{tweet_extractor_forward.1} parent=49 // pred_check
          %p401 = pneg %p400
        $region60: #{tweet_extractor_forward.1} parent=49 // pred_check_branch
          %403 = sbr.rel (%p401) target = $region62
        $region61: #{tweet_extractor_forward.1} parent=49 // pred_region
          %v404 = vld [vmem:[%s351] sm:$0xff]
          %v405 = vld [vmem:[%s351 + $0x8] sm:$0xff]
          %v406 = vld [vmem:[%s351 + $0x10] sm:$0xff]
          %v407 = vld [vmem:[%s351 + $0x18] sm:$0xff]
          %v408 = vld [vmem:[%s351 + $0x20] sm:$0xff]
          %v409 = vld [vmem:[%s351 + $0x28] sm:$0xff]
          %v410 = vld [vmem:[%s351 + $0x30] sm:$0xff]
          %v411 = vld [vmem:[%s351 + $0x38] sm:$0xff]
          %v412 = vld [vmem:[%s351 + $0x40] sm:$0xff]
          %v413 = vld [vmem:[%s351 + $0x48] sm:$0xff]
          %v414 = vld [vmem:[%s351 + $0x50] sm:$0xff]
          %v415 = vld [vmem:[%s351 + $0x58] sm:$0xff]
          %v416 = vld [vmem:[%s351 + $0x60] sm:$0xff]
          %v417 = vld [vmem:[%s351 + $0x68] sm:$0xff]
          %v418 = vld [vmem:[%s351 + $0x70] sm:$0xff]
          %v419 = vld [vmem:[%s351 + $0x78] sm:$0xff]
          %v420 = vld [vmem:[%s351 + $0x80] sm:$0xff]
          %v421 = vld [vmem:[%s351 + $0x88] sm:$0xff]
          %v422 = vld [vmem:[%s351 + $0x90] sm:$0xff]
          %v423 = vld [vmem:[%s351 + $0x98] sm:$0xff]
          %v424 = vld [vmem:[%s351 + $0xa0] sm:$0xff]
          %v425 = vld [vmem:[%s351 + $0xa8] sm:$0xff]
          %v426 = vld [vmem:[%s351 + $0xb0] sm:$0xff]
          %v427 = vld [vmem:[%s351 + $0xb8] sm:$0xff]
          %v428 = vld [vmem:[%s351 + $0xc0] sm:$0xff]
          %v429 = vld [vmem:[%s351 + $0xc8] sm:$0xff]
          %v430 = vld [vmem:[%s351 + $0xd0] sm:$0xff]
          %v431 = vld [vmem:[%s351 + $0xd8] sm:$0xff]
          %v432 = vld [vmem:[%s351 + $0xe0] sm:$0xff]
          %v433 = vld [vmem:[%s351 + $0xe8] sm:$0xff]
          %v434 = vld [vmem:[%s351 + $0xf0] sm:$0xff]
          %v435 = vld [vmem:[%s351 + $0xf8] sm:$0xff]
          %v436 = vld [vmem:[%s351 + $0x100] sm:$0xff]
          %v437 = vld [vmem:[%s351 + $0x108] sm:$0xff]
          %v438 = vld [vmem:[%s351 + $0x110] sm:$0xff]
          %v439 = vld [vmem:[%s351 + $0x118] sm:$0xff]
          %v440 = vld [vmem:[%s351 + $0x120] sm:$0xff]
          %v441 = vld [vmem:[%s351 + $0x128] sm:$0xff]
          %v442 = vld [vmem:[%s351 + $0x130] sm:$0xff]
          %v443 = vld [vmem:[%s351 + $0x138] sm:$0xff]
          %v444 = vld [vmem:[%s351 + $0x140] sm:$0xff]
          %v445 = vld [vmem:[%s351 + $0x148] sm:$0xff]
          %v446 = vld [vmem:[%s351 + $0x150] sm:$0xff]
          %v447 = vld [vmem:[%s351 + $0x158] sm:$0xff]
          %v448 = vld [vmem:[%s351 + $0x160] sm:$0xff]
          %v449 = vld [vmem:[%s351 + $0x168] sm:$0xff]
          %v450 = vld [vmem:[%s351 + $0x170] sm:$0xff]
          %v451 = vld [vmem:[%s351 + $0x178] sm:$0xff]
          %v452 = vld [vmem:[%s351 + $0x180] sm:$0xff]
          %v453 = vld [vmem:[%s351 + $0x188] sm:$0xff]
          %v454 = vld [vmem:[%s351 + $0x190] sm:$0xff]
          %v455 = vld [vmem:[%s351 + $0x198] sm:$0xff]
          %v456 = vld [vmem:[%s351 + $0x1a0] sm:$0xff]
          %v457 = vld [vmem:[%s351 + $0x1a8] sm:$0xff]
          %v458 = vld [vmem:[%s351 + $0x1b0] sm:$0xff]
          %v459 = vld [vmem:[%s351 + $0x1b8] sm:$0xff]
          %v460 = vld [vmem:[%s351 + $0x1c0] sm:$0xff]
          %v461 = vld [vmem:[%s351 + $0x1c8] sm:$0xff]
          %v462 = vld [vmem:[%s351 + $0x1d0] sm:$0xff]
          %v463 = vld [vmem:[%s351 + $0x1d8] sm:$0xff]
          %v464 = vld [vmem:[%s351 + $0x1e0] sm:$0xff]
          %v465 = vld [vmem:[%s351 + $0x1e8] sm:$0xff]
          %v466 = vld [vmem:[%s351 + $0x1f0] sm:$0xff]
          %v467 = vld [vmem:[%s351 + $0x1f8] sm:$0xff]
          %v468 = vld [vmem:[%s351 + $0x200] sm:$0xff]
          %v469 = vld [vmem:[%s351 + $0x208] sm:$0xff]
          %v470 = vld [vmem:[%s351 + $0x210] sm:$0xff]
          %v471 = vld [vmem:[%s351 + $0x218] sm:$0xff]
          %v472 = vld [vmem:[%s351 + $0x220] sm:$0xff]
          %v473 = vld [vmem:[%s351 + $0x228] sm:$0xff]
          %v474 = vld [vmem:[%s351 + $0x230] sm:$0xff]
          %v475 = vld [vmem:[%s351 + $0x238] sm:$0xff]
          %v476 = vunpack.c.l.bf16 %v404
          %v477 = vunpack.c.h.bf16 %v404
          %v478 = vunpack.c.l.bf16 %v405
          %v479 = vunpack.c.h.bf16 %v405
          %v480 = vunpack.c.l.bf16 %v406
          %v481 = vunpack.c.h.bf16 %v406
          %v482 = vunpack.c.l.bf16 %v407
          %v483 = vunpack.c.h.bf16 %v407
          %v484 = vunpack.c.l.bf16 %v408
          %v485 = vunpack.c.h.bf16 %v408
          %v486 = vunpack.c.l.bf16 %v409
          %v487 = vunpack.c.h.bf16 %v409
          %v488 = vunpack.c.l.bf16 %v410
          %v489 = vunpack.c.h.bf16 %v410
          %v490 = vunpack.c.l.bf16 %v411
          %v491 = vunpack.c.h.bf16 %v411
          %v492 = vunpack.c.l.bf16 %v412
          %v493 = vunpack.c.h.bf16 %v412
          %v494 = vunpack.c.l.bf16 %v413
          %v495 = vunpack.c.h.bf16 %v413
          %v496 = vunpack.c.l.bf16 %v414
          %v497 = vunpack.c.h.bf16 %v414
          %v498 = vunpack.c.l.bf16 %v415
          %v499 = vunpack.c.h.bf16 %v415
          %v500 = vunpack.c.l.bf16 %v416
          %v501 = vunpack.c.h.bf16 %v416
          %v502 = vunpack.c.l.bf16 %v417
          %v503 = vunpack.c.h.bf16 %v417
          %v504 = vunpack.c.l.bf16 %v418
          %v505 = vunpack.c.h.bf16 %v418
          %v506 = vunpack.c.l.bf16 %v419
          %v507 = vunpack.c.h.bf16 %v419
          %v508 = vunpack.c.l.bf16 %v420
          %v509 = vunpack.c.h.bf16 %v420
          %v510 = vunpack.c.l.bf16 %v421
          %v511 = vunpack.c.h.bf16 %v421
          %v512 = vunpack.c.l.bf16 %v422
          %v513 = vunpack.c.h.bf16 %v422
          %v514 = vunpack.c.l.bf16 %v423
          %v515 = vunpack.c.h.bf16 %v423
          %v516 = vunpack.c.l.bf16 %v424
          %v517 = vunpack.c.h.bf16 %v424
          %v518 = vunpack.c.l.bf16 %v425
          %v519 = vunpack.c.h.bf16 %v425
          %v520 = vunpack.c.l.bf16 %v426
          %v521 = vunpack.c.h.bf16 %v426
          %v522 = vunpack.c.l.bf16 %v427
          %v523 = vunpack.c.h.bf16 %v427
          %v524 = vunpack.c.l.bf16 %v428
          %v525 = vunpack.c.h.bf16 %v428
          %v526 = vunpack.c.l.bf16 %v429
          %v527 = vunpack.c.h.bf16 %v429
          %v528 = vunpack.c.l.bf16 %v430
          %v529 = vunpack.c.h.bf16 %v430
          %v530 = vunpack.c.l.bf16 %v431
          %v531 = vunpack.c.h.bf16 %v431
          %v532 = vunpack.c.l.bf16 %v432
          %v533 = vunpack.c.h.bf16 %v432
          %v534 = vunpack.c.l.bf16 %v433
          %v535 = vunpack.c.h.bf16 %v433
          %v536 = vunpack.c.l.bf16 %v434
          %v537 = vunpack.c.h.bf16 %v434
          %v538 = vunpack.c.l.bf16 %v435
          %v539 = vunpack.c.h.bf16 %v435
          %v540 = vunpack.c.l.bf16 %v436
          %v541 = vunpack.c.h.bf16 %v436
          %v542 = vunpack.c.l.bf16 %v437
          %v543 = vunpack.c.h.bf16 %v437
          %v544 = vunpack.c.l.bf16 %v438
          %v545 = vunpack.c.h.bf16 %v438
          %v546 = vunpack.c.l.bf16 %v439
          %v547 = vunpack.c.h.bf16 %v439
          %v548 = vunpack.c.l.bf16 %v440
          %v549 = vunpack.c.h.bf16 %v440
          %v550 = vunpack.c.l.bf16 %v441
          %v551 = vunpack.c.h.bf16 %v441
          %v552 = vunpack.c.l.bf16 %v442
          %v553 = vunpack.c.h.bf16 %v442
          %v554 = vunpack.c.l.bf16 %v443
          %v555 = vunpack.c.h.bf16 %v443
          %v556 = vunpack.c.l.bf16 %v444
          %v557 = vunpack.c.h.bf16 %v444
          %v558 = vunpack.c.l.bf16 %v445
          %v559 = vunpack.c.h.bf16 %v445
          %v560 = vunpack.c.l.bf16 %v446
          %v561 = vunpack.c.h.bf16 %v446
          %v562 = vunpack.c.l.bf16 %v447
          %v563 = vunpack.c.h.bf16 %v447
          %v564 = vunpack.c.l.bf16 %v448
          %v565 = vunpack.c.h.bf16 %v448
          %v566 = vunpack.c.l.bf16 %v449
          %v567 = vunpack.c.h.bf16 %v449
          %v568 = vunpack.c.l.bf16 %v450
          %v569 = vunpack.c.h.bf16 %v450
          %v570 = vunpack.c.l.bf16 %v451
          %v571 = vunpack.c.h.bf16 %v451
          %v572 = vunpack.c.l.bf16 %v452
          %v573 = vunpack.c.h.bf16 %v452
          %v574 = vunpack.c.l.bf16 %v453
          %v575 = vunpack.c.h.bf16 %v453
          %v576 = vunpack.c.l.bf16 %v454
          %v577 = vunpack.c.h.bf16 %v454
          %v578 = vunpack.c.l.bf16 %v455
          %v579 = vunpack.c.h.bf16 %v455
          %v580 = vunpack.c.l.bf16 %v456
          %v581 = vunpack.c.h.bf16 %v456
          %v582 = vunpack.c.l.bf16 %v457
          %v583 = vunpack.c.h.bf16 %v457
          %v584 = vunpack.c.l.bf16 %v458
          %v585 = vunpack.c.h.bf16 %v458
          %v586 = vunpack.c.l.bf16 %v459
          %v587 = vunpack.c.h.bf16 %v459
          %v588 = vunpack.c.l.bf16 %v460
          %v589 = vunpack.c.h.bf16 %v460
          %v590 = vunpack.c.l.bf16 %v461
          %v591 = vunpack.c.h.bf16 %v461
          %v592 = vunpack.c.l.bf16 %v462
          %v593 = vunpack.c.h.bf16 %v462
          %v594 = vunpack.c.l.bf16 %v463
          %v595 = vunpack.c.h.bf16 %v463
          %v596 = vunpack.c.l.bf16 %v464
          %v597 = vunpack.c.h.bf16 %v464
          %v598 = vunpack.c.l.bf16 %v465
          %v599 = vunpack.c.h.bf16 %v465
          %v600 = vunpack.c.l.bf16 %v466
          %v601 = vunpack.c.h.bf16 %v466
          %v602 = vunpack.c.l.bf16 %v467
          %v603 = vunpack.c.h.bf16 %v467
          %v604 = vunpack.c.l.bf16 %v468
          %v605 = vunpack.c.h.bf16 %v468
          %v606 = vunpack.c.l.bf16 %v469
          %v607 = vunpack.c.h.bf16 %v469
          %v608 = vunpack.c.l.bf16 %v470
          %v609 = vunpack.c.h.bf16 %v470
          %v610 = vunpack.c.l.bf16 %v471
          %v611 = vunpack.c.h.bf16 %v471
          %v612 = vunpack.c.l.bf16 %v472
          %v613 = vunpack.c.h.bf16 %v472
          %v614 = vunpack.c.l.bf16 %v473
          %v615 = vunpack.c.h.bf16 %v473
          %v616 = vunpack.c.l.bf16 %v474
          %v617 = vunpack.c.h.bf16 %v474
          %v618 = vunpack.c.l.bf16 %v475
          %v619 = vunpack.c.h.bf16 %v475
          %v620 = vadd.f32 %v476, %v477
          %v621 = vadd.f32 %v620, %v478
          %v622 = vadd.f32 %v621, %v479
          %v623 = vadd.f32 %v622, %v480
          %v624 = vadd.f32 %v623, %v481
          %625 = vadd.xlane.f32.xlu0 %v624
          %v626 = vpop.xlane.xlu0 %625
          %v627 = vadd.f32 %v482, %v483
          %v628 = vadd.f32 %v627, %v484
          %v629 = vadd.f32 %v628, %v485
          %v630 = vadd.f32 %v629, %v486
          %v631 = vadd.f32 %v630, %v487
          %632 = vadd.xlane.f32.xlu0 %v631
          %v633 = vpop.xlane.xlu0 %632
          %v634 = vadd.f32 %v488, %v489
          %v635 = vadd.f32 %v634, %v490
          %v636 = vadd.f32 %v635, %v491
          %v637 = vadd.f32 %v636, %v492
          %v638 = vadd.f32 %v637, %v493
          %639 = vadd.xlane.f32.xlu0 %v638
          %v640 = vpop.xlane.xlu0 %639
          %v641 = vadd.f32 %v494, %v495
          %v642 = vadd.f32 %v641, %v496
          %v643 = vadd.f32 %v642, %v497
          %v644 = vadd.f32 %v643, %v498
          %v645 = vadd.f32 %v644, %v499
          %646 = vadd.xlane.f32.xlu0 %v645
          %v647 = vpop.xlane.xlu0 %646
          %v648 = vadd.f32 %v500, %v501
          %v649 = vadd.f32 %v648, %v502
          %v650 = vadd.f32 %v649, %v503
          %v651 = vadd.f32 %v650, %v504
          %v652 = vadd.f32 %v651, %v505
          %653 = vadd.xlane.f32.xlu0 %v652
          %v654 = vpop.xlane.xlu0 %653
          %v655 = vadd.f32 %v506, %v507
          %v656 = vadd.f32 %v655, %v508
          %v657 = vadd.f32 %v656, %v509
          %v658 = vadd.f32 %v657, %v510
          %v659 = vadd.f32 %v658, %v511
          %660 = vadd.xlane.f32.xlu0 %v659
          %v661 = vpop.xlane.xlu0 %660
          %v662 = vadd.f32 %v512, %v513
          %v663 = vadd.f32 %v662, %v514
          %v664 = vadd.f32 %v663, %v515
          %v665 = vadd.f32 %v664, %v516
          %v666 = vadd.f32 %v665, %v517
          %667 = vadd.xlane.f32.xlu0 %v666
          %v668 = vpop.xlane.xlu0 %667
          %v669 = vadd.f32 %v518, %v519
          %v670 = vadd.f32 %v669, %v520
          %v671 = vadd.f32 %v670, %v521
          %v672 = vadd.f32 %v671, %v522
          %v673 = vadd.f32 %v672, %v523
          %674 = vadd.xlane.f32.xlu0 %v673
          %v675 = vpop.xlane.xlu0 %674
          %v676 = vadd.f32 %v524, %v525
          %v677 = vadd.f32 %v676, %v526
          %v678 = vadd.f32 %v677, %v527
          %v679 = vadd.f32 %v678, %v528
          %v680 = vadd.f32 %v679, %v529
          %681 = vadd.xlane.f32.xlu0 %v680
          %v682 = vpop.xlane.xlu0 %681
          %v683 = vadd.f32 %v530, %v531
          %v684 = vadd.f32 %v683, %v532
          %v685 = vadd.f32 %v684, %v533
          %v686 = vadd.f32 %v685, %v534
          %v687 = vadd.f32 %v686, %v535
          %688 = vadd.xlane.f32.xlu0 %v687
          %v689 = vpop.xlane.xlu0 %688
          %v690 = vadd.f32 %v536, %v537
          %v691 = vadd.f32 %v690, %v538
          %v692 = vadd.f32 %v691, %v539
          %v693 = vadd.f32 %v692, %v540
          %v694 = vadd.f32 %v693, %v541
          %695 = vadd.xlane.f32.xlu0 %v694
          %v696 = vpop.xlane.xlu0 %695
          %v697 = vadd.f32 %v542, %v543
          %v698 = vadd.f32 %v697, %v544
          %v699 = vadd.f32 %v698, %v545
          %v700 = vadd.f32 %v699, %v546
          %v701 = vadd.f32 %v700, %v547
          %702 = vadd.xlane.f32.xlu0 %v701
          %v703 = vpop.xlane.xlu0 %702
          %v704 = vadd.f32 %v548, %v549
          %v705 = vadd.f32 %v704, %v550
          %v706 = vadd.f32 %v705, %v551
          %v707 = vadd.f32 %v706, %v552
          %v708 = vadd.f32 %v707, %v553
          %709 = vadd.xlane.f32.xlu0 %v708
          %v710 = vpop.xlane.xlu0 %709
          %v711 = vadd.f32 %v554, %v555
          %v712 = vadd.f32 %v711, %v556
          %v713 = vadd.f32 %v712, %v557
          %v714 = vadd.f32 %v713, %v558
          %v715 = vadd.f32 %v714, %v559
          %716 = vadd.xlane.f32.xlu0 %v715
          %v717 = vpop.xlane.xlu0 %716
          %v718 = vadd.f32 %v560, %v561
          %v719 = vadd.f32 %v718, %v562
          %v720 = vadd.f32 %v719, %v563
          %v721 = vadd.f32 %v720, %v564
          %v722 = vadd.f32 %v721, %v565
          %723 = vadd.xlane.f32.xlu0 %v722
          %v724 = vpop.xlane.xlu0 %723
          %v725 = vadd.f32 %v566, %v567
          %v726 = vadd.f32 %v725, %v568
          %v727 = vadd.f32 %v726, %v569
          %v728 = vadd.f32 %v727, %v570
          %v729 = vadd.f32 %v728, %v571
          %730 = vadd.xlane.f32.xlu0 %v729
          %v731 = vpop.xlane.xlu0 %730
          %v732 = vadd.f32 %v572, %v573
          %v733 = vadd.f32 %v732, %v574
          %v734 = vadd.f32 %v733, %v575
          %v735 = vadd.f32 %v734, %v576
          %v736 = vadd.f32 %v735, %v577
          %737 = vadd.xlane.f32.xlu0 %v736
          %v738 = vpop.xlane.xlu0 %737
          %v739 = vadd.f32 %v578, %v579
          %v740 = vadd.f32 %v739, %v580
          %v741 = vadd.f32 %v740, %v581
          %v742 = vadd.f32 %v741, %v582
          %v743 = vadd.f32 %v742, %v583
          %744 = vadd.xlane.f32.xlu0 %v743
          %v745 = vpop.xlane.xlu0 %744
          %v746 = vadd.f32 %v584, %v585
          %v747 = vadd.f32 %v746, %v586
          %v748 = vadd.f32 %v747, %v587
          %v749 = vadd.f32 %v748, %v588
          %v750 = vadd.f32 %v749, %v589
          %751 = vadd.xlane.f32.xlu0 %v750
          %v752 = vpop.xlane.xlu0 %751
          %v753 = vadd.f32 %v590, %v591
          %v754 = vadd.f32 %v753, %v592
          %v755 = vadd.f32 %v754, %v593
          %v756 = vadd.f32 %v755, %v594
          %v757 = vadd.f32 %v756, %v595
          %758 = vadd.xlane.f32.xlu0 %v757
          %v759 = vpop.xlane.xlu0 %758
          %v760 = vadd.f32 %v596, %v597
          %v761 = vadd.f32 %v760, %v598
          %v762 = vadd.f32 %v761, %v599
          %v763 = vadd.f32 %v762, %v600
          %v764 = vadd.f32 %v763, %v601
          %765 = vadd.xlane.f32.xlu0 %v764
          %v766 = vpop.xlane.xlu0 %765
          %v767 = vadd.f32 %v602, %v603
          %v768 = vadd.f32 %v767, %v604
          %v769 = vadd.f32 %v768, %v605
          %v770 = vadd.f32 %v769, %v606
          %v771 = vadd.f32 %v770, %v607
          %772 = vadd.xlane.f32.xlu0 %v771
          %v773 = vpop.xlane.xlu0 %772
          %v774 = vadd.f32 %v608, %v609
          %v775 = vadd.f32 %v774, %v610
          %v776 = vadd.f32 %v775, %v611
          %v777 = vadd.f32 %v776, %v612
          %v778 = vadd.f32 %v777, %v613
          %779 = vadd.xlane.f32.xlu0 %v778
          %v780 = vpop.xlane.xlu0 %779
          %v781 = vadd.f32 %v614, %v615
          %v782 = vadd.f32 %v781, %v616
          %v783 = vadd.f32 %v782, %v617
          %v784 = vadd.f32 %v783, %v618
          %v785 = vadd.f32 %v784, %v619
          %786 = vadd.xlane.f32.xlu0 %v785
          %v787 = vpop.xlane.xlu0 %786
          %v788 = vmul.f32 %v476, %v476
          %v789 = vmul.f32 %v477, %v477
          %v790 = vmul.f32 %v478, %v478
          %v791 = vmul.f32 %v479, %v479
          %v792 = vmul.f32 %v480, %v480
          %v793 = vmul.f32 %v481, %v481
          %v794 = vmul.f32 %v482, %v482
          %v795 = vmul.f32 %v483, %v483
          %v796 = vmul.f32 %v484, %v484
          %v797 = vmul.f32 %v485, %v485
          %v798 = vmul.f32 %v486, %v486
          %v799 = vmul.f32 %v487, %v487
          %v800 = vmul.f32 %v488, %v488
          %v801 = vmul.f32 %v489, %v489
          %v802 = vmul.f32 %v490, %v490
          %v803 = vmul.f32 %v491, %v491
          %v804 = vmul.f32 %v492, %v492
          %v805 = vmul.f32 %v493, %v493
          %v806 = vmul.f32 %v494, %v494
          %v807 = vmul.f32 %v495, %v495
          %v808 = vmul.f32 %v496, %v496
          %v809 = vmul.f32 %v497, %v497
          %v810 = vmul.f32 %v498, %v498
          %v811 = vmul.f32 %v499, %v499
          %v812 = vmul.f32 %v500, %v500
          %v813 = vmul.f32 %v501, %v501
          %v814 = vmul.f32 %v502, %v502
          %v815 = vmul.f32 %v503, %v503
          %v816 = vmul.f32 %v504, %v504
          %v817 = vmul.f32 %v505, %v505
          %v818 = vmul.f32 %v506, %v506
          %v819 = vmul.f32 %v507, %v507
          %v820 = vmul.f32 %v508, %v508
          %v821 = vmul.f32 %v509, %v509
          %v822 = vmul.f32 %v510, %v510
          %v823 = vmul.f32 %v511, %v511
          %v824 = vmul.f32 %v512, %v512
          %v825 = vmul.f32 %v513, %v513
          %v826 = vmul.f32 %v514, %v514
          %v827 = vmul.f32 %v515, %v515
          %v828 = vmul.f32 %v516, %v516
          %v829 = vmul.f32 %v517, %v517
          %v830 = vmul.f32 %v518, %v518
          %v831 = vmul.f32 %v519, %v519
          %v832 = vmul.f32 %v520, %v520
          %v833 = vmul.f32 %v521, %v521
          %v834 = vmul.f32 %v522, %v522
          %v835 = vmul.f32 %v523, %v523
          %v836 = vmul.f32 %v524, %v524
          %v837 = vmul.f32 %v525, %v525
          %v838 = vmul.f32 %v526, %v526
          %v839 = vmul.f32 %v527, %v527
          %v840 = vmul.f32 %v528, %v528
          %v841 = vmul.f32 %v529, %v529
          %v842 = vmul.f32 %v530, %v530
          %v843 = vmul.f32 %v531, %v531
          %v844 = vmul.f32 %v532, %v532
          %v845 = vmul.f32 %v533, %v533
          %v846 = vmul.f32 %v534, %v534
          %v847 = vmul.f32 %v535, %v535
          %v848 = vmul.f32 %v536, %v536
          %v849 = vmul.f32 %v537, %v537
          %v850 = vmul.f32 %v538, %v538
          %v851 = vmul.f32 %v539, %v539
          %v852 = vmul.f32 %v540, %v540
          %v853 = vmul.f32 %v541, %v541
          %v854 = vmul.f32 %v542, %v542
          %v855 = vmul.f32 %v543, %v543
          %v856 = vmul.f32 %v544, %v544
          %v857 = vmul.f32 %v545, %v545
          %v858 = vmul.f32 %v546, %v546
          %v859 = vmul.f32 %v547, %v547
          %v860 = vmul.f32 %v548, %v548
          %v861 = vmul.f32 %v549, %v549
          %v862 = vmul.f32 %v550, %v550
          %v863 = vmul.f32 %v551, %v551
          %v864 = vmul.f32 %v552, %v552
          %v865 = vmul.f32 %v553, %v553
          %v866 = vmul.f32 %v554, %v554
          %v867 = vmul.f32 %v555, %v555
          %v868 = vmul.f32 %v556, %v556
          %v869 = vmul.f32 %v557, %v557
          %v870 = vmul.f32 %v558, %v558
          %v871 = vmul.f32 %v559, %v559
          %v872 = vmul.f32 %v560, %v560
          %v873 = vmul.f32 %v561, %v561
          %v874 = vmul.f32 %v562, %v562
          %v875 = vmul.f32 %v563, %v563
          %v876 = vmul.f32 %v564, %v564
          %v877 = vmul.f32 %v565, %v565
          %v878 = vmul.f32 %v566, %v566
          %v879 = vmul.f32 %v567, %v567
          %v880 = vmul.f32 %v568, %v568
          %v881 = vmul.f32 %v569, %v569
          %v882 = vmul.f32 %v570, %v570
          %v883 = vmul.f32 %v571, %v571
          %v884 = vmul.f32 %v572, %v572
          %v885 = vmul.f32 %v573, %v573
          %v886 = vmul.f32 %v574, %v574
          %v887 = vmul.f32 %v575, %v575
          %v888 = vmul.f32 %v576, %v576
          %v889 = vmul.f32 %v577, %v577
          %v890 = vmul.f32 %v578, %v578
          %v891 = vmul.f32 %v579, %v579
          %v892 = vmul.f32 %v580, %v580
          %v893 = vmul.f32 %v581, %v581
          %v894 = vmul.f32 %v582, %v582
          %v895 = vmul.f32 %v583, %v583
          %v896 = vmul.f32 %v584, %v584
          %v897 = vmul.f32 %v585, %v585
          %v898 = vmul.f32 %v586, %v586
          %v899 = vmul.f32 %v587, %v587
          %v900 = vmul.f32 %v588, %v588
          %v901 = vmul.f32 %v589, %v589
          %v902 = vmul.f32 %v590, %v590
          %v903 = vmul.f32 %v591, %v591
          %v904 = vmul.f32 %v592, %v592
          %v905 = vmul.f32 %v593, %v593
          %v906 = vmul.f32 %v594, %v594
          %v907 = vmul.f32 %v595, %v595
          %v908 = vmul.f32 %v596, %v596
          %v909 = vmul.f32 %v597, %v597
          %v910 = vmul.f32 %v598, %v598
          %v911 = vmul.f32 %v599, %v599
          %v912 = vmul.f32 %v600, %v600
          %v913 = vmul.f32 %v601, %v601
          %v914 = vmul.f32 %v602, %v602
          %v915 = vmul.f32 %v603, %v603
          %v916 = vmul.f32 %v604, %v604
          %v917 = vmul.f32 %v605, %v605
          %v918 = vmul.f32 %v606, %v606
          %v919 = vmul.f32 %v607, %v607
          %v920 = vmul.f32 %v608, %v608
          %v921 = vmul.f32 %v609, %v609
          %v922 = vmul.f32 %v610, %v610
          %v923 = vmul.f32 %v611, %v611
          %v924 = vmul.f32 %v612, %v612
          %v925 = vmul.f32 %v613, %v613
          %v926 = vmul.f32 %v614, %v614
          %v927 = vmul.f32 %v615, %v615
          %v928 = vmul.f32 %v616, %v616
          %v929 = vmul.f32 %v617, %v617
          %v930 = vmul.f32 %v618, %v618
          %v931 = vmul.f32 %v619, %v619
          %v932 = vadd.f32 %v788, %v789
          %v933 = vadd.f32 %v932, %v790
          %v934 = vadd.f32 %v933, %v791
          %v935 = vadd.f32 %v934, %v792
          %v936 = vadd.f32 %v935, %v793
          %937 = vadd.xlane.f32.xlu0 %v936
          %v938 = vpop.xlane.xlu0 %937
          %v939 = vadd.f32 %v794, %v795
          %v940 = vadd.f32 %v939, %v796
          %v941 = vadd.f32 %v940, %v797
          %v942 = vadd.f32 %v941, %v798
          %v943 = vadd.f32 %v942, %v799
          %944 = vadd.xlane.f32.xlu0 %v943
          %v945 = vpop.xlane.xlu0 %944
          %v946 = vadd.f32 %v800, %v801
          %v947 = vadd.f32 %v946, %v802
          %v948 = vadd.f32 %v947, %v803
          %v949 = vadd.f32 %v948, %v804
          %v950 = vadd.f32 %v949, %v805
          %951 = vadd.xlane.f32.xlu0 %v950
          %v952 = vpop.xlane.xlu0 %951
          %v953 = vadd.f32 %v806, %v807
          %v954 = vadd.f32 %v953, %v808
          %v955 = vadd.f32 %v954, %v809
          %v956 = vadd.f32 %v955, %v810
          %v957 = vadd.f32 %v956, %v811
          %958 = vadd.xlane.f32.xlu0 %v957
          %v959 = vpop.xlane.xlu0 %958
          %v960 = vadd.f32 %v812, %v813
          %v961 = vadd.f32 %v960, %v814
          %v962 = vadd.f32 %v961, %v815
          %v963 = vadd.f32 %v962, %v816
          %v964 = vadd.f32 %v963, %v817
          %965 = vadd.xlane.f32.xlu0 %v964
          %v966 = vpop.xlane.xlu0 %965
          %v967 = vadd.f32 %v818, %v819
          %v968 = vadd.f32 %v967, %v820
          %v969 = vadd.f32 %v968, %v821
          %v970 = vadd.f32 %v969, %v822
          %v971 = vadd.f32 %v970, %v823
          %972 = vadd.xlane.f32.xlu0 %v971
          %v973 = vpop.xlane.xlu0 %972
          %v974 = vadd.f32 %v824, %v825
          %v975 = vadd.f32 %v974, %v826
          %v976 = vadd.f32 %v975, %v827
          %v977 = vadd.f32 %v976, %v828
          %v978 = vadd.f32 %v977, %v829
          %979 = vadd.xlane.f32.xlu0 %v978
          %v980 = vpop.xlane.xlu0 %979
          %v981 = vadd.f32 %v830, %v831
          %v982 = vadd.f32 %v981, %v832
          %v983 = vadd.f32 %v982, %v833
          %v984 = vadd.f32 %v983, %v834
          %v985 = vadd.f32 %v984, %v835
          %986 = vadd.xlane.f32.xlu0 %v985
          %v987 = vpop.xlane.xlu0 %986
          %v988 = vadd.f32 %v836, %v837
          %v989 = vadd.f32 %v988, %v838
          %v990 = vadd.f32 %v989, %v839
          %v991 = vadd.f32 %v990, %v840
          %v992 = vadd.f32 %v991, %v841
          %993 = vadd.xlane.f32.xlu0 %v992
          %v994 = vpop.xlane.xlu0 %993
          %v995 = vadd.f32 %v842, %v843
          %v996 = vadd.f32 %v995, %v844
          %v997 = vadd.f32 %v996, %v845
          %v998 = vadd.f32 %v997, %v846
          %v999 = vadd.f32 %v998, %v847
          %1000 = vadd.xlane.f32.xlu0 %v999
          %v1001 = vpop.xlane.xlu0 %1000
          %v1002 = vadd.f32 %v848, %v849
          %v1003 = vadd.f32 %v1002, %v850
          %v1004 = vadd.f32 %v1003, %v851
          %v1005 = vadd.f32 %v1004, %v852
          %v1006 = vadd.f32 %v1005, %v853
          %1007 = vadd.xlane.f32.xlu0 %v1006
          %v1008 = vpop.xlane.xlu0 %1007
          %v1009 = vadd.f32 %v854, %v855
          %v1010 = vadd.f32 %v1009, %v856
          %v1011 = vadd.f32 %v1010, %v857
          %v1012 = vadd.f32 %v1011, %v858
          %v1013 = vadd.f32 %v1012, %v859
          %1014 = vadd.xlane.f32.xlu0 %v1013
          %v1015 = vpop.xlane.xlu0 %1014
          %v1016 = vadd.f32 %v860, %v861
          %v1017 = vadd.f32 %v1016, %v862
          %v1018 = vadd.f32 %v1017, %v863
          %v1019 = vadd.f32 %v1018, %v864
          %v1020 = vadd.f32 %v1019, %v865
          %1021 = vadd.xlane.f32.xlu0 %v1020
          %v1022 = vpop.xlane.xlu0 %1021
          %v1023 = vadd.f32 %v866, %v867
          %v1024 = vadd.f32 %v1023, %v868
          %v1025 = vadd.f32 %v1024, %v869
          %v1026 = vadd.f32 %v1025, %v870
          %v1027 = vadd.f32 %v1026, %v871
          %1028 = vadd.xlane.f32.xlu0 %v1027
          %v1029 = vpop.xlane.xlu0 %1028
          %v1030 = vadd.f32 %v872, %v873
          %v1031 = vadd.f32 %v1030, %v874
          %v1032 = vadd.f32 %v1031, %v875
          %v1033 = vadd.f32 %v1032, %v876
          %v1034 = vadd.f32 %v1033, %v877
          %1035 = vadd.xlane.f32.xlu0 %v1034
          %v1036 = vpop.xlane.xlu0 %1035
          %v1037 = vadd.f32 %v878, %v879
          %v1038 = vadd.f32 %v1037, %v880
          %v1039 = vadd.f32 %v1038, %v881
          %v1040 = vadd.f32 %v1039, %v882
          %v1041 = vadd.f32 %v1040, %v883
          %1042 = vadd.xlane.f32.xlu0 %v1041
          %v1043 = vpop.xlane.xlu0 %1042
          %v1044 = vadd.f32 %v884, %v885
          %v1045 = vadd.f32 %v1044, %v886
          %v1046 = vadd.f32 %v1045, %v887
          %v1047 = vadd.f32 %v1046, %v888
          %v1048 = vadd.f32 %v1047, %v889
          %1049 = vadd.xlane.f32.xlu0 %v1048
          %v1050 = vpop.xlane.xlu0 %1049
          %v1051 = vadd.f32 %v890, %v891
          %v1052 = vadd.f32 %v1051, %v892
          %v1053 = vadd.f32 %v1052, %v893
          %v1054 = vadd.f32 %v1053, %v894
          %v1055 = vadd.f32 %v1054, %v895
          %1056 = vadd.xlane.f32.xlu0 %v1055
          %v1057 = vpop.xlane.xlu0 %1056
          %v1058 = vadd.f32 %v896, %v897
          %v1059 = vadd.f32 %v1058, %v898
          %v1060 = vadd.f32 %v1059, %v899
          %v1061 = vadd.f32 %v1060, %v900
          %v1062 = vadd.f32 %v1061, %v901
          %1063 = vadd.xlane.f32.xlu0 %v1062
          %v1064 = vpop.xlane.xlu0 %1063
          %v1065 = vadd.f32 %v902, %v903
          %v1066 = vadd.f32 %v1065, %v904
          %v1067 = vadd.f32 %v1066, %v905
          %v1068 = vadd.f32 %v1067, %v906
          %v1069 = vadd.f32 %v1068, %v907
          %1070 = vadd.xlane.f32.xlu0 %v1069
          %v1071 = vpop.xlane.xlu0 %1070
          %v1072 = vadd.f32 %v908, %v909
          %v1073 = vadd.f32 %v1072, %v910
          %v1074 = vadd.f32 %v1073, %v911
          %v1075 = vadd.f32 %v1074, %v912
          %v1076 = vadd.f32 %v1075, %v913
          %1077 = vadd.xlane.f32.xlu0 %v1076
          %v1078 = vpop.xlane.xlu0 %1077
          %v1079 = vadd.f32 %v914, %v915
          %v1080 = vadd.f32 %v1079, %v916
          %v1081 = vadd.f32 %v1080, %v917
          %v1082 = vadd.f32 %v1081, %v918
          %v1083 = vadd.f32 %v1082, %v919
          %1084 = vadd.xlane.f32.xlu0 %v1083
          %v1085 = vpop.xlane.xlu0 %1084
          %v1086 = vadd.f32 %v920, %v921
          %v1087 = vadd.f32 %v1086, %v922
          %v1088 = vadd.f32 %v1087, %v923
          %v1089 = vadd.f32 %v1088, %v924
          %v1090 = vadd.f32 %v1089, %v925
          %1091 = vadd.xlane.f32.xlu0 %v1090
          %v1092 = vpop.xlane.xlu0 %1091
          %v1093 = vadd.f32 %v926, %v927
          %v1094 = vadd.f32 %v1093, %v928
          %v1095 = vadd.f32 %v1094, %v929
          %v1096 = vadd.f32 %v1095, %v930
          %v1097 = vadd.f32 %v1096, %v931
          %1098 = vadd.xlane.f32.xlu0 %v1097
          %v1099 = vpop.xlane.xlu0 %1098
          %v1100 = vmul.f32 %v626, 0.0013020834
          %v1101 = vmul.f32 %v633, 0.0013020834
          %v1102 = vmul.f32 %v640, 0.0013020834
          %v1103 = vmul.f32 %v647, 0.0013020834
          %v1104 = vmul.f32 %v654, 0.0013020834
          %v1105 = vmul.f32 %v661, 0.0013020834
          %v1106 = vmul.f32 %v668, 0.0013020834
          %v1107 = vmul.f32 %v675, 0.0013020834
          %v1108 = vmul.f32 %v682, 0.0013020834
          %v1109 = vmul.f32 %v689, 0.0013020834
          %v1110 = vmul.f32 %v696, 0.0013020834
          %v1111 = vmul.f32 %v703, 0.0013020834
          %v1112 = vmul.f32 %v710, 0.0013020834
          %v1113 = vmul.f32 %v717, 0.0013020834
          %v1114 = vmul.f32 %v724, 0.0013020834
          %v1115 = vmul.f32 %v731, 0.0013020834
          %v1116 = vmul.f32 %v738, 0.0013020834
          %v1117 = vmul.f32 %v745, 0.0013020834
          %v1118 = vmul.f32 %v752, 0.0013020834
          %v1119 = vmul.f32 %v759, 0.0013020834
          %v1120 = vmul.f32 %v766, 0.0013020834
          %v1121 = vmul.f32 %v773, 0.0013020834
          %v1122 = vmul.f32 %v780, 0.0013020834
          %v1123 = vmul.f32 %v787, 0.0013020834
          %v1124 = vmul.f32 %v938, 0.0013020834
          %v1125 = vmul.f32 %v945, 0.0013020834
          %v1126 = vmul.f32 %v952, 0.0013020834
          %v1127 = vmul.f32 %v959, 0.0013020834
          %v1128 = vmul.f32 %v966, 0.0013020834
          %v1129 = vmul.f32 %v973, 0.0013020834
          %v1130 = vmul.f32 %v980, 0.0013020834
          %v1131 = vmul.f32 %v987, 0.0013020834
          %v1132 = vmul.f32 %v994, 0.0013020834
          %v1133 = vmul.f32 %v1001, 0.0013020834
          %v1134 = vmul.f32 %v1008, 0.0013020834
          %v1135 = vmul.f32 %v1015, 0.0013020834
          %v1136 = vmul.f32 %v1022, 0.0013020834
          %v1137 = vmul.f32 %v1029, 0.0013020834
          %v1138 = vmul.f32 %v1036, 0.0013020834
          %v1139 = vmul.f32 %v1043, 0.0013020834
          %v1140 = vmul.f32 %v1050, 0.0013020834
          %v1141 = vmul.f32 %v1057, 0.0013020834
          %v1142 = vmul.f32 %v1064, 0.0013020834
          %v1143 = vmul.f32 %v1071, 0.0013020834
          %v1144 = vmul.f32 %v1078, 0.0013020834
          %v1145 = vmul.f32 %v1085, 0.0013020834
          %v1146 = vmul.f32 %v1092, 0.0013020834
          %v1147 = vmul.f32 %v1099, 0.0013020834
          %v1148 = vmul.f32 %v1100, %v1100
          %v1149 = vmul.f32 %v1101, %v1101
          %v1150 = vmul.f32 %v1102, %v1102
          %v1151 = vmul.f32 %v1103, %v1103
          %v1152 = vmul.f32 %v1104, %v1104
          %v1153 = vmul.f32 %v1105, %v1105
          %v1154 = vmul.f32 %v1106, %v1106
          %v1155 = vmul.f32 %v1107, %v1107
          %v1156 = vmul.f32 %v1108, %v1108
          %v1157 = vmul.f32 %v1109, %v1109
          %v1158 = vmul.f32 %v1110, %v1110
          %v1159 = vmul.f32 %v1111, %v1111
          %v1160 = vmul.f32 %v1112, %v1112
          %v1161 = vmul.f32 %v1113, %v1113
          %v1162 = vmul.f32 %v1114, %v1114
          %v1163 = vmul.f32 %v1115, %v1115
          %v1164 = vmul.f32 %v1116, %v1116
          %v1165 = vmul.f32 %v1117, %v1117
          %v1166 = vmul.f32 %v1118, %v1118
          %v1167 = vmul.f32 %v1119, %v1119
          %v1168 = vmul.f32 %v1120, %v1120
          %v1169 = vmul.f32 %v1121, %v1121
          %v1170 = vmul.f32 %v1122, %v1122
          %v1171 = vmul.f32 %v1123, %v1123
          %v1172 = vsub.f32 %v1124, %v1148
          %v1173 = vsub.f32 %v1125, %v1149
          %v1174 = vsub.f32 %v1126, %v1150
          %v1175 = vsub.f32 %v1127, %v1151
          %v1176 = vsub.f32 %v1128, %v1152
          %v1177 = vsub.f32 %v1129, %v1153
          %v1178 = vsub.f32 %v1130, %v1154
          %v1179 = vsub.f32 %v1131, %v1155
          %v1180 = vsub.f32 %v1132, %v1156
          %v1181 = vsub.f32 %v1133, %v1157
          %v1182 = vsub.f32 %v1134, %v1158
          %v1183 = vsub.f32 %v1135, %v1159
          %v1184 = vsub.f32 %v1136, %v1160
          %v1185 = vsub.f32 %v1137, %v1161
          %v1186 = vsub.f32 %v1138, %v1162
          %v1187 = vsub.f32 %v1139, %v1163
          %v1188 = vsub.f32 %v1140, %v1164
          %v1189 = vsub.f32 %v1141, %v1165
          %v1190 = vsub.f32 %v1142, %v1166
          %v1191 = vsub.f32 %v1143, %v1167
          %v1192 = vsub.f32 %v1144, %v1168
          %v1193 = vsub.f32 %v1145, %v1169
          %v1194 = vsub.f32 %v1146, %v1170
          %v1195 = vsub.f32 %v1147, %v1171
          %v1196 = vsub.f32 %v476, %v1100
          %v1197 = vsub.f32 %v477, %v1100
          %v1198 = vsub.f32 %v478, %v1100
          %v1199 = vsub.f32 %v479, %v1100
          %v1200 = vsub.f32 %v480, %v1100
          %v1201 = vsub.f32 %v481, %v1100
          %v1202 = vsub.f32 %v482, %v1101
          %v1203 = vsub.f32 %v483, %v1101
          %v1204 = vsub.f32 %v484, %v1101
          %v1205 = vsub.f32 %v485, %v1101
          %v1206 = vsub.f32 %v486, %v1101
          %v1207 = vsub.f32 %v487, %v1101
          %v1208 = vsub.f32 %v488, %v1102
          %v1209 = vsub.f32 %v489, %v1102
          %v1210 = vsub.f32 %v490, %v1102
          %v1211 = vsub.f32 %v491, %v1102
          %v1212 = vsub.f32 %v492, %v1102
          %v1213 = vsub.f32 %v493, %v1102
          %v1214 = vsub.f32 %v494, %v1103
          %v1215 = vsub.f32 %v495, %v1103
          %v1216 = vsub.f32 %v496, %v1103
          %v1217 = vsub.f32 %v497, %v1103
          %v1218 = vsub.f32 %v498, %v1103
          %v1219 = vsub.f32 %v499, %v1103
          %v1220 = vsub.f32 %v500, %v1104
          %v1221 = vsub.f32 %v501, %v1104
          %v1222 = vsub.f32 %v502, %v1104
          %v1223 = vsub.f32 %v503, %v1104
          %v1224 = vsub.f32 %v504, %v1104
          %v1225 = vsub.f32 %v505, %v1104
          %v1226 = vsub.f32 %v506, %v1105
          %v1227 = vsub.f32 %v507, %v1105
          %v1228 = vsub.f32 %v508, %v1105
          %v1229 = vsub.f32 %v509, %v1105
          %v1230 = vsub.f32 %v510, %v1105
          %v1231 = vsub.f32 %v511, %v1105
          %v1232 = vsub.f32 %v512, %v1106
          %v1233 = vsub.f32 %v513, %v1106
          %v1234 = vsub.f32 %v514, %v1106
          %v1235 = vsub.f32 %v515, %v1106
          %v1236 = vsub.f32 %v516, %v1106
          %v1237 = vsub.f32 %v517, %v1106
          %v1238 = vsub.f32 %v518, %v1107
          %v1239 = vsub.f32 %v519, %v1107
          %v1240 = vsub.f32 %v520, %v1107
          %v1241 = vsub.f32 %v521, %v1107
          %v1242 = vsub.f32 %v522, %v1107
          %v1243 = vsub.f32 %v523, %v1107
          %v1244 = vsub.f32 %v524, %v1108
          %v1245 = vsub.f32 %v525, %v1108
          %v1246 = vsub.f32 %v526, %v1108
          %v1247 = vsub.f32 %v527, %v1108
          %v1248 = vsub.f32 %v528, %v1108
          %v1249 = vsub.f32 %v529, %v1108
          %v1250 = vsub.f32 %v530, %v1109
          %v1251 = vsub.f32 %v531, %v1109
          %v1252 = vsub.f32 %v532, %v1109
          %v1253 = vsub.f32 %v533, %v1109
          %v1254 = vsub.f32 %v534, %v1109
          %v1255 = vsub.f32 %v535, %v1109
          %v1256 = vsub.f32 %v536, %v1110
          %v1257 = vsub.f32 %v537, %v1110
          %v1258 = vsub.f32 %v538, %v1110
          %v1259 = vsub.f32 %v539, %v1110
          %v1260 = vsub.f32 %v540, %v1110
          %v1261 = vsub.f32 %v541, %v1110
          %v1262 = vsub.f32 %v542, %v1111
          %v1263 = vsub.f32 %v543, %v1111
          %v1264 = vsub.f32 %v544, %v1111
          %v1265 = vsub.f32 %v545, %v1111
          %v1266 = vsub.f32 %v546, %v1111
          %v1267 = vsub.f32 %v547, %v1111
          %v1268 = vsub.f32 %v548, %v1112
          %v1269 = vsub.f32 %v549, %v1112
          %v1270 = vsub.f32 %v550, %v1112
          %v1271 = vsub.f32 %v551, %v1112
          %v1272 = vsub.f32 %v552, %v1112
          %v1273 = vsub.f32 %v553, %v1112
          %v1274 = vsub.f32 %v554, %v1113
          %v1275 = vsub.f32 %v555, %v1113
          %v1276 = vsub.f32 %v556, %v1113
          %v1277 = vsub.f32 %v557, %v1113
          %v1278 = vsub.f32 %v558, %v1113
          %v1279 = vsub.f32 %v559, %v1113
          %v1280 = vsub.f32 %v560, %v1114
          %v1281 = vsub.f32 %v561, %v1114
          %v1282 = vsub.f32 %v562, %v1114
          %v1283 = vsub.f32 %v563, %v1114
          %v1284 = vsub.f32 %v564, %v1114
          %v1285 = vsub.f32 %v565, %v1114
          %v1286 = vsub.f32 %v566, %v1115
          %v1287 = vsub.f32 %v567, %v1115
          %v1288 = vsub.f32 %v568, %v1115
          %v1289 = vsub.f32 %v569, %v1115
          %v1290 = vsub.f32 %v570, %v1115
          %v1291 = vsub.f32 %v571, %v1115
          %v1292 = vsub.f32 %v572, %v1116
          %v1293 = vsub.f32 %v573, %v1116
          %v1294 = vsub.f32 %v574, %v1116
          %v1295 = vsub.f32 %v575, %v1116
          %v1296 = vsub.f32 %v576, %v1116
          %v1297 = vsub.f32 %v577, %v1116
          %v1298 = vsub.f32 %v578, %v1117
          %v1299 = vsub.f32 %v579, %v1117
          %v1300 = vsub.f32 %v580, %v1117
          %v1301 = vsub.f32 %v581, %v1117
          %v1302 = vsub.f32 %v582, %v1117
          %v1303 = vsub.f32 %v583, %v1117
          %v1304 = vsub.f32 %v584, %v1118
          %v1305 = vsub.f32 %v585, %v1118
          %v1306 = vsub.f32 %v586, %v1118
          %v1307 = vsub.f32 %v587, %v1118
          %v1308 = vsub.f32 %v588, %v1118
          %v1309 = vsub.f32 %v589, %v1118
          %v1310 = vsub.f32 %v590, %v1119
          %v1311 = vsub.f32 %v591, %v1119
          %v1312 = vsub.f32 %v592, %v1119
          %v1313 = vsub.f32 %v593, %v1119
          %v1314 = vsub.f32 %v594, %v1119
          %v1315 = vsub.f32 %v595, %v1119
          %v1316 = vsub.f32 %v596, %v1120
          %v1317 = vsub.f32 %v597, %v1120
          %v1318 = vsub.f32 %v598, %v1120
          %v1319 = vsub.f32 %v599, %v1120
          %v1320 = vsub.f32 %v600, %v1120
          %v1321 = vsub.f32 %v601, %v1120
          %v1322 = vsub.f32 %v602, %v1121
          %v1323 = vsub.f32 %v603, %v1121
          %v1324 = vsub.f32 %v604, %v1121
          %v1325 = vsub.f32 %v605, %v1121
          %v1326 = vsub.f32 %v606, %v1121
          %v1327 = vsub.f32 %v607, %v1121
          %v1328 = vsub.f32 %v608, %v1122
          %v1329 = vsub.f32 %v609, %v1122
          %v1330 = vsub.f32 %v610, %v1122
          %v1331 = vsub.f32 %v611, %v1122
          %v1332 = vsub.f32 %v612, %v1122
          %v1333 = vsub.f32 %v613, %v1122
          %v1334 = vsub.f32 %v614, %v1123
          %v1335 = vsub.f32 %v615, %v1123
          %v1336 = vsub.f32 %v616, %v1123
          %v1337 = vsub.f32 %v617, %v1123
          %v1338 = vsub.f32 %v618, %v1123
          %v1339 = vsub.f32 %v619, %v1123
          %v1340 = vadd.f32 %v1172, 1e-12
          %v1341 = vadd.f32 %v1173, 1e-12
          %v1342 = vadd.f32 %v1174, 1e-12
          %v1343 = vadd.f32 %v1175, 1e-12
          %v1344 = vadd.f32 %v1176, 1e-12
          %v1345 = vadd.f32 %v1177, 1e-12
          %v1346 = vadd.f32 %v1178, 1e-12
          %v1347 = vadd.f32 %v1179, 1e-12
          %v1348 = vadd.f32 %v1180, 1e-12
          %v1349 = vadd.f32 %v1181, 1e-12
          %v1350 = vadd.f32 %v1182, 1e-12
          %v1351 = vadd.f32 %v1183, 1e-12
          %v1352 = vadd.f32 %v1184, 1e-12
          %v1353 = vadd.f32 %v1185, 1e-12
          %v1354 = vadd.f32 %v1186, 1e-12
          %v1355 = vadd.f32 %v1187, 1e-12
          %v1356 = vadd.f32 %v1188, 1e-12
          %v1357 = vadd.f32 %v1189, 1e-12
          %v1358 = vadd.f32 %v1190, 1e-12
          %v1359 = vadd.f32 %v1191, 1e-12
          %v1360 = vadd.f32 %v1192, 1e-12
          %v1361 = vadd.f32 %v1193, 1e-12
          %v1362 = vadd.f32 %v1194, 1e-12
          %v1363 = vadd.f32 %v1195, 1e-12
          %v1364 = vrsqrt.pop %v1340
          %v1365 = vrsqrt.pop %v1341
          %v1366 = vrsqrt.pop %v1342
          %v1367 = vrsqrt.pop %v1343
          %v1368 = vrsqrt.pop %v1344
          %v1369 = vrsqrt.pop %v1345
          %v1370 = vrsqrt.pop %v1346
          %v1371 = vrsqrt.pop %v1347
          %v1372 = vrsqrt.pop %v1348
          %v1373 = vrsqrt.pop %v1349
          %v1374 = vrsqrt.pop %v1350
          %v1375 = vrsqrt.pop %v1351
          %v1376 = vrsqrt.pop %v1352
          %v1377 = vrsqrt.pop %v1353
          %v1378 = vrsqrt.pop %v1354
          %v1379 = vrsqrt.pop %v1355
          %v1380 = vrsqrt.pop %v1356
          %v1381 = vrsqrt.pop %v1357
          %v1382 = vrsqrt.pop %v1358
          %v1383 = vrsqrt.pop %v1359
          %v1384 = vrsqrt.pop %v1360
          %v1385 = vrsqrt.pop %v1361
          %v1386 = vrsqrt.pop %v1362
          %v1387 = vrsqrt.pop %v1363
          %v1388 = vmul.f32 %v1196, %v1364
          %v1389 = vmul.f32 %v1197, %v1364
          %v1390 = vmul.f32 %v1198, %v1364
          %v1391 = vmul.f32 %v1199, %v1364
          %v1392 = vmul.f32 %v1200, %v1364
          %v1393 = vmul.f32 %v1201, %v1364
          %v1394 = vmul.f32 %v1202, %v1365
          %v1395 = vmul.f32 %v1203, %v1365
          %v1396 = vmul.f32 %v1204, %v1365
          %v1397 = vmul.f32 %v1205, %v1365
          %v1398 = vmul.f32 %v1206, %v1365
          %v1399 = vmul.f32 %v1207, %v1365
          %v1400 = vmul.f32 %v1208, %v1366
          %v1401 = vmul.f32 %v1209, %v1366
          %v1402 = vmul.f32 %v1210, %v1366
          %v1403 = vmul.f32 %v1211, %v1366
          %v1404 = vmul.f32 %v1212, %v1366
          %v1405 = vmul.f32 %v1213, %v1366
          %v1406 = vmul.f32 %v1214, %v1367
          %v1407 = vmul.f32 %v1215, %v1367
          %v1408 = vmul.f32 %v1216, %v1367
          %v1409 = vmul.f32 %v1217, %v1367
          %v1410 = vmul.f32 %v1218, %v1367
          %v1411 = vmul.f32 %v1219, %v1367
          %v1412 = vmul.f32 %v1220, %v1368
          %v1413 = vmul.f32 %v1221, %v1368
          %v1414 = vmul.f32 %v1222, %v1368
          %v1415 = vmul.f32 %v1223, %v1368
          %v1416 = vmul.f32 %v1224, %v1368
          %v1417 = vmul.f32 %v1225, %v1368
          %v1418 = vmul.f32 %v1226, %v1369
          %v1419 = vmul.f32 %v1227, %v1369
          %v1420 = vmul.f32 %v1228, %v1369
          %v1421 = vmul.f32 %v1229, %v1369
          %v1422 = vmul.f32 %v1230, %v1369
          %v1423 = vmul.f32 %v1231, %v1369
          %v1424 = vmul.f32 %v1232, %v1370
          %v1425 = vmul.f32 %v1233, %v1370
          %v1426 = vmul.f32 %v1234, %v1370
          %v1427 = vmul.f32 %v1235, %v1370
          %v1428 = vmul.f32 %v1236, %v1370
          %v1429 = vmul.f32 %v1237, %v1370
          %v1430 = vmul.f32 %v1238, %v1371
          %v1431 = vmul.f32 %v1239, %v1371
          %v1432 = vmul.f32 %v1240, %v1371
          %v1433 = vmul.f32 %v1241, %v1371
          %v1434 = vmul.f32 %v1242, %v1371
          %v1435 = vmul.f32 %v1243, %v1371
          %v1436 = vmul.f32 %v1244, %v1372
          %v1437 = vmul.f32 %v1245, %v1372
          %v1438 = vmul.f32 %v1246, %v1372
          %v1439 = vmul.f32 %v1247, %v1372
          %v1440 = vmul.f32 %v1248, %v1372
          %v1441 = vmul.f32 %v1249, %v1372
          %v1442 = vmul.f32 %v1250, %v1373
          %v1443 = vmul.f32 %v1251, %v1373
          %v1444 = vmul.f32 %v1252, %v1373
          %v1445 = vmul.f32 %v1253, %v1373
          %v1446 = vmul.f32 %v1254, %v1373
          %v1447 = vmul.f32 %v1255, %v1373
          %v1448 = vmul.f32 %v1256, %v1374
          %v1449 = vmul.f32 %v1257, %v1374
          %v1450 = vmul.f32 %v1258, %v1374
          %v1451 = vmul.f32 %v1259, %v1374
          %v1452 = vmul.f32 %v1260, %v1374
          %v1453 = vmul.f32 %v1261, %v1374
          %v1454 = vmul.f32 %v1262, %v1375
          %v1455 = vmul.f32 %v1263, %v1375
          %v1456 = vmul.f32 %v1264, %v1375
          %v1457 = vmul.f32 %v1265, %v1375
          %v1458 = vmul.f32 %v1266, %v1375
          %v1459 = vmul.f32 %v1267, %v1375
          %v1460 = vmul.f32 %v1268, %v1376
          %v1461 = vmul.f32 %v1269, %v1376
          %v1462 = vmul.f32 %v1270, %v1376
          %v1463 = vmul.f32 %v1271, %v1376
          %v1464 = vmul.f32 %v1272, %v1376
          %v1465 = vmul.f32 %v1273, %v1376
          %v1466 = vmul.f32 %v1274, %v1377
          %v1467 = vmul.f32 %v1275, %v1377
          %v1468 = vmul.f32 %v1276, %v1377
          %v1469 = vmul.f32 %v1277, %v1377
          %v1470 = vmul.f32 %v1278, %v1377
          %v1471 = vmul.f32 %v1279, %v1377
          %v1472 = vmul.f32 %v1280, %v1378
          %v1473 = vmul.f32 %v1281, %v1378
          %v1474 = vmul.f32 %v1282, %v1378
          %v1475 = vmul.f32 %v1283, %v1378
          %v1476 = vmul.f32 %v1284, %v1378
          %v1477 = vmul.f32 %v1285, %v1378
          %v1478 = vmul.f32 %v1286, %v1379
          %v1479 = vmul.f32 %v1287, %v1379
          %v1480 = vmul.f32 %v1288, %v1379
          %v1481 = vmul.f32 %v1289, %v1379
          %v1482 = vmul.f32 %v1290, %v1379
          %v1483 = vmul.f32 %v1291, %v1379
          %v1484 = vmul.f32 %v1292, %v1380
          %v1485 = vmul.f32 %v1293, %v1380
          %v1486 = vmul.f32 %v1294, %v1380
          %v1487 = vmul.f32 %v1295, %v1380
          %v1488 = vmul.f32 %v1296, %v1380
          %v1489 = vmul.f32 %v1297, %v1380
          %v1490 = vmul.f32 %v1298, %v1381
          %v1491 = vmul.f32 %v1299, %v1381
          %v1492 = vmul.f32 %v1300, %v1381
          %v1493 = vmul.f32 %v1301, %v1381
          %v1494 = vmul.f32 %v1302, %v1381
          %v1495 = vmul.f32 %v1303, %v1381
          %v1496 = vmul.f32 %v1304, %v1382
          %v1497 = vmul.f32 %v1305, %v1382
          %v1498 = vmul.f32 %v1306, %v1382
          %v1499 = vmul.f32 %v1307, %v1382
          %v1500 = vmul.f32 %v1308, %v1382
          %v1501 = vmul.f32 %v1309, %v1382
          %v1502 = vmul.f32 %v1310, %v1383
          %v1503 = vmul.f32 %v1311, %v1383
          %v1504 = vmul.f32 %v1312, %v1383
          %v1505 = vmul.f32 %v1313, %v1383
          %v1506 = vmul.f32 %v1314, %v1383
          %v1507 = vmul.f32 %v1315, %v1383
          %v1508 = vmul.f32 %v1316, %v1384
          %v1509 = vmul.f32 %v1317, %v1384
          %v1510 = vmul.f32 %v1318, %v1384
          %v1511 = vmul.f32 %v1319, %v1384
          %v1512 = vmul.f32 %v1320, %v1384
          %v1513 = vmul.f32 %v1321, %v1384
          %v1514 = vmul.f32 %v1322, %v1385
          %v1515 = vmul.f32 %v1323, %v1385
          %v1516 = vmul.f32 %v1324, %v1385
          %v1517 = vmul.f32 %v1325, %v1385
          %v1518 = vmul.f32 %v1326, %v1385
          %v1519 = vmul.f32 %v1327, %v1385
          %v1520 = vmul.f32 %v1328, %v1386
          %v1521 = vmul.f32 %v1329, %v1386
          %v1522 = vmul.f32 %v1330, %v1386
          %v1523 = vmul.f32 %v1331, %v1386
          %v1524 = vmul.f32 %v1332, %v1386
          %v1525 = vmul.f32 %v1333, %v1386
          %v1526 = vmul.f32 %v1334, %v1387
          %v1527 = vmul.f32 %v1335, %v1387
          %v1528 = vmul.f32 %v1336, %v1387
          %v1529 = vmul.f32 %v1337, %v1387
          %v1530 = vmul.f32 %v1338, %v1387
          %v1531 = vmul.f32 %v1339, %v1387
          %v1532 = vld [vmem:[%s388] sm:$0xff]
          %v1533 = vld [vmem:[%s388 + $0x8] sm:$0xff]
          %v1534 = vld [vmem:[%s388 + $0x10] sm:$0xff]
          %v1535 = vmax.f32 %v1388, %v1394
          %v1536 = vmax.f32 %v1535, %v1400
          %v1537 = vmax.f32 %v1536, %v1406
          %v1538 = vmax.f32 %v1537, %v1412
          %v1539 = vmax.f32 %v1538, %v1418
          %v1540 = vrot.slane %v1539, 4
          %v1541 = vmax.f32 %v1539, %v1540
          %v1542 = vrot.slane %v1541, 2
          %v1543 = vmax.f32 %v1541, %v1542
          %v1544 = vrot.slane %v1543, 1
          %v1545 = vmax.f32 %v1543, %v1544
          %v1546 = vmax.f32 %v1389, %v1395
          %v1547 = vmax.f32 %v1546, %v1401
          %v1548 = vmax.f32 %v1547, %v1407
          %v1549 = vmax.f32 %v1548, %v1413
          %v1550 = vmax.f32 %v1549, %v1419
          %v1551 = vrot.slane %v1550, 4
          %v1552 = vmax.f32 %v1550, %v1551
          %v1553 = vrot.slane %v1552, 2
          %v1554 = vmax.f32 %v1552, %v1553
          %v1555 = vrot.slane %v1554, 1
          %v1556 = vmax.f32 %v1554, %v1555
          %v1557 = vmax.f32 %v1390, %v1396
          %v1558 = vmax.f32 %v1557, %v1402
          %v1559 = vmax.f32 %v1558, %v1408
          %v1560 = vmax.f32 %v1559, %v1414
          %v1561 = vmax.f32 %v1560, %v1420
          %v1562 = vrot.slane %v1561, 4
          %v1563 = vmax.f32 %v1561, %v1562
          %v1564 = vrot.slane %v1563, 2
          %v1565 = vmax.f32 %v1563, %v1564
          %v1566 = vrot.slane %v1565, 1
          %v1567 = vmax.f32 %v1565, %v1566
          %v1568 = vmax.f32 %v1391, %v1397
          %v1569 = vmax.f32 %v1568, %v1403
          %v1570 = vmax.f32 %v1569, %v1409
          %v1571 = vmax.f32 %v1570, %v1415
          %v1572 = vmax.f32 %v1571, %v1421
          %v1573 = vrot.slane %v1572, 4
          %v1574 = vmax.f32 %v1572, %v1573
          %v1575 = vrot.slane %v1574, 2
          %v1576 = vmax.f32 %v1574, %v1575
          %v1577 = vrot.slane %v1576, 1
          %v1578 = vmax.f32 %v1576, %v1577
          %v1579 = vmax.f32 %v1392, %v1398
          %v1580 = vmax.f32 %v1579, %v1404
          %v1581 = vmax.f32 %v1580, %v1410
          %v1582 = vmax.f32 %v1581, %v1416
          %v1583 = vmax.f32 %v1582, %v1422
          %v1584 = vrot.slane %v1583, 4
          %v1585 = vmax.f32 %v1583, %v1584
          %v1586 = vrot.slane %v1585, 2
          %v1587 = vmax.f32 %v1585, %v1586
          %v1588 = vrot.slane %v1587, 1
          %v1589 = vmax.f32 %v1587, %v1588
          %v1590 = vmax.f32 %v1393, %v1399
          %v1591 = vmax.f32 %v1590, %v1405
          %v1592 = vmax.f32 %v1591, %v1411
          %v1593 = vmax.f32 %v1592, %v1417
          %v1594 = vmax.f32 %v1593, %v1423
          %v1595 = vrot.slane %v1594, 4
          %v1596 = vmax.f32 %v1594, %v1595
          %v1597 = vrot.slane %v1596, 2
          %v1598 = vmax.f32 %v1596, %v1597
          %v1599 = vrot.slane %v1598, 1
          %v1600 = vmax.f32 %v1598, %v1599
          %v1601 = vmax.f32 %v1424, %v1430
          %v1602 = vmax.f32 %v1601, %v1436
          %v1603 = vmax.f32 %v1602, %v1442
          %v1604 = vmax.f32 %v1603, %v1448
          %v1605 = vmax.f32 %v1604, %v1454
          %v1606 = vrot.slane %v1605, 4
          %v1607 = vmax.f32 %v1605, %v1606
          %v1608 = vrot.slane %v1607, 2
          %v1609 = vmax.f32 %v1607, %v1608
          %v1610 = vrot.slane %v1609, 1
          %v1611 = vmax.f32 %v1609, %v1610
          %v1612 = vmax.f32 %v1425, %v1431
          %v1613 = vmax.f32 %v1612, %v1437
          %v1614 = vmax.f32 %v1613, %v1443
          %v1615 = vmax.f32 %v1614, %v1449
          %v1616 = vmax.f32 %v1615, %v1455
          %v1617 = vrot.slane %v1616, 4
          %v1618 = vmax.f32 %v1616, %v1617
          %v1619 = vrot.slane %v1618, 2
          %v1620 = vmax.f32 %v1618, %v1619
          %v1621 = vrot.slane %v1620, 1
          %v1622 = vmax.f32 %v1620, %v1621
          %v1623 = vmax.f32 %v1426, %v1432
          %v1624 = vmax.f32 %v1623, %v1438
          %v1625 = vmax.f32 %v1624, %v1444
          %v1626 = vmax.f32 %v1625, %v1450
          %v1627 = vmax.f32 %v1626, %v1456
          %v1628 = vrot.slane %v1627, 4
          %v1629 = vmax.f32 %v1627, %v1628
          %v1630 = vrot.slane %v1629, 2
          %v1631 = vmax.f32 %v1629, %v1630
          %v1632 = vrot.slane %v1631, 1
          %v1633 = vmax.f32 %v1631, %v1632
          %v1634 = vmax.f32 %v1427, %v1433
          %v1635 = vmax.f32 %v1634, %v1439
          %v1636 = vmax.f32 %v1635, %v1445
          %v1637 = vmax.f32 %v1636, %v1451
          %v1638 = vmax.f32 %v1637, %v1457
          %v1639 = vrot.slane %v1638, 4
          %v1640 = vmax.f32 %v1638, %v1639
          %v1641 = vrot.slane %v1640, 2
          %v1642 = vmax.f32 %v1640, %v1641
          %v1643 = vrot.slane %v1642, 1
          %v1644 = vmax.f32 %v1642, %v1643
          %v1645 = vmax.f32 %v1428, %v1434
          %v1646 = vmax.f32 %v1645, %v1440
          %v1647 = vmax.f32 %v1646, %v1446
          %v1648 = vmax.f32 %v1647, %v1452
          %v1649 = vmax.f32 %v1648, %v1458
          %v1650 = vrot.slane %v1649, 4
          %v1651 = vmax.f32 %v1649, %v1650
          %v1652 = vrot.slane %v1651, 2
          %v1653 = vmax.f32 %v1651, %v1652
          %v1654 = vrot.slane %v1653, 1
          %v1655 = vmax.f32 %v1653, %v1654
          %v1656 = vmax.f32 %v1429, %v1435
          %v1657 = vmax.f32 %v1656, %v1441
          %v1658 = vmax.f32 %v1657, %v1447
          %v1659 = vmax.f32 %v1658, %v1453
          %v1660 = vmax.f32 %v1659, %v1459
          %v1661 = vrot.slane %v1660, 4
          %v1662 = vmax.f32 %v1660, %v1661
          %v1663 = vrot.slane %v1662, 2
          %v1664 = vmax.f32 %v1662, %v1663
          %v1665 = vrot.slane %v1664, 1
          %v1666 = vmax.f32 %v1664, %v1665
          %v1667 = vmax.f32 %v1460, %v1466
          %v1668 = vmax.f32 %v1667, %v1472
          %v1669 = vmax.f32 %v1668, %v1478
          %v1670 = vmax.f32 %v1669, %v1484
          %v1671 = vmax.f32 %v1670, %v1490
          %v1672 = vrot.slane %v1671, 4
          %v1673 = vmax.f32 %v1671, %v1672
          %v1674 = vrot.slane %v1673, 2
          %v1675 = vmax.f32 %v1673, %v1674
          %v1676 = vrot.slane %v1675, 1
          %v1677 = vmax.f32 %v1675, %v1676
          %v1678 = vmax.f32 %v1461, %v1467
          %v1679 = vmax.f32 %v1678, %v1473
          %v1680 = vmax.f32 %v1679, %v1479
          %v1681 = vmax.f32 %v1680, %v1485
          %v1682 = vmax.f32 %v1681, %v1491
          %v1683 = vrot.slane %v1682, 4
          %v1684 = vmax.f32 %v1682, %v1683
          %v1685 = vrot.slane %v1684, 2
          %v1686 = vmax.f32 %v1684, %v1685
          %v1687 = vrot.slane %v1686, 1
          %v1688 = vmax.f32 %v1686, %v1687
          %v1689 = vmax.f32 %v1462, %v1468
          %v1690 = vmax.f32 %v1689, %v1474
          %v1691 = vmax.f32 %v1690, %v1480
          %v1692 = vmax.f32 %v1691, %v1486
          %v1693 = vmax.f32 %v1692, %v1492
          %v1694 = vrot.slane %v1693, 4
          %v1695 = vmax.f32 %v1693, %v1694
          %v1696 = vrot.slane %v1695, 2
          %v1697 = vmax.f32 %v1695, %v1696
          %v1698 = vrot.slane %v1697, 1
          %v1699 = vmax.f32 %v1697, %v1698
          %v1700 = vmax.f32 %v1463, %v1469
          %v1701 = vmax.f32 %v1700, %v1475
          %v1702 = vmax.f32 %v1701, %v1481
          %v1703 = vmax.f32 %v1702, %v1487
          %v1704 = vmax.f32 %v1703, %v1493
          %v1705 = vrot.slane %v1704, 4
          %v1706 = vmax.f32 %v1704, %v1705
          %v1707 = vrot.slane %v1706, 2
          %v1708 = vmax.f32 %v1706, %v1707
          %v1709 = vrot.slane %v1708, 1
          %v1710 = vmax.f32 %v1708, %v1709
          %v1711 = vmax.f32 %v1464, %v1470
          %v1712 = vmax.f32 %v1711, %v1476
          %v1713 = vmax.f32 %v1712, %v1482
          %v1714 = vmax.f32 %v1713, %v1488
          %v1715 = vmax.f32 %v1714, %v1494
          %v1716 = vrot.slane %v1715, 4
          %v1717 = vmax.f32 %v1715, %v1716
          %v1718 = vrot.slane %v1717, 2
          %v1719 = vmax.f32 %v1717, %v1718
          %v1720 = vrot.slane %v1719, 1
          %v1721 = vmax.f32 %v1719, %v1720
          %v1722 = vmax.f32 %v1465, %v1471
          %v1723 = vmax.f32 %v1722, %v1477
          %v1724 = vmax.f32 %v1723, %v1483
          %v1725 = vmax.f32 %v1724, %v1489
          %v1726 = vmax.f32 %v1725, %v1495
          %v1727 = vrot.slane %v1726, 4
          %v1728 = vmax.f32 %v1726, %v1727
          %v1729 = vrot.slane %v1728, 2
          %v1730 = vmax.f32 %v1728, %v1729
          %v1731 = vrot.slane %v1730, 1
          %v1732 = vmax.f32 %v1730, %v1731
          %v1733 = vmax.f32 %v1496, %v1502
          %v1734 = vmax.f32 %v1733, %v1508
          %v1735 = vmax.f32 %v1734, %v1514
          %v1736 = vmax.f32 %v1735, %v1520
          %v1737 = vmax.f32 %v1736, %v1526
          %v1738 = vrot.slane %v1737, 4
          %v1739 = vmax.f32 %v1737, %v1738
          %v1740 = vrot.slane %v1739, 2
          %v1741 = vmax.f32 %v1739, %v1740
          %v1742 = vrot.slane %v1741, 1
          %v1743 = vmax.f32 %v1741, %v1742
          %v1744 = vmax.f32 %v1497, %v1503
          %v1745 = vmax.f32 %v1744, %v1509
          %v1746 = vmax.f32 %v1745, %v1515
          %v1747 = vmax.f32 %v1746, %v1521
          %v1748 = vmax.f32 %v1747, %v1527
          %v1749 = vrot.slane %v1748, 4
          %v1750 = vmax.f32 %v1748, %v1749
          %v1751 = vrot.slane %v1750, 2
          %v1752 = vmax.f32 %v1750, %v1751
          %v1753 = vrot.slane %v1752, 1
          %v1754 = vmax.f32 %v1752, %v1753
          %v1755 = vmax.f32 %v1498, %v1504
          %v1756 = vmax.f32 %v1755, %v1510
          %v1757 = vmax.f32 %v1756, %v1516
          %v1758 = vmax.f32 %v1757, %v1522
          %v1759 = vmax.f32 %v1758, %v1528
          %v1760 = vrot.slane %v1759, 4
          %v1761 = vmax.f32 %v1759, %v1760
          %v1762 = vrot.slane %v1761, 2
          %v1763 = vmax.f32 %v1761, %v1762
          %v1764 = vrot.slane %v1763, 1
          %v1765 = vmax.f32 %v1763, %v1764
          %v1766 = vmax.f32 %v1499, %v1505
          %v1767 = vmax.f32 %v1766, %v1511
          %v1768 = vmax.f32 %v1767, %v1517
          %v1769 = vmax.f32 %v1768, %v1523
          %v1770 = vmax.f32 %v1769, %v1529
          %v1771 = vrot.slane %v1770, 4
          %v1772 = vmax.f32 %v1770, %v1771
          %v1773 = vrot.slane %v1772, 2
          %v1774 = vmax.f32 %v1772, %v1773
          %v1775 = vrot.slane %v1774, 1
          %v1776 = vmax.f32 %v1774, %v1775
          %v1777 = vmax.f32 %v1500, %v1506
          %v1778 = vmax.f32 %v1777, %v1512
          %v1779 = vmax.f32 %v1778, %v1518
          %v1780 = vmax.f32 %v1779, %v1524
          %v1781 = vmax.f32 %v1780, %v1530
          %v1782 = vrot.slane %v1781, 4
          %v1783 = vmax.f32 %v1781, %v1782
          %v1784 = vrot.slane %v1783, 2
          %v1785 = vmax.f32 %v1783, %v1784
          %v1786 = vrot.slane %v1785, 1
          %v1787 = vmax.f32 %v1785, %v1786
          %v1788 = vmax.f32 %v1501, %v1507
          %v1789 = vmax.f32 %v1788, %v1513
          %v1790 = vmax.f32 %v1789, %v1519
          %v1791 = vmax.f32 %v1790, %v1525
          %v1792 = vmax.f32 %v1791, %v1531
          %v1793 = vrot.slane %v1792, 4
          %v1794 = vmax.f32 %v1792, %v1793
          %v1795 = vrot.slane %v1794, 2
          %v1796 = vmax.f32 %v1794, %v1795
          %v1797 = vrot.slane %v1796, 1
          %v1798 = vmax.f32 %v1796, %v1797
          %v1823 = vcombine.low %v1545, %v1556
          %v1824 = vcombine.low %v1567, %v1578
          %v1825 = vcombine.low %v1589, %v1600
          %v1826 = vcombine.low %v1611, %v1622
          %v1827 = vcombine.low %v1633, %v1644
          %v1828 = vcombine.low %v1655, %v1666
          %v1829 = vcombine.low %v1677, %v1688
          %v1830 = vcombine.low %v1699, %v1710
          %v1831 = vcombine.low %v1721, %v1732
          %v1832 = vcombine.low %v1743, %v1754
          %v1833 = vcombine.low %v1765, %v1776
          %v1834 = vcombine.low %v1787, %v1798
          %v1835 = vrot.slane %v1826, 7
          %vm1836 = vcmask 1041409
          %v1837 = vsel %vm1836, %v1835, %v1823
          %vm1838 = vcmask 1045509
          %v1839 = vsel %vm1838, %v1835, %v1837
          %v1840 = vrot.slane %v1829, 6
          %vm1841 = vcmask 1042434
          %v1842 = vsel %vm1841, %v1840, %v1839
          %vm1843 = vcmask 1046534
          %v1844 = vsel %vm1843, %v1840, %v1842
          %v1845 = vrot.slane %v1832, 5
          %vm1846 = vcmask 1043459
          %v1847 = vsel %vm1846, %v1845, %v1844
          %vm1848 = vcmask 1047559
          %v1849 = vsel %vm1848, %v1845, %v1847
          %v1850 = vrot.slane %v1827, 7
          %v1851 = vsel %vm1836, %v1850, %v1824
          %v1852 = vsel %vm1838, %v1850, %v1851
          %v1853 = vrot.slane %v1830, 6
          %v1854 = vsel %vm1841, %v1853, %v1852
          %v1855 = vsel %vm1843, %v1853, %v1854
          %v1856 = vrot.slane %v1833, 5
          %v1857 = vsel %vm1846, %v1856, %v1855
          %v1858 = vsel %vm1848, %v1856, %v1857
          %v1859 = vrot.slane %v1828, 7
          %v1860 = vsel %vm1836, %v1859, %v1825
          %v1861 = vsel %vm1838, %v1859, %v1860
          %v1862 = vrot.slane %v1831, 6
          %v1863 = vsel %vm1841, %v1862, %v1861
          %v1864 = vsel %vm1843, %v1862, %v1863
          %v1865 = vrot.slane %v1834, 5
          %v1866 = vsel %vm1846, %v1865, %v1864
          %v1867 = vsel %vm1848, %v1865, %v1866
          %v1871 = vmax.f32 %v1532, %v1849
          %v1872 = vmax.f32 %v1533, %v1858
          %v1873 = vmax.f32 %v1534, %v1867
          %1874 = vst [vmem:[%s388] sm:$0xff] %v1871
          %1875 = vst [vmem:[%s388 + $0x8] sm:$0xff] %v1872
          %1876 = vst [vmem:[%s388 + $0x10] sm:$0xff] %v1873
        $region62: #{tweet_extractor_forward.1} parent=49 // pred_fallthru
          _
        // Predicated region
        $region63: #{tweet_extractor_forward.1} parent=49 // pred_check
          %p1877 = pneg %p399
        $region64: #{tweet_extractor_forward.1} parent=49 // pred_check_branch
          %1879 = sbr.rel (%p1877) target = $region66
        $region65: #{tweet_extractor_forward.1} parent=49 // pred_region
          %v1880 = vld [vmem:[%s351] sm:$0xff]
          %v1881 = vld [vmem:[%s351 + $0x8] sm:$0xff]
          %v1882 = vld [vmem:[%s351 + $0x10] sm:$0xff]
          %v1883 = vld [vmem:[%s351 + $0x18] sm:$0xff]
          %v1884 = vld [vmem:[%s351 + $0x20] sm:$0xff]
          %v1885 = vld [vmem:[%s351 + $0x28] sm:$0xff]
          %v1886 = vld [vmem:[%s351 + $0x30] sm:$0xff]
          %v1887 = vld [vmem:[%s351 + $0x38] sm:$0xff]
          %v1888 = vld [vmem:[%s351 + $0x40] sm:$0xff]
          %v1889 = vld [vmem:[%s351 + $0x48] sm:$0xff]
          %v1890 = vld [vmem:[%s351 + $0x50] sm:$0xff]
          %v1891 = vld [vmem:[%s351 + $0x58] sm:$0xff]
          %v1892 = vld [vmem:[%s351 + $0x60] sm:$0xff]
          %v1893 = vld [vmem:[%s351 + $0x68] sm:$0xff]
          %v1894 = vld [vmem:[%s351 + $0x70] sm:$0xff]
          %v1895 = vld [vmem:[%s351 + $0x78] sm:$0xff]
          %v1896 = vld [vmem:[%s351 + $0x80] sm:$0xff]
          %v1897 = vld [vmem:[%s351 + $0x88] sm:$0xff]
          %v1898 = vld [vmem:[%s351 + $0x90] sm:$0xff]
          %v1899 = vld [vmem:[%s351 + $0x98] sm:$0xff]
          %v1900 = vld [vmem:[%s351 + $0xa0] sm:$0xff]
          %v1901 = vld [vmem:[%s351 + $0xa8] sm:$0xff]
          %v1902 = vld [vmem:[%s351 + $0xb0] sm:$0xff]
          %v1903 = vld [vmem:[%s351 + $0xb8] sm:$0xff]
          %v1904 = vld [vmem:[%s351 + $0xc0] sm:$0xff]
          %v1905 = vld [vmem:[%s351 + $0xc8] sm:$0xff]
          %v1906 = vld [vmem:[%s351 + $0xd0] sm:$0xff]
          %v1907 = vld [vmem:[%s351 + $0xd8] sm:$0xff]
          %v1908 = vld [vmem:[%s351 + $0xe0] sm:$0xff]
          %v1909 = vld [vmem:[%s351 + $0xe8] sm:$0xff]
          %v1910 = vld [vmem:[%s351 + $0xf0] sm:$0xff]
          %v1911 = vld [vmem:[%s351 + $0xf8] sm:$0xff]
          %v1912 = vld [vmem:[%s351 + $0x100] sm:$0xff]
          %v1913 = vld [vmem:[%s351 + $0x108] sm:$0xff]
          %v1914 = vld [vmem:[%s351 + $0x110] sm:$0xff]
          %v1915 = vld [vmem:[%s351 + $0x118] sm:$0xff]
          %v1916 = vld [vmem:[%s351 + $0x120] sm:$0xff]
          %v1917 = vld [vmem:[%s351 + $0x128] sm:$0xff]
          %v1918 = vld [vmem:[%s351 + $0x130] sm:$0xff]
          %v1919 = vld [vmem:[%s351 + $0x138] sm:$0xff]
          %v1920 = vld [vmem:[%s351 + $0x140] sm:$0xff]
          %v1921 = vld [vmem:[%s351 + $0x148] sm:$0xff]
          %v1922 = vld [vmem:[%s351 + $0x150] sm:$0xff]
          %v1923 = vld [vmem:[%s351 + $0x158] sm:$0xff]
          %v1924 = vld [vmem:[%s351 + $0x160] sm:$0xff]
          %v1925 = vld [vmem:[%s351 + $0x168] sm:$0xff]
          %v1926 = vld [vmem:[%s351 + $0x170] sm:$0xff]
          %v1927 = vld [vmem:[%s351 + $0x178] sm:$0xff]
          %v1928 = vld [vmem:[%s351 + $0x180] sm:$0xff]
          %v1929 = vld [vmem:[%s351 + $0x188] sm:$0xff]
          %v1930 = vld [vmem:[%s351 + $0x190] sm:$0xff]
          %v1931 = vld [vmem:[%s351 + $0x198] sm:$0xff]
          %v1932 = vld [vmem:[%s351 + $0x1a0] sm:$0xff]
          %v1933 = vld [vmem:[%s351 + $0x1a8] sm:$0xff]
          %v1934 = vld [vmem:[%s351 + $0x1b0] sm:$0xff]
          %v1935 = vld [vmem:[%s351 + $0x1b8] sm:$0xff]
          %v1936 = vld [vmem:[%s351 + $0x1c0] sm:$0xff]
          %v1937 = vld [vmem:[%s351 + $0x1c8] sm:$0xff]
          %v1938 = vld [vmem:[%s351 + $0x1d0] sm:$0xff]
          %v1939 = vld [vmem:[%s351 + $0x1d8] sm:$0xff]
          %v1940 = vld [vmem:[%s351 + $0x1e0] sm:$0xff]
          %v1941 = vld [vmem:[%s351 + $0x1e8] sm:$0xff]
          %v1942 = vld [vmem:[%s351 + $0x1f0] sm:$0xff]
          %v1943 = vld [vmem:[%s351 + $0x1f8] sm:$0xff]
          %v1944 = vld [vmem:[%s351 + $0x200] sm:$0xff]
          %v1945 = vld [vmem:[%s351 + $0x208] sm:$0xff]
          %v1946 = vld [vmem:[%s351 + $0x210] sm:$0xff]
          %v1947 = vld [vmem:[%s351 + $0x218] sm:$0xff]
          %v1948 = vld [vmem:[%s351 + $0x220] sm:$0xff]
          %v1949 = vld [vmem:[%s351 + $0x228] sm:$0xff]
          %v1950 = vld [vmem:[%s351 + $0x230] sm:$0xff]
          %v1951 = vld [vmem:[%s351 + $0x238] sm:$0xff]
          %v1952 = vunpack.c.l.bf16 %v1880
          %v1953 = vunpack.c.h.bf16 %v1880
          %v1954 = vunpack.c.l.bf16 %v1881
          %v1955 = vunpack.c.h.bf16 %v1881
          %v1956 = vunpack.c.l.bf16 %v1882
          %v1957 = vunpack.c.h.bf16 %v1882
          %v1958 = vunpack.c.l.bf16 %v1883
          %v1959 = vunpack.c.h.bf16 %v1883
          %v1960 = vunpack.c.l.bf16 %v1884
          %v1961 = vunpack.c.h.bf16 %v1884
          %v1962 = vunpack.c.l.bf16 %v1885
          %v1963 = vunpack.c.h.bf16 %v1885
          %v1964 = vunpack.c.l.bf16 %v1886
          %v1965 = vunpack.c.h.bf16 %v1886
          %v1966 = vunpack.c.l.bf16 %v1887
          %v1967 = vunpack.c.h.bf16 %v1887
          %v1968 = vunpack.c.l.bf16 %v1888
          %v1969 = vunpack.c.h.bf16 %v1888
          %v1970 = vunpack.c.l.bf16 %v1889
          %v1971 = vunpack.c.h.bf16 %v1889
          %v1972 = vunpack.c.l.bf16 %v1890
          %v1973 = vunpack.c.h.bf16 %v1890
          %v1974 = vunpack.c.l.bf16 %v1891
          %v1975 = vunpack.c.h.bf16 %v1891
          %v1976 = vunpack.c.l.bf16 %v1892
          %v1977 = vunpack.c.h.bf16 %v1892
          %v1978 = vunpack.c.l.bf16 %v1893
          %v1979 = vunpack.c.h.bf16 %v1893
          %v1980 = vunpack.c.l.bf16 %v1894
          %v1981 = vunpack.c.h.bf16 %v1894
          %v1982 = vunpack.c.l.bf16 %v1895
          %v1983 = vunpack.c.h.bf16 %v1895
          %v1984 = vunpack.c.l.bf16 %v1896
          %v1985 = vunpack.c.h.bf16 %v1896
          %v1986 = vunpack.c.l.bf16 %v1897
          %v1987 = vunpack.c.h.bf16 %v1897
          %v1988 = vunpack.c.l.bf16 %v1898
          %v1989 = vunpack.c.h.bf16 %v1898
          %v1990 = vunpack.c.l.bf16 %v1899
          %v1991 = vunpack.c.h.bf16 %v1899
          %v1992 = vunpack.c.l.bf16 %v1900
          %v1993 = vunpack.c.h.bf16 %v1900
          %v1994 = vunpack.c.l.bf16 %v1901
          %v1995 = vunpack.c.h.bf16 %v1901
          %v1996 = vunpack.c.l.bf16 %v1902
          %v1997 = vunpack.c.h.bf16 %v1902
          %v1998 = vunpack.c.l.bf16 %v1903
          %v1999 = vunpack.c.h.bf16 %v1903
          %v2000 = vunpack.c.l.bf16 %v1904
          %v2001 = vunpack.c.h.bf16 %v1904
          %v2002 = vunpack.c.l.bf16 %v1905
          %v2003 = vunpack.c.h.bf16 %v1905
          %v2004 = vunpack.c.l.bf16 %v1906
          %v2005 = vunpack.c.h.bf16 %v1906
          %v2006 = vunpack.c.l.bf16 %v1907
          %v2007 = vunpack.c.h.bf16 %v1907
          %v2008 = vunpack.c.l.bf16 %v1908
          %v2009 = vunpack.c.h.bf16 %v1908
          %v2010 = vunpack.c.l.bf16 %v1909
          %v2011 = vunpack.c.h.bf16 %v1909
          %v2012 = vunpack.c.l.bf16 %v1910
          %v2013 = vunpack.c.h.bf16 %v1910
          %v2014 = vunpack.c.l.bf16 %v1911
          %v2015 = vunpack.c.h.bf16 %v1911
          %v2016 = vunpack.c.l.bf16 %v1912
          %v2017 = vunpack.c.h.bf16 %v1912
          %v2018 = vunpack.c.l.bf16 %v1913
          %v2019 = vunpack.c.h.bf16 %v1913
          %v2020 = vunpack.c.l.bf16 %v1914
          %v2021 = vunpack.c.h.bf16 %v1914
          %v2022 = vunpack.c.l.bf16 %v1915
          %v2023 = vunpack.c.h.bf16 %v1915
          %v2024 = vunpack.c.l.bf16 %v1916
          %v2025 = vunpack.c.h.bf16 %v1916
          %v2026 = vunpack.c.l.bf16 %v1917
          %v2027 = vunpack.c.h.bf16 %v1917
          %v2028 = vunpack.c.l.bf16 %v1918
          %v2029 = vunpack.c.h.bf16 %v1918
          %v2030 = vunpack.c.l.bf16 %v1919
          %v2031 = vunpack.c.h.bf16 %v1919
          %v2032 = vunpack.c.l.bf16 %v1920
          %v2033 = vunpack.c.h.bf16 %v1920
          %v2034 = vunpack.c.l.bf16 %v1921
          %v2035 = vunpack.c.h.bf16 %v1921
          %v2036 = vunpack.c.l.bf16 %v1922
          %v2037 = vunpack.c.h.bf16 %v1922
          %v2038 = vunpack.c.l.bf16 %v1923
          %v2039 = vunpack.c.h.bf16 %v1923
          %v2040 = vunpack.c.l.bf16 %v1924
          %v2041 = vunpack.c.h.bf16 %v1924
          %v2042 = vunpack.c.l.bf16 %v1925
          %v2043 = vunpack.c.h.bf16 %v1925
          %v2044 = vunpack.c.l.bf16 %v1926
          %v2045 = vunpack.c.h.bf16 %v1926
          %v2046 = vunpack.c.l.bf16 %v1927
          %v2047 = vunpack.c.h.bf16 %v1927
          %v2048 = vunpack.c.l.bf16 %v1928
          %v2049 = vunpack.c.h.bf16 %v1928
          %v2050 = vunpack.c.l.bf16 %v1929
          %v2051 = vunpack.c.h.bf16 %v1929
          %v2052 = vunpack.c.l.bf16 %v1930
          %v2053 = vunpack.c.h.bf16 %v1930
          %v2054 = vunpack.c.l.bf16 %v1931
          %v2055 = vunpack.c.h.bf16 %v1931
          %v2056 = vunpack.c.l.bf16 %v1932
          %v2057 = vunpack.c.h.bf16 %v1932
          %v2058 = vunpack.c.l.bf16 %v1933
          %v2059 = vunpack.c.h.bf16 %v1933
          %v2060 = vunpack.c.l.bf16 %v1934
          %v2061 = vunpack.c.h.bf16 %v1934
          %v2062 = vunpack.c.l.bf16 %v1935
          %v2063 = vunpack.c.h.bf16 %v1935
          %v2064 = vunpack.c.l.bf16 %v1936
          %v2065 = vunpack.c.h.bf16 %v1936
          %v2066 = vunpack.c.l.bf16 %v1937
          %v2067 = vunpack.c.h.bf16 %v1937
          %v2068 = vunpack.c.l.bf16 %v1938
          %v2069 = vunpack.c.h.bf16 %v1938
          %v2070 = vunpack.c.l.bf16 %v1939
          %v2071 = vunpack.c.h.bf16 %v1939
          %v2072 = vunpack.c.l.bf16 %v1940
          %v2073 = vunpack.c.h.bf16 %v1940
          %v2074 = vunpack.c.l.bf16 %v1941
          %v2075 = vunpack.c.h.bf16 %v1941
          %v2076 = vunpack.c.l.bf16 %v1942
          %v2077 = vunpack.c.h.bf16 %v1942
          %v2078 = vunpack.c.l.bf16 %v1943
          %v2079 = vunpack.c.h.bf16 %v1943
          %v2080 = vunpack.c.l.bf16 %v1944
          %v2081 = vunpack.c.h.bf16 %v1944
          %v2082 = vunpack.c.l.bf16 %v1945
          %v2083 = vunpack.c.h.bf16 %v1945
          %v2084 = vunpack.c.l.bf16 %v1946
          %v2085 = vunpack.c.h.bf16 %v1946
          %v2086 = vunpack.c.l.bf16 %v1947
          %v2087 = vunpack.c.h.bf16 %v1947
          %v2088 = vunpack.c.l.bf16 %v1948
          %v2089 = vunpack.c.h.bf16 %v1948
          %v2090 = vunpack.c.l.bf16 %v1949
          %v2091 = vunpack.c.h.bf16 %v1949
          %v2092 = vunpack.c.l.bf16 %v1950
          %v2093 = vunpack.c.h.bf16 %v1950
          %v2094 = vunpack.c.l.bf16 %v1951
          %v2095 = vunpack.c.h.bf16 %v1951
          %v2096 = vadd.f32 %v1952, %v1953
          %v2097 = vadd.f32 %v2096, %v1954
          %v2098 = vadd.f32 %v2097, %v1955
          %v2099 = vadd.f32 %v2098, %v1956
          %v2100 = vadd.f32 %v2099, %v1957
          %2101 = vadd.xlane.f32.xlu0 %v2100
          %v2102 = vpop.xlane.xlu0 %2101
          %v2103 = vadd.f32 %v1958, %v1959
          %v2104 = vadd.f32 %v2103, %v1960
          %v2105 = vadd.f32 %v2104, %v1961
          %v2106 = vadd.f32 %v2105, %v1962
          %v2107 = vadd.f32 %v2106, %v1963
          %2108 = vadd.xlane.f32.xlu0 %v2107
          %v2109 = vpop.xlane.xlu0 %2108
          %v2110 = vadd.f32 %v1964, %v1965
          %v2111 = vadd.f32 %v2110, %v1966
          %v2112 = vadd.f32 %v2111, %v1967
          %v2113 = vadd.f32 %v2112, %v1968
          %v2114 = vadd.f32 %v2113, %v1969
          %2115 = vadd.xlane.f32.xlu0 %v2114
          %v2116 = vpop.xlane.xlu0 %2115
          %v2117 = vadd.f32 %v1970, %v1971
          %v2118 = vadd.f32 %v2117, %v1972
          %v2119 = vadd.f32 %v2118, %v1973
          %v2120 = vadd.f32 %v2119, %v1974
          %v2121 = vadd.f32 %v2120, %v1975
          %2122 = vadd.xlane.f32.xlu0 %v2121
          %v2123 = vpop.xlane.xlu0 %2122
          %v2124 = vadd.f32 %v1976, %v1977
          %v2125 = vadd.f32 %v2124, %v1978
          %v2126 = vadd.f32 %v2125, %v1979
          %v2127 = vadd.f32 %v2126, %v1980
          %v2128 = vadd.f32 %v2127, %v1981
          %2129 = vadd.xlane.f32.xlu0 %v2128
          %v2130 = vpop.xlane.xlu0 %2129
          %v2131 = vadd.f32 %v1982, %v1983
          %v2132 = vadd.f32 %v2131, %v1984
          %v2133 = vadd.f32 %v2132, %v1985
          %v2134 = vadd.f32 %v2133, %v1986
          %v2135 = vadd.f32 %v2134, %v1987
          %2136 = vadd.xlane.f32.xlu0 %v2135
          %v2137 = vpop.xlane.xlu0 %2136
          %v2138 = vadd.f32 %v1988, %v1989
          %v2139 = vadd.f32 %v2138, %v1990
          %v2140 = vadd.f32 %v2139, %v1991
          %v2141 = vadd.f32 %v2140, %v1992
          %v2142 = vadd.f32 %v2141, %v1993
          %2143 = vadd.xlane.f32.xlu0 %v2142
          %v2144 = vpop.xlane.xlu0 %2143
          %v2145 = vadd.f32 %v1994, %v1995
          %v2146 = vadd.f32 %v2145, %v1996
          %v2147 = vadd.f32 %v2146, %v1997
          %v2148 = vadd.f32 %v2147, %v1998
          %v2149 = vadd.f32 %v2148, %v1999
          %2150 = vadd.xlane.f32.xlu0 %v2149
          %v2151 = vpop.xlane.xlu0 %2150
          %v2152 = vadd.f32 %v2000, %v2001
          %v2153 = vadd.f32 %v2152, %v2002
          %v2154 = vadd.f32 %v2153, %v2003
          %v2155 = vadd.f32 %v2154, %v2004
          %v2156 = vadd.f32 %v2155, %v2005
          %2157 = vadd.xlane.f32.xlu0 %v2156
          %v2158 = vpop.xlane.xlu0 %2157
          %v2159 = vadd.f32 %v2006, %v2007
          %v2160 = vadd.f32 %v2159, %v2008
          %v2161 = vadd.f32 %v2160, %v2009
          %v2162 = vadd.f32 %v2161, %v2010
          %v2163 = vadd.f32 %v2162, %v2011
          %2164 = vadd.xlane.f32.xlu0 %v2163
          %v2165 = vpop.xlane.xlu0 %2164
          %v2166 = vadd.f32 %v2012, %v2013
          %v2167 = vadd.f32 %v2166, %v2014
          %v2168 = vadd.f32 %v2167, %v2015
          %v2169 = vadd.f32 %v2168, %v2016
          %v2170 = vadd.f32 %v2169, %v2017
          %2171 = vadd.xlane.f32.xlu0 %v2170
          %v2172 = vpop.xlane.xlu0 %2171
          %v2173 = vadd.f32 %v2018, %v2019
          %v2174 = vadd.f32 %v2173, %v2020
          %v2175 = vadd.f32 %v2174, %v2021
          %v2176 = vadd.f32 %v2175, %v2022
          %v2177 = vadd.f32 %v2176, %v2023
          %2178 = vadd.xlane.f32.xlu0 %v2177
          %v2179 = vpop.xlane.xlu0 %2178
          %v2180 = vadd.f32 %v2024, %v2025
          %v2181 = vadd.f32 %v2180, %v2026
          %v2182 = vadd.f32 %v2181, %v2027
          %v2183 = vadd.f32 %v2182, %v2028
          %v2184 = vadd.f32 %v2183, %v2029
          %2185 = vadd.xlane.f32.xlu0 %v2184
          %v2186 = vpop.xlane.xlu0 %2185
          %v2187 = vadd.f32 %v2030, %v2031
          %v2188 = vadd.f32 %v2187, %v2032
          %v2189 = vadd.f32 %v2188, %v2033
          %v2190 = vadd.f32 %v2189, %v2034
          %v2191 = vadd.f32 %v2190, %v2035
          %2192 = vadd.xlane.f32.xlu0 %v2191
          %v2193 = vpop.xlane.xlu0 %2192
          %v2194 = vadd.f32 %v2036, %v2037
          %v2195 = vadd.f32 %v2194, %v2038
          %v2196 = vadd.f32 %v2195, %v2039
          %v2197 = vadd.f32 %v2196, %v2040
          %v2198 = vadd.f32 %v2197, %v2041
          %2199 = vadd.xlane.f32.xlu0 %v2198
          %v2200 = vpop.xlane.xlu0 %2199
          %v2201 = vadd.f32 %v2042, %v2043
          %v2202 = vadd.f32 %v2201, %v2044
          %v2203 = vadd.f32 %v2202, %v2045
          %v2204 = vadd.f32 %v2203, %v2046
          %v2205 = vadd.f32 %v2204, %v2047
          %2206 = vadd.xlane.f32.xlu0 %v2205
          %v2207 = vpop.xlane.xlu0 %2206
          %v2208 = vadd.f32 %v2048, %v2049
          %v2209 = vadd.f32 %v2208, %v2050
          %v2210 = vadd.f32 %v2209, %v2051
          %v2211 = vadd.f32 %v2210, %v2052
          %v2212 = vadd.f32 %v2211, %v2053
          %2213 = vadd.xlane.f32.xlu0 %v2212
          %v2214 = vpop.xlane.xlu0 %2213
          %v2215 = vadd.f32 %v2054, %v2055
          %v2216 = vadd.f32 %v2215, %v2056
          %v2217 = vadd.f32 %v2216, %v2057
          %v2218 = vadd.f32 %v2217, %v2058
          %v2219 = vadd.f32 %v2218, %v2059
          %2220 = vadd.xlane.f32.xlu0 %v2219
          %v2221 = vpop.xlane.xlu0 %2220
          %v2222 = vadd.f32 %v2060, %v2061
          %v2223 = vadd.f32 %v2222, %v2062
          %v2224 = vadd.f32 %v2223, %v2063
          %v2225 = vadd.f32 %v2224, %v2064
          %v2226 = vadd.f32 %v2225, %v2065
          %2227 = vadd.xlane.f32.xlu0 %v2226
          %v2228 = vpop.xlane.xlu0 %2227
          %v2229 = vadd.f32 %v2066, %v2067
          %v2230 = vadd.f32 %v2229, %v2068
          %v2231 = vadd.f32 %v2230, %v2069
          %v2232 = vadd.f32 %v2231, %v2070
          %v2233 = vadd.f32 %v2232, %v2071
          %2234 = vadd.xlane.f32.xlu0 %v2233
          %v2235 = vpop.xlane.xlu0 %2234
          %v2236 = vadd.f32 %v2072, %v2073
          %v2237 = vadd.f32 %v2236, %v2074
          %v2238 = vadd.f32 %v2237, %v2075
          %v2239 = vadd.f32 %v2238, %v2076
          %v2240 = vadd.f32 %v2239, %v2077
          %2241 = vadd.xlane.f32.xlu0 %v2240
          %v2242 = vpop.xlane.xlu0 %2241
          %v2243 = vadd.f32 %v2078, %v2079
          %v2244 = vadd.f32 %v2243, %v2080
          %v2245 = vadd.f32 %v2244, %v2081
          %v2246 = vadd.f32 %v2245, %v2082
          %v2247 = vadd.f32 %v2246, %v2083
          %2248 = vadd.xlane.f32.xlu0 %v2247
          %v2249 = vpop.xlane.xlu0 %2248
          %v2250 = vadd.f32 %v2084, %v2085
          %v2251 = vadd.f32 %v2250, %v2086
          %v2252 = vadd.f32 %v2251, %v2087
          %v2253 = vadd.f32 %v2252, %v2088
          %v2254 = vadd.f32 %v2253, %v2089
          %2255 = vadd.xlane.f32.xlu0 %v2254
          %v2256 = vpop.xlane.xlu0 %2255
          %v2257 = vadd.f32 %v2090, %v2091
          %v2258 = vadd.f32 %v2257, %v2092
          %v2259 = vadd.f32 %v2258, %v2093
          %v2260 = vadd.f32 %v2259, %v2094
          %v2261 = vadd.f32 %v2260, %v2095
          %2262 = vadd.xlane.f32.xlu0 %v2261
          %v2263 = vpop.xlane.xlu0 %2262
          %v2264 = vmul.f32 %v1952, %v1952
          %v2265 = vmul.f32 %v1953, %v1953
          %v2266 = vmul.f32 %v1954, %v1954
          %v2267 = vmul.f32 %v1955, %v1955
          %v2268 = vmul.f32 %v1956, %v1956
          %v2269 = vmul.f32 %v1957, %v1957
          %v2270 = vmul.f32 %v1958, %v1958
          %v2271 = vmul.f32 %v1959, %v1959
          %v2272 = vmul.f32 %v1960, %v1960
          %v2273 = vmul.f32 %v1961, %v1961
          %v2274 = vmul.f32 %v1962, %v1962
          %v2275 = vmul.f32 %v1963, %v1963
          %v2276 = vmul.f32 %v1964, %v1964
          %v2277 = vmul.f32 %v1965, %v1965
          %v2278 = vmul.f32 %v1966, %v1966
          %v2279 = vmul.f32 %v1967, %v1967
          %v2280 = vmul.f32 %v1968, %v1968
          %v2281 = vmul.f32 %v1969, %v1969
          %v2282 = vmul.f32 %v1970, %v1970
          %v2283 = vmul.f32 %v1971, %v1971
          %v2284 = vmul.f32 %v1972, %v1972
          %v2285 = vmul.f32 %v1973, %v1973
          %v2286 = vmul.f32 %v1974, %v1974
          %v2287 = vmul.f32 %v1975, %v1975
          %v2288 = vmul.f32 %v1976, %v1976
          %v2289 = vmul.f32 %v1977, %v1977
          %v2290 = vmul.f32 %v1978, %v1978
          %v2291 = vmul.f32 %v1979, %v1979
          %v2292 = vmul.f32 %v1980, %v1980
          %v2293 = vmul.f32 %v1981, %v1981
          %v2294 = vmul.f32 %v1982, %v1982
          %v2295 = vmul.f32 %v1983, %v1983
          %v2296 = vmul.f32 %v1984, %v1984
          %v2297 = vmul.f32 %v1985, %v1985
          %v2298 = vmul.f32 %v1986, %v1986
          %v2299 = vmul.f32 %v1987, %v1987
          %v2300 = vmul.f32 %v1988, %v1988
          %v2301 = vmul.f32 %v1989, %v1989
          %v2302 = vmul.f32 %v1990, %v1990
          %v2303 = vmul.f32 %v1991, %v1991
          %v2304 = vmul.f32 %v1992, %v1992
          %v2305 = vmul.f32 %v1993, %v1993
          %v2306 = vmul.f32 %v1994, %v1994
          %v2307 = vmul.f32 %v1995, %v1995
          %v2308 = vmul.f32 %v1996, %v1996
          %v2309 = vmul.f32 %v1997, %v1997
          %v2310 = vmul.f32 %v1998, %v1998
          %v2311 = vmul.f32 %v1999, %v1999
          %v2312 = vmul.f32 %v2000, %v2000
          %v2313 = vmul.f32 %v2001, %v2001
          %v2314 = vmul.f32 %v2002, %v2002
          %v2315 = vmul.f32 %v2003, %v2003
          %v2316 = vmul.f32 %v2004, %v2004
          %v2317 = vmul.f32 %v2005, %v2005
          %v2318 = vmul.f32 %v2006, %v2006
          %v2319 = vmul.f32 %v2007, %v2007
          %v2320 = vmul.f32 %v2008, %v2008
          %v2321 = vmul.f32 %v2009, %v2009
          %v2322 = vmul.f32 %v2010, %v2010
          %v2323 = vmul.f32 %v2011, %v2011
          %v2324 = vmul.f32 %v2012, %v2012
          %v2325 = vmul.f32 %v2013, %v2013
          %v2326 = vmul.f32 %v2014, %v2014
          %v2327 = vmul.f32 %v2015, %v2015
          %v2328 = vmul.f32 %v2016, %v2016
          %v2329 = vmul.f32 %v2017, %v2017
          %v2330 = vmul.f32 %v2018, %v2018
          %v2331 = vmul.f32 %v2019, %v2019
          %v2332 = vmul.f32 %v2020, %v2020
          %v2333 = vmul.f32 %v2021, %v2021
          %v2334 = vmul.f32 %v2022, %v2022
          %v2335 = vmul.f32 %v2023, %v2023
          %v2336 = vmul.f32 %v2024, %v2024
          %v2337 = vmul.f32 %v2025, %v2025
          %v2338 = vmul.f32 %v2026, %v2026
          %v2339 = vmul.f32 %v2027, %v2027
          %v2340 = vmul.f32 %v2028, %v2028
          %v2341 = vmul.f32 %v2029, %v2029
          %v2342 = vmul.f32 %v2030, %v2030
          %v2343 = vmul.f32 %v2031, %v2031
          %v2344 = vmul.f32 %v2032, %v2032
          %v2345 = vmul.f32 %v2033, %v2033
          %v2346 = vmul.f32 %v2034, %v2034
          %v2347 = vmul.f32 %v2035, %v2035
          %v2348 = vmul.f32 %v2036, %v2036
          %v2349 = vmul.f32 %v2037, %v2037
          %v2350 = vmul.f32 %v2038, %v2038
          %v2351 = vmul.f32 %v2039, %v2039
          %v2352 = vmul.f32 %v2040, %v2040
          %v2353 = vmul.f32 %v2041, %v2041
          %v2354 = vmul.f32 %v2042, %v2042
          %v2355 = vmul.f32 %v2043, %v2043
          %v2356 = vmul.f32 %v2044, %v2044
          %v2357 = vmul.f32 %v2045, %v2045
          %v2358 = vmul.f32 %v2046, %v2046
          %v2359 = vmul.f32 %v2047, %v2047
          %v2360 = vmul.f32 %v2048, %v2048
          %v2361 = vmul.f32 %v2049, %v2049
          %v2362 = vmul.f32 %v2050, %v2050
          %v2363 = vmul.f32 %v2051, %v2051
          %v2364 = vmul.f32 %v2052, %v2052
          %v2365 = vmul.f32 %v2053, %v2053
          %v2366 = vmul.f32 %v2054, %v2054
          %v2367 = vmul.f32 %v2055, %v2055
          %v2368 = vmul.f32 %v2056, %v2056
          %v2369 = vmul.f32 %v2057, %v2057
          %v2370 = vmul.f32 %v2058, %v2058
          %v2371 = vmul.f32 %v2059, %v2059
          %v2372 = vmul.f32 %v2060, %v2060
          %v2373 = vmul.f32 %v2061, %v2061
          %v2374 = vmul.f32 %v2062, %v2062
          %v2375 = vmul.f32 %v2063, %v2063
          %v2376 = vmul.f32 %v2064, %v2064
          %v2377 = vmul.f32 %v2065, %v2065
          %v2378 = vmul.f32 %v2066, %v2066
          %v2379 = vmul.f32 %v2067, %v2067
          %v2380 = vmul.f32 %v2068, %v2068
          %v2381 = vmul.f32 %v2069, %v2069
          %v2382 = vmul.f32 %v2070, %v2070
          %v2383 = vmul.f32 %v2071, %v2071
          %v2384 = vmul.f32 %v2072, %v2072
          %v2385 = vmul.f32 %v2073, %v2073
          %v2386 = vmul.f32 %v2074, %v2074
          %v2387 = vmul.f32 %v2075, %v2075
          %v2388 = vmul.f32 %v2076, %v2076
          %v2389 = vmul.f32 %v2077, %v2077
          %v2390 = vmul.f32 %v2078, %v2078
          %v2391 = vmul.f32 %v2079, %v2079
          %v2392 = vmul.f32 %v2080, %v2080
          %v2393 = vmul.f32 %v2081, %v2081
          %v2394 = vmul.f32 %v2082, %v2082
          %v2395 = vmul.f32 %v2083, %v2083
          %v2396 = vmul.f32 %v2084, %v2084
          %v2397 = vmul.f32 %v2085, %v2085
          %v2398 = vmul.f32 %v2086, %v2086
          %v2399 = vmul.f32 %v2087, %v2087
          %v2400 = vmul.f32 %v2088, %v2088
          %v2401 = vmul.f32 %v2089, %v2089
          %v2402 = vmul.f32 %v2090, %v2090
          %v2403 = vmul.f32 %v2091, %v2091
          %v2404 = vmul.f32 %v2092, %v2092
          %v2405 = vmul.f32 %v2093, %v2093
          %v2406 = vmul.f32 %v2094, %v2094
          %v2407 = vmul.f32 %v2095, %v2095
          %v2408 = vadd.f32 %v2264, %v2265
          %v2409 = vadd.f32 %v2408, %v2266
          %v2410 = vadd.f32 %v2409, %v2267
          %v2411 = vadd.f32 %v2410, %v2268
          %v2412 = vadd.f32 %v2411, %v2269
          %2413 = vadd.xlane.f32.xlu0 %v2412
          %v2414 = vpop.xlane.xlu0 %2413
          %v2415 = vadd.f32 %v2270, %v2271
          %v2416 = vadd.f32 %v2415, %v2272
          %v2417 = vadd.f32 %v2416, %v2273
          %v2418 = vadd.f32 %v2417, %v2274
          %v2419 = vadd.f32 %v2418, %v2275
          %2420 = vadd.xlane.f32.xlu0 %v2419
          %v2421 = vpop.xlane.xlu0 %2420
          %v2422 = vadd.f32 %v2276, %v2277
          %v2423 = vadd.f32 %v2422, %v2278
          %v2424 = vadd.f32 %v2423, %v2279
          %v2425 = vadd.f32 %v2424, %v2280
          %v2426 = vadd.f32 %v2425, %v2281
          %2427 = vadd.xlane.f32.xlu0 %v2426
          %v2428 = vpop.xlane.xlu0 %2427
          %v2429 = vadd.f32 %v2282, %v2283
          %v2430 = vadd.f32 %v2429, %v2284
          %v2431 = vadd.f32 %v2430, %v2285
          %v2432 = vadd.f32 %v2431, %v2286
          %v2433 = vadd.f32 %v2432, %v2287
          %2434 = vadd.xlane.f32.xlu0 %v2433
          %v2435 = vpop.xlane.xlu0 %2434
          %v2436 = vadd.f32 %v2288, %v2289
          %v2437 = vadd.f32 %v2436, %v2290
          %v2438 = vadd.f32 %v2437, %v2291
          %v2439 = vadd.f32 %v2438, %v2292
          %v2440 = vadd.f32 %v2439, %v2293
          %2441 = vadd.xlane.f32.xlu0 %v2440
          %v2442 = vpop.xlane.xlu0 %2441
          %v2443 = vadd.f32 %v2294, %v2295
          %v2444 = vadd.f32 %v2443, %v2296
          %v2445 = vadd.f32 %v2444, %v2297
          %v2446 = vadd.f32 %v2445, %v2298
          %v2447 = vadd.f32 %v2446, %v2299
          %2448 = vadd.xlane.f32.xlu0 %v2447
          %v2449 = vpop.xlane.xlu0 %2448
          %v2450 = vadd.f32 %v2300, %v2301
          %v2451 = vadd.f32 %v2450, %v2302
          %v2452 = vadd.f32 %v2451, %v2303
          %v2453 = vadd.f32 %v2452, %v2304
          %v2454 = vadd.f32 %v2453, %v2305
          %2455 = vadd.xlane.f32.xlu0 %v2454
          %v2456 = vpop.xlane.xlu0 %2455
          %v2457 = vadd.f32 %v2306, %v2307
          %v2458 = vadd.f32 %v2457, %v2308
          %v2459 = vadd.f32 %v2458, %v2309
          %v2460 = vadd.f32 %v2459, %v2310
          %v2461 = vadd.f32 %v2460, %v2311
          %2462 = vadd.xlane.f32.xlu0 %v2461
          %v2463 = vpop.xlane.xlu0 %2462
          %v2464 = vadd.f32 %v2312, %v2313
          %v2465 = vadd.f32 %v2464, %v2314
          %v2466 = vadd.f32 %v2465, %v2315
          %v2467 = vadd.f32 %v2466, %v2316
          %v2468 = vadd.f32 %v2467, %v2317
          %2469 = vadd.xlane.f32.xlu0 %v2468
          %v2470 = vpop.xlane.xlu0 %2469
          %v2471 = vadd.f32 %v2318, %v2319
          %v2472 = vadd.f32 %v2471, %v2320
          %v2473 = vadd.f32 %v2472, %v2321
          %v2474 = vadd.f32 %v2473, %v2322
          %v2475 = vadd.f32 %v2474, %v2323
          %2476 = vadd.xlane.f32.xlu0 %v2475
          %v2477 = vpop.xlane.xlu0 %2476
          %v2478 = vadd.f32 %v2324, %v2325
          %v2479 = vadd.f32 %v2478, %v2326
          %v2480 = vadd.f32 %v2479, %v2327
          %v2481 = vadd.f32 %v2480, %v2328
          %v2482 = vadd.f32 %v2481, %v2329
          %2483 = vadd.xlane.f32.xlu0 %v2482
          %v2484 = vpop.xlane.xlu0 %2483
          %v2485 = vadd.f32 %v2330, %v2331
          %v2486 = vadd.f32 %v2485, %v2332
          %v2487 = vadd.f32 %v2486, %v2333
          %v2488 = vadd.f32 %v2487, %v2334
          %v2489 = vadd.f32 %v2488, %v2335
          %2490 = vadd.xlane.f32.xlu0 %v2489
          %v2491 = vpop.xlane.xlu0 %2490
          %v2492 = vadd.f32 %v2336, %v2337
          %v2493 = vadd.f32 %v2492, %v2338
          %v2494 = vadd.f32 %v2493, %v2339
          %v2495 = vadd.f32 %v2494, %v2340
          %v2496 = vadd.f32 %v2495, %v2341
          %2497 = vadd.xlane.f32.xlu0 %v2496
          %v2498 = vpop.xlane.xlu0 %2497
          %v2499 = vadd.f32 %v2342, %v2343
          %v2500 = vadd.f32 %v2499, %v2344
          %v2501 = vadd.f32 %v2500, %v2345
          %v2502 = vadd.f32 %v2501, %v2346
          %v2503 = vadd.f32 %v2502, %v2347
          %2504 = vadd.xlane.f32.xlu0 %v2503
          %v2505 = vpop.xlane.xlu0 %2504
          %v2506 = vadd.f32 %v2348, %v2349
          %v2507 = vadd.f32 %v2506, %v2350
          %v2508 = vadd.f32 %v2507, %v2351
          %v2509 = vadd.f32 %v2508, %v2352
          %v2510 = vadd.f32 %v2509, %v2353
          %2511 = vadd.xlane.f32.xlu0 %v2510
          %v2512 = vpop.xlane.xlu0 %2511
          %v2513 = vadd.f32 %v2354, %v2355
          %v2514 = vadd.f32 %v2513, %v2356
          %v2515 = vadd.f32 %v2514, %v2357
          %v2516 = vadd.f32 %v2515, %v2358
          %v2517 = vadd.f32 %v2516, %v2359
          %2518 = vadd.xlane.f32.xlu0 %v2517
          %v2519 = vpop.xlane.xlu0 %2518
          %v2520 = vadd.f32 %v2360, %v2361
          %v2521 = vadd.f32 %v2520, %v2362
          %v2522 = vadd.f32 %v2521, %v2363
          %v2523 = vadd.f32 %v2522, %v2364
          %v2524 = vadd.f32 %v2523, %v2365
          %2525 = vadd.xlane.f32.xlu0 %v2524
          %v2526 = vpop.xlane.xlu0 %2525
          %v2527 = vadd.f32 %v2366, %v2367
          %v2528 = vadd.f32 %v2527, %v2368
          %v2529 = vadd.f32 %v2528, %v2369
          %v2530 = vadd.f32 %v2529, %v2370
          %v2531 = vadd.f32 %v2530, %v2371
          %2532 = vadd.xlane.f32.xlu0 %v2531
          %v2533 = vpop.xlane.xlu0 %2532
          %v2534 = vadd.f32 %v2372, %v2373
          %v2535 = vadd.f32 %v2534, %v2374
          %v2536 = vadd.f32 %v2535, %v2375
          %v2537 = vadd.f32 %v2536, %v2376
          %v2538 = vadd.f32 %v2537, %v2377
          %2539 = vadd.xlane.f32.xlu0 %v2538
          %v2540 = vpop.xlane.xlu0 %2539
          %v2541 = vadd.f32 %v2378, %v2379
          %v2542 = vadd.f32 %v2541, %v2380
          %v2543 = vadd.f32 %v2542, %v2381
          %v2544 = vadd.f32 %v2543, %v2382
          %v2545 = vadd.f32 %v2544, %v2383
          %2546 = vadd.xlane.f32.xlu0 %v2545
          %v2547 = vpop.xlane.xlu0 %2546
          %v2548 = vadd.f32 %v2384, %v2385
          %v2549 = vadd.f32 %v2548, %v2386
          %v2550 = vadd.f32 %v2549, %v2387
          %v2551 = vadd.f32 %v2550, %v2388
          %v2552 = vadd.f32 %v2551, %v2389
          %2553 = vadd.xlane.f32.xlu0 %v2552
          %v2554 = vpop.xlane.xlu0 %2553
          %v2555 = vadd.f32 %v2390, %v2391
          %v2556 = vadd.f32 %v2555, %v2392
          %v2557 = vadd.f32 %v2556, %v2393
          %v2558 = vadd.f32 %v2557, %v2394
          %v2559 = vadd.f32 %v2558, %v2395
          %2560 = vadd.xlane.f32.xlu0 %v2559
          %v2561 = vpop.xlane.xlu0 %2560
          %v2562 = vadd.f32 %v2396, %v2397
          %v2563 = vadd.f32 %v2562, %v2398
          %v2564 = vadd.f32 %v2563, %v2399
          %v2565 = vadd.f32 %v2564, %v2400
          %v2566 = vadd.f32 %v2565, %v2401
          %2567 = vadd.xlane.f32.xlu0 %v2566
          %v2568 = vpop.xlane.xlu0 %2567
          %v2569 = vadd.f32 %v2402, %v2403
          %v2570 = vadd.f32 %v2569, %v2404
          %v2571 = vadd.f32 %v2570, %v2405
          %v2572 = vadd.f32 %v2571, %v2406
          %v2573 = vadd.f32 %v2572, %v2407
          %2574 = vadd.xlane.f32.xlu0 %v2573
          %v2575 = vpop.xlane.xlu0 %2574
          %v2576 = vmul.f32 %v2102, 0.0013020834
          %v2577 = vmul.f32 %v2109, 0.0013020834
          %v2578 = vmul.f32 %v2116, 0.0013020834
          %v2579 = vmul.f32 %v2123, 0.0013020834
          %v2580 = vmul.f32 %v2130, 0.0013020834
          %v2581 = vmul.f32 %v2137, 0.0013020834
          %v2582 = vmul.f32 %v2144, 0.0013020834
          %v2583 = vmul.f32 %v2151, 0.0013020834
          %v2584 = vmul.f32 %v2158, 0.0013020834
          %v2585 = vmul.f32 %v2165, 0.0013020834
          %v2586 = vmul.f32 %v2172, 0.0013020834
          %v2587 = vmul.f32 %v2179, 0.0013020834
          %v2588 = vmul.f32 %v2186, 0.0013020834
          %v2589 = vmul.f32 %v2193, 0.0013020834
          %v2590 = vmul.f32 %v2200, 0.0013020834
          %v2591 = vmul.f32 %v2207, 0.0013020834
          %v2592 = vmul.f32 %v2214, 0.0013020834
          %v2593 = vmul.f32 %v2221, 0.0013020834
          %v2594 = vmul.f32 %v2228, 0.0013020834
          %v2595 = vmul.f32 %v2235, 0.0013020834
          %v2596 = vmul.f32 %v2242, 0.0013020834
          %v2597 = vmul.f32 %v2249, 0.0013020834
          %v2598 = vmul.f32 %v2256, 0.0013020834
          %v2599 = vmul.f32 %v2263, 0.0013020834
          %v2600 = vmul.f32 %v2414, 0.0013020834
          %v2601 = vmul.f32 %v2421, 0.0013020834
          %v2602 = vmul.f32 %v2428, 0.0013020834
          %v2603 = vmul.f32 %v2435, 0.0013020834
          %v2604 = vmul.f32 %v2442, 0.0013020834
          %v2605 = vmul.f32 %v2449, 0.0013020834
          %v2606 = vmul.f32 %v2456, 0.0013020834
          %v2607 = vmul.f32 %v2463, 0.0013020834
          %v2608 = vmul.f32 %v2470, 0.0013020834
          %v2609 = vmul.f32 %v2477, 0.0013020834
          %v2610 = vmul.f32 %v2484, 0.0013020834
          %v2611 = vmul.f32 %v2491, 0.0013020834
          %v2612 = vmul.f32 %v2498, 0.0013020834
          %v2613 = vmul.f32 %v2505, 0.0013020834
          %v2614 = vmul.f32 %v2512, 0.0013020834
          %v2615 = vmul.f32 %v2519, 0.0013020834
          %v2616 = vmul.f32 %v2526, 0.0013020834
          %v2617 = vmul.f32 %v2533, 0.0013020834
          %v2618 = vmul.f32 %v2540, 0.0013020834
          %v2619 = vmul.f32 %v2547, 0.0013020834
          %v2620 = vmul.f32 %v2554, 0.0013020834
          %v2621 = vmul.f32 %v2561, 0.0013020834
          %v2622 = vmul.f32 %v2568, 0.0013020834
          %v2623 = vmul.f32 %v2575, 0.0013020834
          %v2624 = vmul.f32 %v2576, %v2576
          %v2625 = vmul.f32 %v2577, %v2577
          %v2626 = vmul.f32 %v2578, %v2578
          %v2627 = vmul.f32 %v2579, %v2579
          %v2628 = vmul.f32 %v2580, %v2580
          %v2629 = vmul.f32 %v2581, %v2581
          %v2630 = vmul.f32 %v2582, %v2582
          %v2631 = vmul.f32 %v2583, %v2583
          %v2632 = vmul.f32 %v2584, %v2584
          %v2633 = vmul.f32 %v2585, %v2585
          %v2634 = vmul.f32 %v2586, %v2586
          %v2635 = vmul.f32 %v2587, %v2587
          %v2636 = vmul.f32 %v2588, %v2588
          %v2637 = vmul.f32 %v2589, %v2589
          %v2638 = vmul.f32 %v2590, %v2590
          %v2639 = vmul.f32 %v2591, %v2591
          %v2640 = vmul.f32 %v2592, %v2592
          %v2641 = vmul.f32 %v2593, %v2593
          %v2642 = vmul.f32 %v2594, %v2594
          %v2643 = vmul.f32 %v2595, %v2595
          %v2644 = vmul.f32 %v2596, %v2596
          %v2645 = vmul.f32 %v2597, %v2597
          %v2646 = vmul.f32 %v2598, %v2598
          %v2647 = vmul.f32 %v2599, %v2599
          %v2648 = vsub.f32 %v2600, %v2624
          %v2649 = vsub.f32 %v2601, %v2625
          %v2650 = vsub.f32 %v2602, %v2626
          %v2651 = vsub.f32 %v2603, %v2627
          %v2652 = vsub.f32 %v2604, %v2628
          %v2653 = vsub.f32 %v2605, %v2629
          %v2654 = vsub.f32 %v2606, %v2630
          %v2655 = vsub.f32 %v2607, %v2631
          %v2656 = vsub.f32 %v2608, %v2632
          %v2657 = vsub.f32 %v2609, %v2633
          %v2658 = vsub.f32 %v2610, %v2634
          %v2659 = vsub.f32 %v2611, %v2635
          %v2660 = vsub.f32 %v2612, %v2636
          %v2661 = vsub.f32 %v2613, %v2637
          %v2662 = vsub.f32 %v2614, %v2638
          %v2663 = vsub.f32 %v2615, %v2639
          %v2664 = vsub.f32 %v2616, %v2640
          %v2665 = vsub.f32 %v2617, %v2641
          %v2666 = vsub.f32 %v2618, %v2642
          %v2667 = vsub.f32 %v2619, %v2643
          %v2668 = vsub.f32 %v2620, %v2644
          %v2669 = vsub.f32 %v2621, %v2645
          %v2670 = vsub.f32 %v2622, %v2646
          %v2671 = vsub.f32 %v2623, %v2647
          %v2672 = vsub.f32 %v1952, %v2576
          %v2673 = vsub.f32 %v1953, %v2576
          %v2674 = vsub.f32 %v1954, %v2576
          %v2675 = vsub.f32 %v1955, %v2576
          %v2676 = vsub.f32 %v1956, %v2576
          %v2677 = vsub.f32 %v1957, %v2576
          %v2678 = vsub.f32 %v1958, %v2577
          %v2679 = vsub.f32 %v1959, %v2577
          %v2680 = vsub.f32 %v1960, %v2577
          %v2681 = vsub.f32 %v1961, %v2577
          %v2682 = vsub.f32 %v1962, %v2577
          %v2683 = vsub.f32 %v1963, %v2577
          %v2684 = vsub.f32 %v1964, %v2578
          %v2685 = vsub.f32 %v1965, %v2578
          %v2686 = vsub.f32 %v1966, %v2578
          %v2687 = vsub.f32 %v1967, %v2578
          %v2688 = vsub.f32 %v1968, %v2578
          %v2689 = vsub.f32 %v1969, %v2578
          %v2690 = vsub.f32 %v1970, %v2579
          %v2691 = vsub.f32 %v1971, %v2579
          %v2692 = vsub.f32 %v1972, %v2579
          %v2693 = vsub.f32 %v1973, %v2579
          %v2694 = vsub.f32 %v1974, %v2579
          %v2695 = vsub.f32 %v1975, %v2579
          %v2696 = vsub.f32 %v1976, %v2580
          %v2697 = vsub.f32 %v1977, %v2580
          %v2698 = vsub.f32 %v1978, %v2580
          %v2699 = vsub.f32 %v1979, %v2580
          %v2700 = vsub.f32 %v1980, %v2580
          %v2701 = vsub.f32 %v1981, %v2580
          %v2702 = vsub.f32 %v1982, %v2581
          %v2703 = vsub.f32 %v1983, %v2581
          %v2704 = vsub.f32 %v1984, %v2581
          %v2705 = vsub.f32 %v1985, %v2581
          %v2706 = vsub.f32 %v1986, %v2581
          %v2707 = vsub.f32 %v1987, %v2581
          %v2708 = vsub.f32 %v1988, %v2582
          %v2709 = vsub.f32 %v1989, %v2582
          %v2710 = vsub.f32 %v1990, %v2582
          %v2711 = vsub.f32 %v1991, %v2582
          %v2712 = vsub.f32 %v1992, %v2582
          %v2713 = vsub.f32 %v1993, %v2582
          %v2714 = vsub.f32 %v1994, %v2583
          %v2715 = vsub.f32 %v1995, %v2583
          %v2716 = vsub.f32 %v1996, %v2583
          %v2717 = vsub.f32 %v1997, %v2583
          %v2718 = vsub.f32 %v1998, %v2583
          %v2719 = vsub.f32 %v1999, %v2583
          %v2720 = vsub.f32 %v2000, %v2584
          %v2721 = vsub.f32 %v2001, %v2584
          %v2722 = vsub.f32 %v2002, %v2584
          %v2723 = vsub.f32 %v2003, %v2584
          %v2724 = vsub.f32 %v2004, %v2584
          %v2725 = vsub.f32 %v2005, %v2584
          %v2726 = vsub.f32 %v2006, %v2585
          %v2727 = vsub.f32 %v2007, %v2585
          %v2728 = vsub.f32 %v2008, %v2585
          %v2729 = vsub.f32 %v2009, %v2585
          %v2730 = vsub.f32 %v2010, %v2585
          %v2731 = vsub.f32 %v2011, %v2585
          %v2732 = vsub.f32 %v2012, %v2586
          %v2733 = vsub.f32 %v2013, %v2586
          %v2734 = vsub.f32 %v2014, %v2586
          %v2735 = vsub.f32 %v2015, %v2586
          %v2736 = vsub.f32 %v2016, %v2586
          %v2737 = vsub.f32 %v2017, %v2586
          %v2738 = vsub.f32 %v2018, %v2587
          %v2739 = vsub.f32 %v2019, %v2587
          %v2740 = vsub.f32 %v2020, %v2587
          %v2741 = vsub.f32 %v2021, %v2587
          %v2742 = vsub.f32 %v2022, %v2587
          %v2743 = vsub.f32 %v2023, %v2587
          %v2744 = vsub.f32 %v2024, %v2588
          %v2745 = vsub.f32 %v2025, %v2588
          %v2746 = vsub.f32 %v2026, %v2588
          %v2747 = vsub.f32 %v2027, %v2588
          %v2748 = vsub.f32 %v2028, %v2588
          %v2749 = vsub.f32 %v2029, %v2588
          %v2750 = vsub.f32 %v2030, %v2589
          %v2751 = vsub.f32 %v2031, %v2589
          %v2752 = vsub.f32 %v2032, %v2589
          %v2753 = vsub.f32 %v2033, %v2589
          %v2754 = vsub.f32 %v2034, %v2589
          %v2755 = vsub.f32 %v2035, %v2589
          %v2756 = vsub.f32 %v2036, %v2590
          %v2757 = vsub.f32 %v2037, %v2590
          %v2758 = vsub.f32 %v2038, %v2590
          %v2759 = vsub.f32 %v2039, %v2590
          %v2760 = vsub.f32 %v2040, %v2590
          %v2761 = vsub.f32 %v2041, %v2590
          %v2762 = vsub.f32 %v2042, %v2591
          %v2763 = vsub.f32 %v2043, %v2591
          %v2764 = vsub.f32 %v2044, %v2591
          %v2765 = vsub.f32 %v2045, %v2591
          %v2766 = vsub.f32 %v2046, %v2591
          %v2767 = vsub.f32 %v2047, %v2591
          %v2768 = vsub.f32 %v2048, %v2592
          %v2769 = vsub.f32 %v2049, %v2592
          %v2770 = vsub.f32 %v2050, %v2592
          %v2771 = vsub.f32 %v2051, %v2592
          %v2772 = vsub.f32 %v2052, %v2592
          %v2773 = vsub.f32 %v2053, %v2592
          %v2774 = vsub.f32 %v2054, %v2593
          %v2775 = vsub.f32 %v2055, %v2593
          %v2776 = vsub.f32 %v2056, %v2593
          %v2777 = vsub.f32 %v2057, %v2593
          %v2778 = vsub.f32 %v2058, %v2593
          %v2779 = vsub.f32 %v2059, %v2593
          %v2780 = vsub.f32 %v2060, %v2594
          %v2781 = vsub.f32 %v2061, %v2594
          %v2782 = vsub.f32 %v2062, %v2594
          %v2783 = vsub.f32 %v2063, %v2594
          %v2784 = vsub.f32 %v2064, %v2594
          %v2785 = vsub.f32 %v2065, %v2594
          %v2786 = vsub.f32 %v2066, %v2595
          %v2787 = vsub.f32 %v2067, %v2595
          %v2788 = vsub.f32 %v2068, %v2595
          %v2789 = vsub.f32 %v2069, %v2595
          %v2790 = vsub.f32 %v2070, %v2595
          %v2791 = vsub.f32 %v2071, %v2595
          %v2792 = vsub.f32 %v2072, %v2596
          %v2793 = vsub.f32 %v2073, %v2596
          %v2794 = vsub.f32 %v2074, %v2596
          %v2795 = vsub.f32 %v2075, %v2596
          %v2796 = vsub.f32 %v2076, %v2596
          %v2797 = vsub.f32 %v2077, %v2596
          %v2798 = vsub.f32 %v2078, %v2597
          %v2799 = vsub.f32 %v2079, %v2597
          %v2800 = vsub.f32 %v2080, %v2597
          %v2801 = vsub.f32 %v2081, %v2597
          %v2802 = vsub.f32 %v2082, %v2597
          %v2803 = vsub.f32 %v2083, %v2597
          %v2804 = vsub.f32 %v2084, %v2598
          %v2805 = vsub.f32 %v2085, %v2598
          %v2806 = vsub.f32 %v2086, %v2598
          %v2807 = vsub.f32 %v2087, %v2598
          %v2808 = vsub.f32 %v2088, %v2598
          %v2809 = vsub.f32 %v2089, %v2598
          %v2810 = vsub.f32 %v2090, %v2599
          %v2811 = vsub.f32 %v2091, %v2599
          %v2812 = vsub.f32 %v2092, %v2599
          %v2813 = vsub.f32 %v2093, %v2599
          %v2814 = vsub.f32 %v2094, %v2599
          %v2815 = vsub.f32 %v2095, %v2599
          %v2816 = vadd.f32 %v2648, 1e-12
          %v2817 = vadd.f32 %v2649, 1e-12
          %v2818 = vadd.f32 %v2650, 1e-12
          %v2819 = vadd.f32 %v2651, 1e-12
          %v2820 = vadd.f32 %v2652, 1e-12
          %v2821 = vadd.f32 %v2653, 1e-12
          %v2822 = vadd.f32 %v2654, 1e-12
          %v2823 = vadd.f32 %v2655, 1e-12
          %v2824 = vadd.f32 %v2656, 1e-12
          %v2825 = vadd.f32 %v2657, 1e-12
          %v2826 = vadd.f32 %v2658, 1e-12
          %v2827 = vadd.f32 %v2659, 1e-12
          %v2828 = vadd.f32 %v2660, 1e-12
          %v2829 = vadd.f32 %v2661, 1e-12
          %v2830 = vadd.f32 %v2662, 1e-12
          %v2831 = vadd.f32 %v2663, 1e-12
          %v2832 = vadd.f32 %v2664, 1e-12
          %v2833 = vadd.f32 %v2665, 1e-12
          %v2834 = vadd.f32 %v2666, 1e-12
          %v2835 = vadd.f32 %v2667, 1e-12
          %v2836 = vadd.f32 %v2668, 1e-12
          %v2837 = vadd.f32 %v2669, 1e-12
          %v2838 = vadd.f32 %v2670, 1e-12
          %v2839 = vadd.f32 %v2671, 1e-12
          %v2840 = vrsqrt.pop %v2816
          %v2841 = vrsqrt.pop %v2817
          %v2842 = vrsqrt.pop %v2818
          %v2843 = vrsqrt.pop %v2819
          %v2844 = vrsqrt.pop %v2820
          %v2845 = vrsqrt.pop %v2821
          %v2846 = vrsqrt.pop %v2822
          %v2847 = vrsqrt.pop %v2823
          %v2848 = vrsqrt.pop %v2824
          %v2849 = vrsqrt.pop %v2825
          %v2850 = vrsqrt.pop %v2826
          %v2851 = vrsqrt.pop %v2827
          %v2852 = vrsqrt.pop %v2828
          %v2853 = vrsqrt.pop %v2829
          %v2854 = vrsqrt.pop %v2830
          %v2855 = vrsqrt.pop %v2831
          %v2856 = vrsqrt.pop %v2832
          %v2857 = vrsqrt.pop %v2833
          %v2858 = vrsqrt.pop %v2834
          %v2859 = vrsqrt.pop %v2835
          %v2860 = vrsqrt.pop %v2836
          %v2861 = vrsqrt.pop %v2837
          %v2862 = vrsqrt.pop %v2838
          %v2863 = vrsqrt.pop %v2839
          %v2864 = vmul.f32 %v2672, %v2840
          %v2865 = vmul.f32 %v2673, %v2840
          %v2866 = vmul.f32 %v2674, %v2840
          %v2867 = vmul.f32 %v2675, %v2840
          %v2868 = vmul.f32 %v2676, %v2840
          %v2869 = vmul.f32 %v2677, %v2840
          %v2870 = vmul.f32 %v2678, %v2841
          %v2871 = vmul.f32 %v2679, %v2841
          %v2872 = vmul.f32 %v2680, %v2841
          %v2873 = vmul.f32 %v2681, %v2841
          %v2874 = vmul.f32 %v2682, %v2841
          %v2875 = vmul.f32 %v2683, %v2841
          %v2876 = vmul.f32 %v2684, %v2842
          %v2877 = vmul.f32 %v2685, %v2842
          %v2878 = vmul.f32 %v2686, %v2842
          %v2879 = vmul.f32 %v2687, %v2842
          %v2880 = vmul.f32 %v2688, %v2842
          %v2881 = vmul.f32 %v2689, %v2842
          %v2882 = vmul.f32 %v2690, %v2843
          %v2883 = vmul.f32 %v2691, %v2843
          %v2884 = vmul.f32 %v2692, %v2843
          %v2885 = vmul.f32 %v2693, %v2843
          %v2886 = vmul.f32 %v2694, %v2843
          %v2887 = vmul.f32 %v2695, %v2843
          %v2888 = vmul.f32 %v2696, %v2844
          %v2889 = vmul.f32 %v2697, %v2844
          %v2890 = vmul.f32 %v2698, %v2844
          %v2891 = vmul.f32 %v2699, %v2844
          %v2892 = vmul.f32 %v2700, %v2844
          %v2893 = vmul.f32 %v2701, %v2844
          %v2894 = vmul.f32 %v2702, %v2845
          %v2895 = vmul.f32 %v2703, %v2845
          %v2896 = vmul.f32 %v2704, %v2845
          %v2897 = vmul.f32 %v2705, %v2845
          %v2898 = vmul.f32 %v2706, %v2845
          %v2899 = vmul.f32 %v2707, %v2845
          %v2900 = vmul.f32 %v2708, %v2846
          %v2901 = vmul.f32 %v2709, %v2846
          %v2902 = vmul.f32 %v2710, %v2846
          %v2903 = vmul.f32 %v2711, %v2846
          %v2904 = vmul.f32 %v2712, %v2846
          %v2905 = vmul.f32 %v2713, %v2846
          %v2906 = vmul.f32 %v2714, %v2847
          %v2907 = vmul.f32 %v2715, %v2847
          %v2908 = vmul.f32 %v2716, %v2847
          %v2909 = vmul.f32 %v2717, %v2847
          %v2910 = vmul.f32 %v2718, %v2847
          %v2911 = vmul.f32 %v2719, %v2847
          %v2912 = vmul.f32 %v2720, %v2848
          %v2913 = vmul.f32 %v2721, %v2848
          %v2914 = vmul.f32 %v2722, %v2848
          %v2915 = vmul.f32 %v2723, %v2848
          %v2916 = vmul.f32 %v2724, %v2848
          %v2917 = vmul.f32 %v2725, %v2848
          %v2918 = vmul.f32 %v2726, %v2849
          %v2919 = vmul.f32 %v2727, %v2849
          %v2920 = vmul.f32 %v2728, %v2849
          %v2921 = vmul.f32 %v2729, %v2849
          %v2922 = vmul.f32 %v2730, %v2849
          %v2923 = vmul.f32 %v2731, %v2849
          %v2924 = vmul.f32 %v2732, %v2850
          %v2925 = vmul.f32 %v2733, %v2850
          %v2926 = vmul.f32 %v2734, %v2850
          %v2927 = vmul.f32 %v2735, %v2850
          %v2928 = vmul.f32 %v2736, %v2850
          %v2929 = vmul.f32 %v2737, %v2850
          %v2930 = vmul.f32 %v2738, %v2851
          %v2931 = vmul.f32 %v2739, %v2851
          %v2932 = vmul.f32 %v2740, %v2851
          %v2933 = vmul.f32 %v2741, %v2851
          %v2934 = vmul.f32 %v2742, %v2851
          %v2935 = vmul.f32 %v2743, %v2851
          %v2936 = vmul.f32 %v2744, %v2852
          %v2937 = vmul.f32 %v2745, %v2852
          %v2938 = vmul.f32 %v2746, %v2852
          %v2939 = vmul.f32 %v2747, %v2852
          %v2940 = vmul.f32 %v2748, %v2852
          %v2941 = vmul.f32 %v2749, %v2852
          %v2942 = vmul.f32 %v2750, %v2853
          %v2943 = vmul.f32 %v2751, %v2853
          %v2944 = vmul.f32 %v2752, %v2853
          %v2945 = vmul.f32 %v2753, %v2853
          %v2946 = vmul.f32 %v2754, %v2853
          %v2947 = vmul.f32 %v2755, %v2853
          %v2948 = vmul.f32 %v2756, %v2854
          %v2949 = vmul.f32 %v2757, %v2854
          %v2950 = vmul.f32 %v2758, %v2854
          %v2951 = vmul.f32 %v2759, %v2854
          %v2952 = vmul.f32 %v2760, %v2854
          %v2953 = vmul.f32 %v2761, %v2854
          %v2954 = vmul.f32 %v2762, %v2855
          %v2955 = vmul.f32 %v2763, %v2855
          %v2956 = vmul.f32 %v2764, %v2855
          %v2957 = vmul.f32 %v2765, %v2855
          %v2958 = vmul.f32 %v2766, %v2855
          %v2959 = vmul.f32 %v2767, %v2855
          %v2960 = vmul.f32 %v2768, %v2856
          %v2961 = vmul.f32 %v2769, %v2856
          %v2962 = vmul.f32 %v2770, %v2856
          %v2963 = vmul.f32 %v2771, %v2856
          %v2964 = vmul.f32 %v2772, %v2856
          %v2965 = vmul.f32 %v2773, %v2856
          %v2966 = vmul.f32 %v2774, %v2857
          %v2967 = vmul.f32 %v2775, %v2857
          %v2968 = vmul.f32 %v2776, %v2857
          %v2969 = vmul.f32 %v2777, %v2857
          %v2970 = vmul.f32 %v2778, %v2857
          %v2971 = vmul.f32 %v2779, %v2857
          %v2972 = vmul.f32 %v2780, %v2858
          %v2973 = vmul.f32 %v2781, %v2858
          %v2974 = vmul.f32 %v2782, %v2858
          %v2975 = vmul.f32 %v2783, %v2858
          %v2976 = vmul.f32 %v2784, %v2858
          %v2977 = vmul.f32 %v2785, %v2858
          %v2978 = vmul.f32 %v2786, %v2859
          %v2979 = vmul.f32 %v2787, %v2859
          %v2980 = vmul.f32 %v2788, %v2859
          %v2981 = vmul.f32 %v2789, %v2859
          %v2982 = vmul.f32 %v2790, %v2859
          %v2983 = vmul.f32 %v2791, %v2859
          %v2984 = vmul.f32 %v2792, %v2860
          %v2985 = vmul.f32 %v2793, %v2860
          %v2986 = vmul.f32 %v2794, %v2860
          %v2987 = vmul.f32 %v2795, %v2860
          %v2988 = vmul.f32 %v2796, %v2860
          %v2989 = vmul.f32 %v2797, %v2860
          %v2990 = vmul.f32 %v2798, %v2861
          %v2991 = vmul.f32 %v2799, %v2861
          %v2992 = vmul.f32 %v2800, %v2861
          %v2993 = vmul.f32 %v2801, %v2861
          %v2994 = vmul.f32 %v2802, %v2861
          %v2995 = vmul.f32 %v2803, %v2861
          %v2996 = vmul.f32 %v2804, %v2862
          %v2997 = vmul.f32 %v2805, %v2862
          %v2998 = vmul.f32 %v2806, %v2862
          %v2999 = vmul.f32 %v2807, %v2862
          %v3000 = vmul.f32 %v2808, %v2862
          %v3001 = vmul.f32 %v2809, %v2862
          %v3002 = vmul.f32 %v2810, %v2863
          %v3003 = vmul.f32 %v2811, %v2863
          %v3004 = vmul.f32 %v2812, %v2863
          %v3005 = vmul.f32 %v2813, %v2863
          %v3006 = vmul.f32 %v2814, %v2863
          %v3007 = vmul.f32 %v2815, %v2863
          %v3008 = vlaneseq
          %v3009 = vshrl.u32 %v3008, 7
          %v3010 = vadd.s32 %v3009, 8
          %v3011 = vadd.s32 %v3009, 16
          %v3012 = vadd.s32 %v3009, 24
          %v3013 = vadd.s32 %v3009, 32
          %v3014 = vadd.s32 %v3009, 40
          %v3015 = vstv %s397
          %v3016 = vadd.s32 %v3015, %v3009
          %v3017 = vadd.s32 %v3015, %v3010
          %v3018 = vadd.s32 %v3015, %v3011
          %v3019 = vadd.s32 %v3015, %v3012
          %v3020 = vadd.s32 %v3015, %v3013
          %v3021 = vadd.s32 %v3015, %v3014
          %vm3022 = vcmp.lt.s32.totalorder %v3016, 60
          %vm3023 = vcmp.lt.s32.totalorder %v3017, 60
          %vm3024 = vcmp.lt.s32.totalorder %v3018, 60
          %vm3025 = vcmp.lt.s32.totalorder %v3019, 60
          %vm3026 = vcmp.lt.s32.totalorder %v3020, 60
          %vm3027 = vcmp.lt.s32.totalorder %v3021, 60
          %v3028 = vsel %vm3022, %v2864, -inf
          %v3029 = vsel %vm3022, %v2865, -inf
          %v3030 = vsel %vm3022, %v2866, -inf
          %v3031 = vsel %vm3022, %v2867, -inf
          %v3032 = vsel %vm3022, %v2868, -inf
          %v3033 = vsel %vm3022, %v2869, -inf
          %v3034 = vsel %vm3023, %v2870, -inf
          %v3035 = vsel %vm3023, %v2871, -inf
          %v3036 = vsel %vm3023, %v2872, -inf
          %v3037 = vsel %vm3023, %v2873, -inf
          %v3038 = vsel %vm3023, %v2874, -inf
          %v3039 = vsel %vm3023, %v2875, -inf
          %v3040 = vsel %vm3024, %v2876, -inf
          %v3041 = vsel %vm3024, %v2877, -inf
          %v3042 = vsel %vm3024, %v2878, -inf
          %v3043 = vsel %vm3024, %v2879, -inf
          %v3044 = vsel %vm3024, %v2880, -inf
          %v3045 = vsel %vm3024, %v2881, -inf
          %v3046 = vsel %vm3025, %v2882, -inf
          %v3047 = vsel %vm3025, %v2883, -inf
          %v3048 = vsel %vm3025, %v2884, -inf
          %v3049 = vsel %vm3025, %v2885, -inf
          %v3050 = vsel %vm3025, %v2886, -inf
          %v3051 = vsel %vm3025, %v2887, -inf
          %v3052 = vsel %vm3026, %v2888, -inf
          %v3053 = vsel %vm3026, %v2889, -inf
          %v3054 = vsel %vm3026, %v2890, -inf
          %v3055 = vsel %vm3026, %v2891, -inf
          %v3056 = vsel %vm3026, %v2892, -inf
          %v3057 = vsel %vm3026, %v2893, -inf
          %v3058 = vsel %vm3027, %v2894, -inf
          %v3059 = vsel %vm3027, %v2895, -inf
          %v3060 = vsel %vm3027, %v2896, -inf
          %v3061 = vsel %vm3027, %v2897, -inf
          %v3062 = vsel %vm3027, %v2898, -inf
          %v3063 = vsel %vm3027, %v2899, -inf
          %v3064 = vsel %vm3022, %v2900, -inf
          %v3065 = vsel %vm3022, %v2901, -inf
          %v3066 = vsel %vm3022, %v2902, -inf
          %v3067 = vsel %vm3022, %v2903, -inf
          %v3068 = vsel %vm3022, %v2904, -inf
          %v3069 = vsel %vm3022, %v2905, -inf
          %v3070 = vsel %vm3023, %v2906, -inf
          %v3071 = vsel %vm3023, %v2907, -inf
          %v3072 = vsel %vm3023, %v2908, -inf
          %v3073 = vsel %vm3023, %v2909, -inf
          %v3074 = vsel %vm3023, %v2910, -inf
          %v3075 = vsel %vm3023, %v2911, -inf
          %v3076 = vsel %vm3024, %v2912, -inf
          %v3077 = vsel %vm3024, %v2913, -inf
          %v3078 = vsel %vm3024, %v2914, -inf
          %v3079 = vsel %vm3024, %v2915, -inf
          %v3080 = vsel %vm3024, %v2916, -inf
          %v3081 = vsel %vm3024, %v2917, -inf
          %v3082 = vsel %vm3025, %v2918, -inf
          %v3083 = vsel %vm3025, %v2919, -inf
          %v3084 = vsel %vm3025, %v2920, -inf
          %v3085 = vsel %vm3025, %v2921, -inf
          %v3086 = vsel %vm3025, %v2922, -inf
          %v3087 = vsel %vm3025, %v2923, -inf
          %v3088 = vsel %vm3026, %v2924, -inf
          %v3089 = vsel %vm3026, %v2925, -inf
          %v3090 = vsel %vm3026, %v2926, -inf
          %v3091 = vsel %vm3026, %v2927, -inf
          %v3092 = vsel %vm3026, %v2928, -inf
          %v3093 = vsel %vm3026, %v2929, -inf
          %v3094 = vsel %vm3027, %v2930, -inf
          %v3095 = vsel %vm3027, %v2931, -inf
          %v3096 = vsel %vm3027, %v2932, -inf
          %v3097 = vsel %vm3027, %v2933, -inf
          %v3098 = vsel %vm3027, %v2934, -inf
          %v3099 = vsel %vm3027, %v2935, -inf
          %v3100 = vsel %vm3022, %v2936, -inf
          %v3101 = vsel %vm3022, %v2937, -inf
          %v3102 = vsel %vm3022, %v2938, -inf
          %v3103 = vsel %vm3022, %v2939, -inf
          %v3104 = vsel %vm3022, %v2940, -inf
          %v3105 = vsel %vm3022, %v2941, -inf
          %v3106 = vsel %vm3023, %v2942, -inf
          %v3107 = vsel %vm3023, %v2943, -inf
          %v3108 = vsel %vm3023, %v2944, -inf
          %v3109 = vsel %vm3023, %v2945, -inf
          %v3110 = vsel %vm3023, %v2946, -inf
          %v3111 = vsel %vm3023, %v2947, -inf
          %v3112 = vsel %vm3024, %v2948, -inf
          %v3113 = vsel %vm3024, %v2949, -inf
          %v3114 = vsel %vm3024, %v2950, -inf
          %v3115 = vsel %vm3024, %v2951, -inf
          %v3116 = vsel %vm3024, %v2952, -inf
          %v3117 = vsel %vm3024, %v2953, -inf
          %v3118 = vsel %vm3025, %v2954, -inf
          %v3119 = vsel %vm3025, %v2955, -inf
          %v3120 = vsel %vm3025, %v2956, -inf
          %v3121 = vsel %vm3025, %v2957, -inf
          %v3122 = vsel %vm3025, %v2958, -inf
          %v3123 = vsel %vm3025, %v2959, -inf
          %v3124 = vsel %vm3026, %v2960, -inf
          %v3125 = vsel %vm3026, %v2961, -inf
          %v3126 = vsel %vm3026, %v2962, -inf
          %v3127 = vsel %vm3026, %v2963, -inf
          %v3128 = vsel %vm3026, %v2964, -inf
          %v3129 = vsel %vm3026, %v2965, -inf
          %v3130 = vsel %vm3027, %v2966, -inf
          %v3131 = vsel %vm3027, %v2967, -inf
          %v3132 = vsel %vm3027, %v2968, -inf
          %v3133 = vsel %vm3027, %v2969, -inf
          %v3134 = vsel %vm3027, %v2970, -inf
          %v3135 = vsel %vm3027, %v2971, -inf
          %v3136 = vsel %vm3022, %v2972, -inf
          %v3137 = vsel %vm3022, %v2973, -inf
          %v3138 = vsel %vm3022, %v2974, -inf
          %v3139 = vsel %vm3022, %v2975, -inf
          %v3140 = vsel %vm3022, %v2976, -inf
          %v3141 = vsel %vm3022, %v2977, -inf
          %v3142 = vsel %vm3023, %v2978, -inf
          %v3143 = vsel %vm3023, %v2979, -inf
          %v3144 = vsel %vm3023, %v2980, -inf
          %v3145 = vsel %vm3023, %v2981, -inf
          %v3146 = vsel %vm3023, %v2982, -inf
          %v3147 = vsel %vm3023, %v2983, -inf
          %v3148 = vsel %vm3024, %v2984, -inf
          %v3149 = vsel %vm3024, %v2985, -inf
          %v3150 = vsel %vm3024, %v2986, -inf
          %v3151 = vsel %vm3024, %v2987, -inf
          %v3152 = vsel %vm3024, %v2988, -inf
          %v3153 = vsel %vm3024, %v2989, -inf
          %v3154 = vsel %vm3025, %v2990, -inf
          %v3155 = vsel %vm3025, %v2991, -inf
          %v3156 = vsel %vm3025, %v2992, -inf
          %v3157 = vsel %vm3025, %v2993, -inf
          %v3158 = vsel %vm3025, %v2994, -inf
          %v3159 = vsel %vm3025, %v2995, -inf
          %v3160 = vsel %vm3026, %v2996, -inf
          %v3161 = vsel %vm3026, %v2997, -inf
          %v3162 = vsel %vm3026, %v2998, -inf
          %v3163 = vsel %vm3026, %v2999, -inf
          %v3164 = vsel %vm3026, %v3000, -inf
          %v3165 = vsel %vm3026, %v3001, -inf
          %v3166 = vsel %vm3027, %v3002, -inf
          %v3167 = vsel %vm3027, %v3003, -inf
          %v3168 = vsel %vm3027, %v3004, -inf
          %v3169 = vsel %vm3027, %v3005, -inf
          %v3170 = vsel %vm3027, %v3006, -inf
          %v3171 = vsel %vm3027, %v3007, -inf
          %v3172 = vld [vmem:[%s388] sm:$0xff]
          %v3173 = vld [vmem:[%s388 + $0x8] sm:$0xff]
          %v3174 = vld [vmem:[%s388 + $0x10] sm:$0xff]
          %v3175 = vmax.f32 %v3028, %v3034
          %v3176 = vmax.f32 %v3175, %v3040
          %v3177 = vmax.f32 %v3176, %v3046
          %v3178 = vmax.f32 %v3177, %v3052
          %v3179 = vmax.f32 %v3178, %v3058
          %v3180 = vrot.slane %v3179, 4
          %v3181 = vmax.f32 %v3179, %v3180
          %v3182 = vrot.slane %v3181, 2
          %v3183 = vmax.f32 %v3181, %v3182
          %v3184 = vrot.slane %v3183, 1
          %v3185 = vmax.f32 %v3183, %v3184
          %v3186 = vmax.f32 %v3029, %v3035
          %v3187 = vmax.f32 %v3186, %v3041
          %v3188 = vmax.f32 %v3187, %v3047
          %v3189 = vmax.f32 %v3188, %v3053
          %v3190 = vmax.f32 %v3189, %v3059
          %v3191 = vrot.slane %v3190, 4
          %v3192 = vmax.f32 %v3190, %v3191
          %v3193 = vrot.slane %v3192, 2
          %v3194 = vmax.f32 %v3192, %v3193
          %v3195 = vrot.slane %v3194, 1
          %v3196 = vmax.f32 %v3194, %v3195
          %v3197 = vmax.f32 %v3030, %v3036
          %v3198 = vmax.f32 %v3197, %v3042
          %v3199 = vmax.f32 %v3198, %v3048
          %v3200 = vmax.f32 %v3199, %v3054
          %v3201 = vmax.f32 %v3200, %v3060
          %v3202 = vrot.slane %v3201, 4
          %v3203 = vmax.f32 %v3201, %v3202
          %v3204 = vrot.slane %v3203, 2
          %v3205 = vmax.f32 %v3203, %v3204
          %v3206 = vrot.slane %v3205, 1
          %v3207 = vmax.f32 %v3205, %v3206
          %v3208 = vmax.f32 %v3031, %v3037
          %v3209 = vmax.f32 %v3208, %v3043
          %v3210 = vmax.f32 %v3209, %v3049
          %v3211 = vmax.f32 %v3210, %v3055
          %v3212 = vmax.f32 %v3211, %v3061
          %v3213 = vrot.slane %v3212, 4
          %v3214 = vmax.f32 %v3212, %v3213
          %v3215 = vrot.slane %v3214, 2
          %v3216 = vmax.f32 %v3214, %v3215
          %v3217 = vrot.slane %v3216, 1
          %v3218 = vmax.f32 %v3216, %v3217
          %v3219 = vmax.f32 %v3032, %v3038
          %v3220 = vmax.f32 %v3219, %v3044
          %v3221 = vmax.f32 %v3220, %v3050
          %v3222 = vmax.f32 %v3221, %v3056
          %v3223 = vmax.f32 %v3222, %v3062
          %v3224 = vrot.slane %v3223, 4
          %v3225 = vmax.f32 %v3223, %v3224
          %v3226 = vrot.slane %v3225, 2
          %v3227 = vmax.f32 %v3225, %v3226
          %v3228 = vrot.slane %v3227, 1
          %v3229 = vmax.f32 %v3227, %v3228
          %v3230 = vmax.f32 %v3033, %v3039
          %v3231 = vmax.f32 %v3230, %v3045
          %v3232 = vmax.f32 %v3231, %v3051
          %v3233 = vmax.f32 %v3232, %v3057
          %v3234 = vmax.f32 %v3233, %v3063
          %v3235 = vrot.slane %v3234, 4
          %v3236 = vmax.f32 %v3234, %v3235
          %v3237 = vrot.slane %v3236, 2
          %v3238 = vmax.f32 %v3236, %v3237
          %v3239 = vrot.slane %v3238, 1
          %v3240 = vmax.f32 %v3238, %v3239
          %v3241 = vmax.f32 %v3064, %v3070
          %v3242 = vmax.f32 %v3241, %v3076
          %v3243 = vmax.f32 %v3242, %v3082
          %v3244 = vmax.f32 %v3243, %v3088
          %v3245 = vmax.f32 %v3244, %v3094
          %v3246 = vrot.slane %v3245, 4
          %v3247 = vmax.f32 %v3245, %v3246
          %v3248 = vrot.slane %v3247, 2
          %v3249 = vmax.f32 %v3247, %v3248
          %v3250 = vrot.slane %v3249, 1
          %v3251 = vmax.f32 %v3249, %v3250
          %v3252 = vmax.f32 %v3065, %v3071
          %v3253 = vmax.f32 %v3252, %v3077
          %v3254 = vmax.f32 %v3253, %v3083
          %v3255 = vmax.f32 %v3254, %v3089
          %v3256 = vmax.f32 %v3255, %v3095
          %v3257 = vrot.slane %v3256, 4
          %v3258 = vmax.f32 %v3256, %v3257
          %v3259 = vrot.slane %v3258, 2
          %v3260 = vmax.f32 %v3258, %v3259
          %v3261 = vrot.slane %v3260, 1
          %v3262 = vmax.f32 %v3260, %v3261
          %v3263 = vmax.f32 %v3066, %v3072
          %v3264 = vmax.f32 %v3263, %v3078
          %v3265 = vmax.f32 %v3264, %v3084
          %v3266 = vmax.f32 %v3265, %v3090
          %v3267 = vmax.f32 %v3266, %v3096
          %v3268 = vrot.slane %v3267, 4
          %v3269 = vmax.f32 %v3267, %v3268
          %v3270 = vrot.slane %v3269, 2
          %v3271 = vmax.f32 %v3269, %v3270
          %v3272 = vrot.slane %v3271, 1
          %v3273 = vmax.f32 %v3271, %v3272
          %v3274 = vmax.f32 %v3067, %v3073
          %v3275 = vmax.f32 %v3274, %v3079
          %v3276 = vmax.f32 %v3275, %v3085
          %v3277 = vmax.f32 %v3276, %v3091
          %v3278 = vmax.f32 %v3277, %v3097
          %v3279 = vrot.slane %v3278, 4
          %v3280 = vmax.f32 %v3278, %v3279
          %v3281 = vrot.slane %v3280, 2
          %v3282 = vmax.f32 %v3280, %v3281
          %v3283 = vrot.slane %v3282, 1
          %v3284 = vmax.f32 %v3282, %v3283
          %v3285 = vmax.f32 %v3068, %v3074
          %v3286 = vmax.f32 %v3285, %v3080
          %v3287 = vmax.f32 %v3286, %v3086
          %v3288 = vmax.f32 %v3287, %v3092
          %v3289 = vmax.f32 %v3288, %v3098
          %v3290 = vrot.slane %v3289, 4
          %v3291 = vmax.f32 %v3289, %v3290
          %v3292 = vrot.slane %v3291, 2
          %v3293 = vmax.f32 %v3291, %v3292
          %v3294 = vrot.slane %v3293, 1
          %v3295 = vmax.f32 %v3293, %v3294
          %v3296 = vmax.f32 %v3069, %v3075
          %v3297 = vmax.f32 %v3296, %v3081
          %v3298 = vmax.f32 %v3297, %v3087
          %v3299 = vmax.f32 %v3298, %v3093
          %v3300 = vmax.f32 %v3299, %v3099
          %v3301 = vrot.slane %v3300, 4
          %v3302 = vmax.f32 %v3300, %v3301
          %v3303 = vrot.slane %v3302, 2
          %v3304 = vmax.f32 %v3302, %v3303
          %v3305 = vrot.slane %v3304, 1
          %v3306 = vmax.f32 %v3304, %v3305
          %v3307 = vmax.f32 %v3100, %v3106
          %v3308 = vmax.f32 %v3307, %v3112
          %v3309 = vmax.f32 %v3308, %v3118
          %v3310 = vmax.f32 %v3309, %v3124
          %v3311 = vmax.f32 %v3310, %v3130
          %v3312 = vrot.slane %v3311, 4
          %v3313 = vmax.f32 %v3311, %v3312
          %v3314 = vrot.slane %v3313, 2
          %v3315 = vmax.f32 %v3313, %v3314
          %v3316 = vrot.slane %v3315, 1
          %v3317 = vmax.f32 %v3315, %v3316
          %v3318 = vmax.f32 %v3101, %v3107
          %v3319 = vmax.f32 %v3318, %v3113
          %v3320 = vmax.f32 %v3319, %v3119
          %v3321 = vmax.f32 %v3320, %v3125
          %v3322 = vmax.f32 %v3321, %v3131
          %v3323 = vrot.slane %v3322, 4
          %v3324 = vmax.f32 %v3322, %v3323
          %v3325 = vrot.slane %v3324, 2
          %v3326 = vmax.f32 %v3324, %v3325
          %v3327 = vrot.slane %v3326, 1
          %v3328 = vmax.f32 %v3326, %v3327
          %v3329 = vmax.f32 %v3102, %v3108
          %v3330 = vmax.f32 %v3329, %v3114
          %v3331 = vmax.f32 %v3330, %v3120
          %v3332 = vmax.f32 %v3331, %v3126
          %v3333 = vmax.f32 %v3332, %v3132
          %v3334 = vrot.slane %v3333, 4
          %v3335 = vmax.f32 %v3333, %v3334
          %v3336 = vrot.slane %v3335, 2
          %v3337 = vmax.f32 %v3335, %v3336
          %v3338 = vrot.slane %v3337, 1
          %v3339 = vmax.f32 %v3337, %v3338
          %v3340 = vmax.f32 %v3103, %v3109
          %v3341 = vmax.f32 %v3340, %v3115
          %v3342 = vmax.f32 %v3341, %v3121
          %v3343 = vmax.f32 %v3342, %v3127
          %v3344 = vmax.f32 %v3343, %v3133
          %v3345 = vrot.slane %v3344, 4
          %v3346 = vmax.f32 %v3344, %v3345
          %v3347 = vrot.slane %v3346, 2
          %v3348 = vmax.f32 %v3346, %v3347
          %v3349 = vrot.slane %v3348, 1
          %v3350 = vmax.f32 %v3348, %v3349
          %v3351 = vmax.f32 %v3104, %v3110
          %v3352 = vmax.f32 %v3351, %v3116
          %v3353 = vmax.f32 %v3352, %v3122
          %v3354 = vmax.f32 %v3353, %v3128
          %v3355 = vmax.f32 %v3354, %v3134
          %v3356 = vrot.slane %v3355, 4
          %v3357 = vmax.f32 %v3355, %v3356
          %v3358 = vrot.slane %v3357, 2
          %v3359 = vmax.f32 %v3357, %v3358
          %v3360 = vrot.slane %v3359, 1
          %v3361 = vmax.f32 %v3359, %v3360
          %v3362 = vmax.f32 %v3105, %v3111
          %v3363 = vmax.f32 %v3362, %v3117
          %v3364 = vmax.f32 %v3363, %v3123
          %v3365 = vmax.f32 %v3364, %v3129
          %v3366 = vmax.f32 %v3365, %v3135
          %v3367 = vrot.slane %v3366, 4
          %v3368 = vmax.f32 %v3366, %v3367
          %v3369 = vrot.slane %v3368, 2
          %v3370 = vmax.f32 %v3368, %v3369
          %v3371 = vrot.slane %v3370, 1
          %v3372 = vmax.f32 %v3370, %v3371
          %v3373 = vmax.f32 %v3136, %v3142
          %v3374 = vmax.f32 %v3373, %v3148
          %v3375 = vmax.f32 %v3374, %v3154
          %v3376 = vmax.f32 %v3375, %v3160
          %v3377 = vmax.f32 %v3376, %v3166
          %v3378 = vrot.slane %v3377, 4
          %v3379 = vmax.f32 %v3377, %v3378
          %v3380 = vrot.slane %v3379, 2
          %v3381 = vmax.f32 %v3379, %v3380
          %v3382 = vrot.slane %v3381, 1
          %v3383 = vmax.f32 %v3381, %v3382
          %v3384 = vmax.f32 %v3137, %v3143
          %v3385 = vmax.f32 %v3384, %v3149
          %v3386 = vmax.f32 %v3385, %v3155
          %v3387 = vmax.f32 %v3386, %v3161
          %v3388 = vmax.f32 %v3387, %v3167
          %v3389 = vrot.slane %v3388, 4
          %v3390 = vmax.f32 %v3388, %v3389
          %v3391 = vrot.slane %v3390, 2
          %v3392 = vmax.f32 %v3390, %v3391
          %v3393 = vrot.slane %v3392, 1
          %v3394 = vmax.f32 %v3392, %v3393
          %v3395 = vmax.f32 %v3138, %v3144
          %v3396 = vmax.f32 %v3395, %v3150
          %v3397 = vmax.f32 %v3396, %v3156
          %v3398 = vmax.f32 %v3397, %v3162
          %v3399 = vmax.f32 %v3398, %v3168
          %v3400 = vrot.slane %v3399, 4
          %v3401 = vmax.f32 %v3399, %v3400
          %v3402 = vrot.slane %v3401, 2
          %v3403 = vmax.f32 %v3401, %v3402
          %v3404 = vrot.slane %v3403, 1
          %v3405 = vmax.f32 %v3403, %v3404
          %v3406 = vmax.f32 %v3139, %v3145
          %v3407 = vmax.f32 %v3406, %v3151
          %v3408 = vmax.f32 %v3407, %v3157
          %v3409 = vmax.f32 %v3408, %v3163
          %v3410 = vmax.f32 %v3409, %v3169
          %v3411 = vrot.slane %v3410, 4
          %v3412 = vmax.f32 %v3410, %v3411
          %v3413 = vrot.slane %v3412, 2
          %v3414 = vmax.f32 %v3412, %v3413
          %v3415 = vrot.slane %v3414, 1
          %v3416 = vmax.f32 %v3414, %v3415
          %v3417 = vmax.f32 %v3140, %v3146
          %v3418 = vmax.f32 %v3417, %v3152
          %v3419 = vmax.f32 %v3418, %v3158
          %v3420 = vmax.f32 %v3419, %v3164
          %v3421 = vmax.f32 %v3420, %v3170
          %v3422 = vrot.slane %v3421, 4
          %v3423 = vmax.f32 %v3421, %v3422
          %v3424 = vrot.slane %v3423, 2
          %v3425 = vmax.f32 %v3423, %v3424
          %v3426 = vrot.slane %v3425, 1
          %v3427 = vmax.f32 %v3425, %v3426
          %v3428 = vmax.f32 %v3141, %v3147
          %v3429 = vmax.f32 %v3428, %v3153
          %v3430 = vmax.f32 %v3429, %v3159
          %v3431 = vmax.f32 %v3430, %v3165
          %v3432 = vmax.f32 %v3431, %v3171
          %v3433 = vrot.slane %v3432, 4
          %v3434 = vmax.f32 %v3432, %v3433
          %v3435 = vrot.slane %v3434, 2
          %v3436 = vmax.f32 %v3434, %v3435
          %v3437 = vrot.slane %v3436, 1
          %v3438 = vmax.f32 %v3436, %v3437
          %v3463 = vcombine.low %v3185, %v3196
          %v3464 = vcombine.low %v3207, %v3218
          %v3465 = vcombine.low %v3229, %v3240
          %v3466 = vcombine.low %v3251, %v3262
          %v3467 = vcombine.low %v3273, %v3284
          %v3468 = vcombine.low %v3295, %v3306
          %v3469 = vcombine.low %v3317, %v3328
          %v3470 = vcombine.low %v3339, %v3350
          %v3471 = vcombine.low %v3361, %v3372
          %v3472 = vcombine.low %v3383, %v3394
          %v3473 = vcombine.low %v3405, %v3416
          %v3474 = vcombine.low %v3427, %v3438
          %v3475 = vrot.slane %v3466, 7
          %vm3476 = vcmask 1041409
          %v3477 = vsel %vm3476, %v3475, %v3463
          %vm3478 = vcmask 1045509
          %v3479 = vsel %vm3478, %v3475, %v3477
          %v3480 = vrot.slane %v3469, 6
          %vm3481 = vcmask 1042434
          %v3482 = vsel %vm3481, %v3480, %v3479
          %vm3483 = vcmask 1046534
          %v3484 = vsel %vm3483, %v3480, %v3482
          %v3485 = vrot.slane %v3472, 5
          %vm3486 = vcmask 1043459
          %v3487 = vsel %vm3486, %v3485, %v3484
          %vm3488 = vcmask 1047559
          %v3489 = vsel %vm3488, %v3485, %v3487
          %v3490 = vrot.slane %v3467, 7
          %v3491 = vsel %vm3476, %v3490, %v3464
          %v3492 = vsel %vm3478, %v3490, %v3491
          %v3493 = vrot.slane %v3470, 6
          %v3494 = vsel %vm3481, %v3493, %v3492
          %v3495 = vsel %vm3483, %v3493, %v3494
          %v3496 = vrot.slane %v3473, 5
          %v3497 = vsel %vm3486, %v3496, %v3495
          %v3498 = vsel %vm3488, %v3496, %v3497
          %v3499 = vrot.slane %v3468, 7
          %v3500 = vsel %vm3476, %v3499, %v3465
          %v3501 = vsel %vm3478, %v3499, %v3500
          %v3502 = vrot.slane %v3471, 6
          %v3503 = vsel %vm3481, %v3502, %v3501
          %v3504 = vsel %vm3483, %v3502, %v3503
          %v3505 = vrot.slane %v3474, 5
          %v3506 = vsel %vm3486, %v3505, %v3504
          %v3507 = vsel %vm3488, %v3505, %v3506
          %v3511 = vmax.f32 %v3172, %v3489
          %v3512 = vmax.f32 %v3173, %v3498
          %v3513 = vmax.f32 %v3174, %v3507
          %3514 = vst [vmem:[%s388] sm:$0xff] %v3511
          %3515 = vst [vmem:[%s388 + $0x8] sm:$0xff] %v3512
          %3516 = vst [vmem:[%s388 + $0x10] sm:$0xff] %v3513
        $region66: #{tweet_extractor_forward.1} parent=49 // pred_fallthru
          _
        %p3517 = scmp.lt.s32.totalorder %s17, 1
        %s3518 = scalar_select %p3517, %s17, 1
        %p3519 = scmp.lt.s32.totalorder %s18, 0
        %s3520 = scalar_select %p3519, %s18, 0
        %s3521 = smul.addr %s3520, 6
        %s3522 = smul.addr %s3518, 6
        %s3523 = sadd.s32 %s3521, %s3522
        %s3524 = smul.addr %s3523, 4
        %s3525 = scalar_lea.vmem %s1, %s3524
        // Predicated region
        $region67: #{tweet_extractor_forward.1} parent=49 // pred_check
          %p3526 = pneg %p81
        $region68: #{tweet_extractor_forward.1} parent=49 // pred_check_branch
          %3528 = sbr.rel (%p3526) target = $region70
        $region69: #{tweet_extractor_forward.1} parent=49 // pred_region
          _
        $region70: #{tweet_extractor_forward.1} parent=49 // pred_fallthru
          _
      $region50: #{tweet_extractor_forward.1} parent=5 // pred_fallthru
        _
      %p3529 = scmp.le.s32.totalorder 2, %s7
      // Predicated region
      $region71: #{tweet_extractor_forward.1} parent=5 // pred_check
        %p3530 = pneg %p3529
      $region72: #{tweet_extractor_forward.1} parent=5 // pred_check_branch
        %3532 = sbr.rel (%p3530) target = $region74
      $region73: #{tweet_extractor_forward.1} parent=5 // pred_region
        %s3533 = ssub.s32 %s7, 2
        // Predicated region
        $region75: #{tweet_extractor_forward.1} parent=73 // pred_check
          %p3534 = pneg %p87
        $region76: #{tweet_extractor_forward.1} parent=73 // pred_check_branch
          %3536 = sbr.rel (%p3534) target = $region78
        $region77: #{tweet_extractor_forward.1} parent=73 // pred_region
          %p3537 = scmp.lt.s32.totalorder %s20, 1
          %s3538 = scalar_select %p3537, %s20, 1
          %p3539 = scmp.lt.s32.totalorder %s21, 0
          %s3540 = scalar_select %p3539, %s21, 0
          %s3541 = smul.addr %s3540, 6
          %s3542 = smul.addr %s3538, 6
          %s3543 = sadd.s32 %s3541, %s3542
          %s3544 = smul.addr %s3543, 4
          %s3545 = scalar_lea.vmem %s1, %s3544
        $region78: #{tweet_extractor_forward.1} parent=73 // pred_fallthru
          _
      $region74: #{tweet_extractor_forward.1} parent=5 // pred_fallthru
        _
    $region6: #{tweet_extractor_forward.1} parent=1 // loop_footer
      %s11 = sadd.s32 1, %s7
    $region7: #{tweet_extractor_forward.1} parent=1 // loop_footer_branch
      %6 = sbr.rel target = $region3
    $region8: #{tweet_extractor_forward.1} parent=1 // loop_exit
      _

</llo_original>
